<compile_context>
chip_gen: v7x
topology: tpu7x:2x2x1
jax: 0.10.0
libtpu: 0.0.40
codegen_flags: <defaults>
</compile_context>

<pallas_src>
import functools

import jax
import jax.numpy as jnp
from jax import lax
from jax.experimental import pallas as pl
from jax.experimental.pallas import tpu as pltpu


# ----------------------------- Pallas kernel ------------------------------ #
def lstmae_kernel(x_ref,       # (T*BP, D)   time-major, batch-padded input
                  wih0_ref,    # (D, 4H)     encoder layer-0 W_ih^T
                  wih_ref,     # (2H, 4H)    [enc1 W_ih^T ; dec1 W_ih^T]
                  whh_ref,     # (4H, 4H)    [enc0 ; enc1 ; dec0 ; dec1] W_hh^T
                  b_ref,       # (4, 4H)     per-layer (b_ih + b_hh)
                  fcw_ref,     # (H, D)      final Linear W^T
                  fcb_ref,     # (1, D)      final Linear bias
                  recon_ref,   # (BP, T*D)   lane-dense reconstruction output
                  *, T, BP, D, H):
    f32 = jnp.float32
    H4 = 4 * H

    def step(gates, c_prev, first=False):
        # 2 full-vreg transcendentals per step instead of 4 sliced ones.
        sig = jax.nn.sigmoid(gates)
        tnh = jnp.tanh(gates)
        i = sig[:, 0 * H:1 * H]
        f = sig[:, 1 * H:2 * H]
        g = tnh[:, 2 * H:3 * H]
        o = sig[:, 3 * H:4 * H]
        c = i * g if first else f * c_prev + i * g   # t=0: c_prev == 0
        h = o * jnp.tanh(c)
        return h, c

    # Per-layer weight views, loaded once and reused by every unrolled step.
    whh_e0 = whh_ref[0 * H:1 * H, :]
    whh_e1 = whh_ref[1 * H:2 * H, :]
    whh_d0 = whh_ref[2 * H:3 * H, :]
    whh_d1 = whh_ref[3 * H:4 * H, :]
    wih_e1 = wih_ref[0:H, :]
    wih_d1 = wih_ref[H:2 * H, :]

    # Hoisted bias broadcasts (done once, not per unrolled iteration).
    b_e1 = jnp.broadcast_to(b_ref[1:2, :], (BP, H4))
    b_d0 = jnp.broadcast_to(b_ref[2:3, :], (BP, H4))
    b_d1 = jnp.broadcast_to(b_ref[3:4, :], (BP, H4))
    fcw = fcw_ref[...]
    fcb = jnp.broadcast_to(fcb_ref[...], (BP, D))

    # Encoder layer 0 input projection: one batched matmul for the whole
    # sequence (off the recurrent critical path).
    proj0 = (jnp.dot(x_ref[...], wih0_ref[...], preferred_element_type=f32)
             + b_ref[0:1, :])                                   # (T*BP, 4H)

    # ---------------- Encoder: layers 0 & 1 wavefront ---------------- #
    h0 = c0 = h1 = c1 = None
    for t in range(T):                      # fully unrolled (T small, static)
        # encoder layer 0, step t
        g0 = proj0[t * BP:(t + 1) * BP, :]
        if t > 0:
            g0 = g0 + jnp.dot(h0, whh_e0, preferred_element_type=f32)
        h0, c0 = step(g0, c0, first=(t == 0))

        # encoder layer 1, step t (consumes enc0 step t only)
        g1 = jnp.dot(h0, wih_e1, preferred_element_type=f32) + b_e1
        if t > 0:
            g1 = g1 + jnp.dot(h1, whh_e1, preferred_element_type=f32)
        h1, c1 = step(g1, c1, first=(t == 0))

    # ---------------- Decoder: layers 0 & 1 wavefront ---------------- #
    # Initial (h, c) per decoder layer comes from the matching encoder layer.
    hd0, cd0 = h0, c0
    hd1, cd1 = h1, c1
    for t in range(T):
        # decoder layer 0, step t: input is all zeros -> no input projection
        gd0 = b_d0 + jnp.dot(hd0, whh_d0, preferred_element_type=f32)
        hd0, cd0 = step(gd0, cd0)

        # decoder layer 1, step t (consumes dec0 step t only)
        gd1 = (jnp.dot(hd0, wih_d1, preferred_element_type=f32) + b_d1
               + jnp.dot(hd1, whh_d1, preferred_element_type=f32))
        hd1, cd1 = step(gd1, cd1)

        # Final Linear for this step, stored lane-offset into the (BP, T*D)
        # lane-dense output slab (row b, lanes [t*D:(t+1)*D]).
        recon_ref[:, t * D:(t + 1) * D] = (
            jnp.dot(hd1, fcw, preferred_element_type=f32) + fcb)


# ------------------------------ JAX wrapper ------------------------------- #
def lstmae_forward(x, enc_params, dec_params, fc_w, fc_b):
    """x: (B, T, D) float32 (PyTorch batch_first). Returns (loss, recon, (0,0))."""
    B, T, D = x.shape
    H = enc_params[0][1].shape[0]
    BP = 8                                  # pad batch to one full sublane group

    # Time-major, batch-padded, flattened to 2-D: (T*BP, D).
    x_tm = jnp.transpose(x, (1, 0, 2)).astype(jnp.float32)        # (T, B, D)
    x_pad = jnp.pad(x_tm, ((0, 0), (0, BP - B), (0, 0)))           # (T, BP, D)
    x2 = x_pad.reshape(T * BP, D)

    (e_wih0, e_whh0, e_b0), (e_wih1, e_whh1, e_b1) = enc_params
    (_d_wih0, d_whh0, d_b0), (d_wih1, d_whh1, d_b1) = dec_params
    # d_wih0 is intentionally unused: decoder layer 0's input is all zeros.

    # Concatenate the small parameters into a few 2-D slabs (fewer input DMAs).
    wih0 = e_wih0                                                  # (D, 4H)
    wih_all = jnp.concatenate([e_wih1, d_wih1], axis=0)            # (2H, 4H)
    whh_all = jnp.concatenate([e_whh0, e_whh1, d_whh0, d_whh1], 0) # (4H, 4H)
    b_all = jnp.concatenate([e_b0, e_b1, d_b0, d_b1], axis=0)      # (4, 4H)

    vmem = pl.BlockSpec(memory_space=pltpu.MemorySpace.VMEM)
    recon2 = pl.pallas_call(
        functools.partial(lstmae_kernel, T=T, BP=BP, D=D, H=H),
        out_shape=jax.ShapeDtypeStruct((BP, T * D), jnp.float32),
        in_specs=[vmem] * 7,
        out_specs=vmem,
    )(x2, wih0, wih_all, whh_all, b_all, fc_w, fc_b)

    # (BP, T*D) -> (BP, T, D) is a no-op view; slice off the padded batch rows.
    recon = recon2.reshape(BP, T, D)[:B]                           # (B, T, D)

    # MSE loss computed in the wrapper (excludes padded rows by construction).
    loss = jnp.mean((recon - x) ** 2)
    return loss, recon, (0, 0)


# --------------------------- Parameter creation ---------------------------- #
def init_lstm_params(key, in_dim, hidden, num_layers=2):
    """Returns list of (W_ih^T, W_hh^T, b_ih + b_hh) per layer."""
    k = 1.0 / float(hidden) ** 0.5
    params = []
    for layer in range(num_layers):
        d = in_dim if layer == 0 else hidden
        key, k1, k2, k3, k4 = jax.random.split(key, 5)
        w_ih = jax.random.uniform(k1, (4 * hidden, d), jnp.float32, -k, k)
        w_hh = jax.random.uniform(k2, (4 * hidden, hidden), jnp.float32, -k, k)
        b_ih = jax.random.uniform(k3, (4 * hidden,), jnp.float32, -k, k)
        b_hh = jax.random.uniform(k4, (4 * hidden,), jnp.float32, -k, k)
        params.append((w_ih.T, w_hh.T, (b_ih + b_hh)[None, :]))
    return key, params


# ---------------------------- Pure-JAX reference --------------------------- #
def _ref_lstm_layer(x, wihT, whhT, b, h0, c0):
    def step(carry, x_t):
        h, c = carry
        gates = x_t @ wihT + h @ whhT + b
        i, f, g, o = jnp.split(gates, 4, axis=-1)
        i, f, o = jax.nn.sigmoid(i), jax.nn.sigmoid(f), jax.nn.sigmoid(o)
        g = jnp.tanh(g)
        c = f * c + i * g
        h = o * jnp.tanh(c)
        return (h, c), h
    (hT, cT), ys = lax.scan(step, (h0, c0), jnp.transpose(x, (1, 0, 2)))
    return jnp.transpose(ys, (1, 0, 2)), hT, cT


def lstmae_reference(x, enc_params, dec_params, fc_w, fc_b):
    B, T, D = x.shape
    H = enc_params[0][1].shape[0]
    z = jnp.zeros((B, H), jnp.float32)
    o0, he0, ce0 = _ref_lstm_layer(x, *enc_params[0], z, z)
    _, he1, ce1 = _ref_lstm_layer(o0, *enc_params[1], z, z)
    zin = jnp.zeros((B, T, D), jnp.float32)
    d0, _, _ = _ref_lstm_layer(zin, *dec_params[0], he0, ce0)
    d1, _, _ = _ref_lstm_layer(d0, *dec_params[1], he1, ce1)
    recon = d1 @ fc_w + fc_b
    loss = jnp.mean((recon - x) ** 2)
    return loss, recon


# --------------------------------- Main ------------------------------------ #
if __name__ == "__main__":
    B, T, D, H = 2, 8, 16, 32      # batch, seq_len, input_size, hidden_size
    key = jax.random.PRNGKey(0)

    key, kx = jax.random.split(key)
    x = jax.random.normal(kx, (B, T, D), jnp.float32)

    key, enc_params = init_lstm_params(key, D, H, num_layers=2)
    key, dec_params = init_lstm_params(key, D, H, num_layers=2)
    k_fc = 1.0 / float(H) ** 0.5
    key, kw, kb = jax.random.split(key, 3)
    fc_w = jax.random.uniform(kw, (H, D), jnp.float32, -k_fc, k_fc)   # W^T
    fc_b = jax.random.uniform(kb, (1, D), jnp.float32, -k_fc, k_fc)

    loss, recon, flags = jax.jit(lstmae_forward)(x, enc_params, dec_params,
                                                 fc_w, fc_b)
    jax.block_until_ready((loss, recon))

    ref_loss, ref_recon = lstmae_reference(x, enc_params, dec_params, fc_w, fc_b)
    assert jnp.allclose(recon, ref_recon, atol=1e-3, rtol=1e-3), "recon mismatch"
    assert jnp.allclose(loss, ref_loss, atol=1e-3, rtol=1e-3), "loss mismatch"

    print("KERNEL_OK")
</pallas_src>

<mosaic_0001>
module attributes {stable_mosaic.version = 11 : i64} {
  func.func @lstmae_kernel(%arg0: memref<64x16xf32, #tpu.memory_space<vmem>>, %arg1: memref<16x128xf32, #tpu.memory_space<vmem>>, %arg2: memref<64x128xf32, #tpu.memory_space<vmem>>, %arg3: memref<128x128xf32, #tpu.memory_space<vmem>>, %arg4: memref<4x128xf32, #tpu.memory_space<vmem>>, %arg5: memref<32x16xf32, #tpu.memory_space<vmem>>, %arg6: memref<1x16xf32, #tpu.memory_space<vmem>>, %arg7: memref<8x128xf32, #tpu.memory_space<vmem>>) attributes {dimension_semantics = [], scalar_prefetch = 0 : i64, scratch_operands = 0 : i64, tpu.core_type = #tpu.core_type<tc>} {
    %c0 = arith.constant 0 : index
    %c0_0 = arith.constant 0 : index
    %0 = vector.load %arg3[%c0, %c0_0] : memref<128x128xf32, #tpu.memory_space<vmem>>, vector<32x128xf32>
    %c32 = arith.constant 32 : index
    %c0_1 = arith.constant 0 : index
    %1 = vector.load %arg3[%c32, %c0_1] : memref<128x128xf32, #tpu.memory_space<vmem>>, vector<32x128xf32>
    %c64 = arith.constant 64 : index
    %c0_2 = arith.constant 0 : index
    %2 = vector.load %arg3[%c64, %c0_2] : memref<128x128xf32, #tpu.memory_space<vmem>>, vector<32x128xf32>
    %c96 = arith.constant 96 : index
    %c0_3 = arith.constant 0 : index
    %3 = vector.load %arg3[%c96, %c0_3] : memref<128x128xf32, #tpu.memory_space<vmem>>, vector<32x128xf32>
    %c0_4 = arith.constant 0 : index
    %c0_5 = arith.constant 0 : index
    %4 = vector.load %arg2[%c0_4, %c0_5] : memref<64x128xf32, #tpu.memory_space<vmem>>, vector<32x128xf32>
    %c32_6 = arith.constant 32 : index
    %c0_7 = arith.constant 0 : index
    %5 = vector.load %arg2[%c32_6, %c0_7] : memref<64x128xf32, #tpu.memory_space<vmem>>, vector<32x128xf32>
    %c1 = arith.constant 1 : index
    %c0_8 = arith.constant 0 : index
    %6 = vector.load %arg4[%c1, %c0_8] : memref<4x128xf32, #tpu.memory_space<vmem>>, vector<1x128xf32>
    %7 = vector.shape_cast %6 : vector<1x128xf32> to vector<1x128xf32>
    %8 = vector.broadcast %7 : vector<1x128xf32> to vector<8x128xf32>
    %c2 = arith.constant 2 : index
    %c0_9 = arith.constant 0 : index
    %9 = vector.load %arg4[%c2, %c0_9] : memref<4x128xf32, #tpu.memory_space<vmem>>, vector<1x128xf32>
    %10 = vector.shape_cast %9 : vector<1x128xf32> to vector<1x128xf32>
    %11 = vector.broadcast %10 : vector<1x128xf32> to vector<8x128xf32>
    %c3 = arith.constant 3 : index
    %c0_10 = arith.constant 0 : index
    %12 = vector.load %arg4[%c3, %c0_10] : memref<4x128xf32, #tpu.memory_space<vmem>>, vector<1x128xf32>
    %13 = vector.shape_cast %12 : vector<1x128xf32> to vector<1x128xf32>
    %14 = vector.broadcast %13 : vector<1x128xf32> to vector<8x128xf32>
    %c0_11 = arith.constant 0 : index
    %c0_12 = arith.constant 0 : index
    %15 = vector.load %arg5[%c0_11, %c0_12] : memref<32x16xf32, #tpu.memory_space<vmem>>, vector<32x16xf32>
    %c0_13 = arith.constant 0 : index
    %c0_14 = arith.constant 0 : index
    %16 = vector.load %arg6[%c0_13, %c0_14] : memref<1x16xf32, #tpu.memory_space<vmem>>, vector<1x16xf32>
    %17 = vector.shape_cast %16 : vector<1x16xf32> to vector<1x16xf32>
    %18 = vector.broadcast %17 : vector<1x16xf32> to vector<8x16xf32>
    %c0_15 = arith.constant 0 : index
    %c0_16 = arith.constant 0 : index
    %19 = vector.load %arg0[%c0_15, %c0_16] : memref<64x16xf32, #tpu.memory_space<vmem>>, vector<64x16xf32>
    %c0_17 = arith.constant 0 : index
    %c0_18 = arith.constant 0 : index
    %20 = vector.load %arg1[%c0_17, %c0_18] : memref<16x128xf32, #tpu.memory_space<vmem>>, vector<16x128xf32>
    %cst = arith.constant dense<0.000000e+00> : vector<64x128xf32>
    %21 = tpu.matmul %19, %20, %cst {dimension_numbers = #tpu.dot_dimension_numbers<[1], [0], [0], [1], [0, 0, 1, 1], [], []>} : vector<64x16xf32>, vector<16x128xf32>, vector<64x128xf32> -> vector<64x128xf32>
    %c0_19 = arith.constant 0 : index
    %c0_20 = arith.constant 0 : index
    %22 = vector.load %arg4[%c0_19, %c0_20] : memref<4x128xf32, #tpu.memory_space<vmem>>, vector<1x128xf32>
    %23 = vector.broadcast %22 : vector<1x128xf32> to vector<64x128xf32>
    %24 = arith.addf %21, %23 : vector<64x128xf32>
    %25 = vector.extract_strided_slice %24 {offsets = [0, 0], sizes = [8, 128], strides = [1, 1]} : vector<64x128xf32> to vector<8x128xf32>
    %26 = arith.negf %25 : vector<8x128xf32>
    %27 = math.exp %26 : vector<8x128xf32>
    %cst_21 = arith.constant 1.000000e+00 : f32
    %28 = vector.broadcast %cst_21 : f32 to vector<8x128xf32>
    %29 = arith.addf %28, %27 : vector<8x128xf32>
    %30 = arith.divf %28, %29 : vector<8x128xf32>
    %31 = math.tanh %25 : vector<8x128xf32>
    %32 = vector.extract_strided_slice %30 {offsets = [0, 0], sizes = [8, 32], strides = [1, 1]} : vector<8x128xf32> to vector<8x32xf32>
    %33 = vector.extract_strided_slice %31 {offsets = [0, 64], sizes = [8, 32], strides = [1, 1]} : vector<8x128xf32> to vector<8x32xf32>
    %34 = vector.extract_strided_slice %30 {offsets = [0, 96], sizes = [8, 32], strides = [1, 1]} : vector<8x128xf32> to vector<8x32xf32>
    %35 = arith.mulf %32, %33 : vector<8x32xf32>
    %36 = math.tanh %35 : vector<8x32xf32>
    %37 = arith.mulf %34, %36 : vector<8x32xf32>
    %cst_22 = arith.constant dense<0.000000e+00> : vector<8x128xf32>
    %38 = tpu.matmul %37, %4, %cst_22 {dimension_numbers = #tpu.dot_dimension_numbers<[1], [0], [0], [1], [0, 0, 1, 1], [], []>} : vector<8x32xf32>, vector<32x128xf32>, vector<8x128xf32> -> vector<8x128xf32>
    %39 = arith.addf %38, %8 : vector<8x128xf32>
    %40 = arith.negf %39 : vector<8x128xf32>
    %41 = math.exp %40 : vector<8x128xf32>
    %cst_23 = arith.constant 1.000000e+00 : f32
    %42 = vector.broadcast %cst_23 : f32 to vector<8x128xf32>
    %43 = arith.addf %42, %41 : vector<8x128xf32>
    %44 = arith.divf %42, %43 : vector<8x128xf32>
    %45 = math.tanh %39 : vector<8x128xf32>
    %46 = vector.extract_strided_slice %44 {offsets = [0, 0], sizes = [8, 32], strides = [1, 1]} : vector<8x128xf32> to vector<8x32xf32>
    %47 = vector.extract_strided_slice %45 {offsets = [0, 64], sizes = [8, 32], strides = [1, 1]} : vector<8x128xf32> to vector<8x32xf32>
    %48 = vector.extract_strided_slice %44 {offsets = [0, 96], sizes = [8, 32], strides = [1, 1]} : vector<8x128xf32> to vector<8x32xf32>
    %49 = arith.mulf %46, %47 : vector<8x32xf32>
    %50 = math.tanh %49 : vector<8x32xf32>
    %51 = arith.mulf %48, %50 : vector<8x32xf32>
    %52 = vector.extract_strided_slice %24 {offsets = [8, 0], sizes = [8, 128], strides = [1, 1]} : vector<64x128xf32> to vector<8x128xf32>
    %cst_24 = arith.constant dense<0.000000e+00> : vector<8x128xf32>
    %53 = tpu.matmul %37, %0, %cst_24 {dimension_numbers = #tpu.dot_dimension_numbers<[1], [0], [0], [1], [0, 0, 1, 1], [], []>} : vector<8x32xf32>, vector<32x128xf32>, vector<8x128xf32> -> vector<8x128xf32>
    %54 = arith.addf %52, %53 : vector<8x128xf32>
    %55 = arith.negf %54 : vector<8x128xf32>
    %56 = math.exp %55 : vector<8x128xf32>
    %cst_25 = arith.constant 1.000000e+00 : f32
    %57 = vector.broadcast %cst_25 : f32 to vector<8x128xf32>
    %58 = arith.addf %57, %56 : vector<8x128xf32>
    %59 = arith.divf %57, %58 : vector<8x128xf32>
    %60 = math.tanh %54 : vector<8x128xf32>
    %61 = vector.extract_strided_slice %59 {offsets = [0, 0], sizes = [8, 32], strides = [1, 1]} : vector<8x128xf32> to vector<8x32xf32>
    %62 = vector.extract_strided_slice %59 {offsets = [0, 32], sizes = [8, 32], strides = [1, 1]} : vector<8x128xf32> to vector<8x32xf32>
    %63 = vector.extract_strided_slice %60 {offsets = [0, 64], sizes = [8, 32], strides = [1, 1]} : vector<8x128xf32> to vector<8x32xf32>
    %64 = vector.extract_strided_slice %59 {offsets = [0, 96], sizes = [8, 32], strides = [1, 1]} : vector<8x128xf32> to vector<8x32xf32>
    %65 = arith.mulf %62, %35 : vector<8x32xf32>
    %66 = arith.mulf %61, %63 : vector<8x32xf32>
    %67 = arith.addf %65, %66 : vector<8x32xf32>
    %68 = math.tanh %67 : vector<8x32xf32>
    %69 = arith.mulf %64, %68 : vector<8x32xf32>
    %cst_26 = arith.constant dense<0.000000e+00> : vector<8x128xf32>
    %70 = tpu.matmul %69, %4, %cst_26 {dimension_numbers = #tpu.dot_dimension_numbers<[1], [0], [0], [1], [0, 0, 1, 1], [], []>} : vector<8x32xf32>, vector<32x128xf32>, vector<8x128xf32> -> vector<8x128xf32>
    %71 = arith.addf %70, %8 : vector<8x128xf32>
    %cst_27 = arith.constant dense<0.000000e+00> : vector<8x128xf32>
    %72 = tpu.matmul %51, %1, %cst_27 {dimension_numbers = #tpu.dot_dimension_numbers<[1], [0], [0], [1], [0, 0, 1, 1], [], []>} : vector<8x32xf32>, vector<32x128xf32>, vector<8x128xf32> -> vector<8x128xf32>
    %73 = arith.addf %71, %72 : vector<8x128xf32>
    %74 = arith.negf %73 : vector<8x128xf32>
    %75 = math.exp %74 : vector<8x128xf32>
    %cst_28 = arith.constant 1.000000e+00 : f32
    %76 = vector.broadcast %cst_28 : f32 to vector<8x128xf32>
    %77 = arith.addf %76, %75 : vector<8x128xf32>
    %78 = arith.divf %76, %77 : vector<8x128xf32>
    %79 = math.tanh %73 : vector<8x128xf32>
    %80 = vector.extract_strided_slice %78 {offsets = [0, 0], sizes = [8, 32], strides = [1, 1]} : vector<8x128xf32> to vector<8x32xf32>
    %81 = vector.extract_strided_slice %78 {offsets = [0, 32], sizes = [8, 32], strides = [1, 1]} : vector<8x128xf32> to vector<8x32xf32>
    %82 = vector.extract_strided_slice %79 {offsets = [0, 64], sizes = [8, 32], strides = [1, 1]} : vector<8x128xf32> to vector<8x32xf32>
    %83 = vector.extract_strided_slice %78 {offsets = [0, 96], sizes = [8, 32], strides = [1, 1]} : vector<8x128xf32> to vector<8x32xf32>
    %84 = arith.mulf %81, %49 : vector<8x32xf32>
    %85 = arith.mulf %80, %82 : vector<8x32xf32>
    %86 = arith.addf %84, %85 : vector<8x32xf32>
    %87 = math.tanh %86 : vector<8x32xf32>
    %88 = arith.mulf %83, %87 : vector<8x32xf32>
    %89 = vector.extract_strided_slice %24 {offsets = [16, 0], sizes = [8, 128], strides = [1, 1]} : vector<64x128xf32> to vector<8x128xf32>
    %cst_29 = arith.constant dense<0.000000e+00> : vector<8x128xf32>
    %90 = tpu.matmul %69, %0, %cst_29 {dimension_numbers = #tpu.dot_dimension_numbers<[1], [0], [0], [1], [0, 0, 1, 1], [], []>} : vector<8x32xf32>, vector<32x128xf32>, vector<8x128xf32> -> vector<8x128xf32>
    %91 = arith.addf %89, %90 : vector<8x128xf32>
    %92 = arith.negf %91 : vector<8x128xf32>
    %93 = math.exp %92 : vector<8x128xf32>
    %cst_30 = arith.constant 1.000000e+00 : f32
    %94 = vector.broadcast %cst_30 : f32 to vector<8x128xf32>
    %95 = arith.addf %94, %93 : vector<8x128xf32>
    %96 = arith.divf %94, %95 : vector<8x128xf32>
    %97 = math.tanh %91 : vector<8x128xf32>
    %98 = vector.extract_strided_slice %96 {offsets = [0, 0], sizes = [8, 32], strides = [1, 1]} : vector<8x128xf32> to vector<8x32xf32>
    %99 = vector.extract_strided_slice %96 {offsets = [0, 32], sizes = [8, 32], strides = [1, 1]} : vector<8x128xf32> to vector<8x32xf32>
    %100 = vector.extract_strided_slice %97 {offsets = [0, 64], sizes = [8, 32], strides = [1, 1]} : vector<8x128xf32> to vector<8x32xf32>
    %101 = vector.extract_strided_slice %96 {offsets = [0, 96], sizes = [8, 32], strides = [1, 1]} : vector<8x128xf32> to vector<8x32xf32>
    %102 = arith.mulf %99, %67 : vector<8x32xf32>
    %103 = arith.mulf %98, %100 : vector<8x32xf32>
    %104 = arith.addf %102, %103 : vector<8x32xf32>
    %105 = math.tanh %104 : vector<8x32xf32>
    %106 = arith.mulf %101, %105 : vector<8x32xf32>
    %cst_31 = arith.constant dense<0.000000e+00> : vector<8x128xf32>
    %107 = tpu.matmul %106, %4, %cst_31 {dimension_numbers = #tpu.dot_dimension_numbers<[1], [0], [0], [1], [0, 0, 1, 1], [], []>} : vector<8x32xf32>, vector<32x128xf32>, vector<8x128xf32> -> vector<8x128xf32>
    %108 = arith.addf %107, %8 : vector<8x128xf32>
    %cst_32 = arith.constant dense<0.000000e+00> : vector<8x128xf32>
    %109 = tpu.matmul %88, %1, %cst_32 {dimension_numbers = #tpu.dot_dimension_numbers<[1], [0], [0], [1], [0, 0, 1, 1], [], []>} : vector<8x32xf32>, vector<32x128xf32>, vector<8x128xf32> -> vector<8x128xf32>
    %110 = arith.addf %108, %109 : vector<8x128xf32>
    %111 = arith.negf %110 : vector<8x128xf32>
    %112 = math.exp %111 : vector<8x128xf32>
    %cst_33 = arith.constant 1.000000e+00 : f32
    %113 = vector.broadcast %cst_33 : f32 to vector<8x128xf32>
    %114 = arith.addf %113, %112 : vector<8x128xf32>
    %115 = arith.divf %113, %114 : vector<8x128xf32>
    %116 = math.tanh %110 : vector<8x128xf32>
    %117 = vector.extract_strided_slice %115 {offsets = [0, 0], sizes = [8, 32], strides = [1, 1]} : vector<8x128xf32> to vector<8x32xf32>
    %118 = vector.extract_strided_slice %115 {offsets = [0, 32], sizes = [8, 32], strides = [1, 1]} : vector<8x128xf32> to vector<8x32xf32>
    %119 = vector.extract_strided_slice %116 {offsets = [0, 64], sizes = [8, 32], strides = [1, 1]} : vector<8x128xf32> to vector<8x32xf32>
    %120 = vector.extract_strided_slice %115 {offsets = [0, 96], sizes = [8, 32], strides = [1, 1]} : vector<8x128xf32> to vector<8x32xf32>
    %121 = arith.mulf %118, %86 : vector<8x32xf32>
    %122 = arith.mulf %117, %119 : vector<8x32xf32>
    %123 = arith.addf %121, %122 : vector<8x32xf32>
    %124 = math.tanh %123 : vector<8x32xf32>
    %125 = arith.mulf %120, %124 : vector<8x32xf32>
    %126 = vector.extract_strided_slice %24 {offsets = [24, 0], sizes = [8, 128], strides = [1, 1]} : vector<64x128xf32> to vector<8x128xf32>
    %cst_34 = arith.constant dense<0.000000e+00> : vector<8x128xf32>
    %127 = tpu.matmul %106, %0, %cst_34 {dimension_numbers = #tpu.dot_dimension_numbers<[1], [0], [0], [1], [0, 0, 1, 1], [], []>} : vector<8x32xf32>, vector<32x128xf32>, vector<8x128xf32> -> vector<8x128xf32>
    %128 = arith.addf %126, %127 : vector<8x128xf32>
    %129 = arith.negf %128 : vector<8x128xf32>
    %130 = math.exp %129 : vector<8x128xf32>
    %cst_35 = arith.constant 1.000000e+00 : f32
    %131 = vector.broadcast %cst_35 : f32 to vector<8x128xf32>
    %132 = arith.addf %131, %130 : vector<8x128xf32>
    %133 = arith.divf %131, %132 : vector<8x128xf32>
    %134 = math.tanh %128 : vector<8x128xf32>
    %135 = vector.extract_strided_slice %133 {offsets = [0, 0], sizes = [8, 32], strides = [1, 1]} : vector<8x128xf32> to vector<8x32xf32>
    %136 = vector.extract_strided_slice %133 {offsets = [0, 32], sizes = [8, 32], strides = [1, 1]} : vector<8x128xf32> to vector<8x32xf32>
    %137 = vector.extract_strided_slice %134 {offsets = [0, 64], sizes = [8, 32], strides = [1, 1]} : vector<8x128xf32> to vector<8x32xf32>
    %138 = vector.extract_strided_slice %133 {offsets = [0, 96], sizes = [8, 32], strides = [1, 1]} : vector<8x128xf32> to vector<8x32xf32>
    %139 = arith.mulf %136, %104 : vector<8x32xf32>
    %140 = arith.mulf %135, %137 : vector<8x32xf32>
    %141 = arith.addf %139, %140 : vector<8x32xf32>
    %142 = math.tanh %141 : vector<8x32xf32>
    %143 = arith.mulf %138, %142 : vector<8x32xf32>
    %cst_36 = arith.constant dense<0.000000e+00> : vector<8x128xf32>
    %144 = tpu.matmul %143, %4, %cst_36 {dimension_numbers = #tpu.dot_dimension_numbers<[1], [0], [0], [1], [0, 0, 1, 1], [], []>} : vector<8x32xf32>, vector<32x128xf32>, vector<8x128xf32> -> vector<8x128xf32>
    %145 = arith.addf %144, %8 : vector<8x128xf32>
    %cst_37 = arith.constant dense<0.000000e+00> : vector<8x128xf32>
    %146 = tpu.matmul %125, %1, %cst_37 {dimension_numbers = #tpu.dot_dimension_numbers<[1], [0], [0], [1], [0, 0, 1, 1], [], []>} : vector<8x32xf32>, vector<32x128xf32>, vector<8x128xf32> -> vector<8x128xf32>
    %147 = arith.addf %145, %146 : vector<8x128xf32>
    %148 = arith.negf %147 : vector<8x128xf32>
    %149 = math.exp %148 : vector<8x128xf32>
    %cst_38 = arith.constant 1.000000e+00 : f32
    %150 = vector.broadcast %cst_38 : f32 to vector<8x128xf32>
    %151 = arith.addf %150, %149 : vector<8x128xf32>
    %152 = arith.divf %150, %151 : vector<8x128xf32>
    %153 = math.tanh %147 : vector<8x128xf32>
    %154 = vector.extract_strided_slice %152 {offsets = [0, 0], sizes = [8, 32], strides = [1, 1]} : vector<8x128xf32> to vector<8x32xf32>
    %155 = vector.extract_strided_slice %152 {offsets = [0, 32], sizes = [8, 32], strides = [1, 1]} : vector<8x128xf32> to vector<8x32xf32>
    %156 = vector.extract_strided_slice %153 {offsets = [0, 64], sizes = [8, 32], strides = [1, 1]} : vector<8x128xf32> to vector<8x32xf32>
    %157 = vector.extract_strided_slice %152 {offsets = [0, 96], sizes = [8, 32], strides = [1, 1]} : vector<8x128xf32> to vector<8x32xf32>
    %158 = arith.mulf %155, %123 : vector<8x32xf32>
    %159 = arith.mulf %154, %156 : vector<8x32xf32>
    %160 = arith.addf %158, %159 : vector<8x32xf32>
    %161 = math.tanh %160 : vector<8x32xf32>
    %162 = arith.mulf %157, %161 : vector<8x32xf32>
    %163 = vector.extract_strided_slice %24 {offsets = [32, 0], sizes = [8, 128], strides = [1, 1]} : vector<64x128xf32> to vector<8x128xf32>
    %cst_39 = arith.constant dense<0.000000e+00> : vector<8x128xf32>
    %164 = tpu.matmul %143, %0, %cst_39 {dimension_numbers = #tpu.dot_dimension_numbers<[1], [0], [0], [1], [0, 0, 1, 1], [], []>} : vector<8x32xf32>, vector<32x128xf32>, vector<8x128xf32> -> vector<8x128xf32>
    %165 = arith.addf %163, %164 : vector<8x128xf32>
    %166 = arith.negf %165 : vector<8x128xf32>
    %167 = math.exp %166 : vector<8x128xf32>
    %cst_40 = arith.constant 1.000000e+00 : f32
    %168 = vector.broadcast %cst_40 : f32 to vector<8x128xf32>
    %169 = arith.addf %168, %167 : vector<8x128xf32>
    %170 = arith.divf %168, %169 : vector<8x128xf32>
    %171 = math.tanh %165 : vector<8x128xf32>
    %172 = vector.extract_strided_slice %170 {offsets = [0, 0], sizes = [8, 32], strides = [1, 1]} : vector<8x128xf32> to vector<8x32xf32>
    %173 = vector.extract_strided_slice %170 {offsets = [0, 32], sizes = [8, 32], strides = [1, 1]} : vector<8x128xf32> to vector<8x32xf32>
    %174 = vector.extract_strided_slice %171 {offsets = [0, 64], sizes = [8, 32], strides = [1, 1]} : vector<8x128xf32> to vector<8x32xf32>
    %175 = vector.extract_strided_slice %170 {offsets = [0, 96], sizes = [8, 32], strides = [1, 1]} : vector<8x128xf32> to vector<8x32xf32>
    %176 = arith.mulf %173, %141 : vector<8x32xf32>
    %177 = arith.mulf %172, %174 : vector<8x32xf32>
    %178 = arith.addf %176, %177 : vector<8x32xf32>
    %179 = math.tanh %178 : vector<8x32xf32>
    %180 = arith.mulf %175, %179 : vector<8x32xf32>
    %cst_41 = arith.constant dense<0.000000e+00> : vector<8x128xf32>
    %181 = tpu.matmul %180, %4, %cst_41 {dimension_numbers = #tpu.dot_dimension_numbers<[1], [0], [0], [1], [0, 0, 1, 1], [], []>} : vector<8x32xf32>, vector<32x128xf32>, vector<8x128xf32> -> vector<8x128xf32>
    %182 = arith.addf %181, %8 : vector<8x128xf32>
    %cst_42 = arith.constant dense<0.000000e+00> : vector<8x128xf32>
    %183 = tpu.matmul %162, %1, %cst_42 {dimension_numbers = #tpu.dot_dimension_numbers<[1], [0], [0], [1], [0, 0, 1, 1], [], []>} : vector<8x32xf32>, vector<32x128xf32>, vector<8x128xf32> -> vector<8x128xf32>
    %184 = arith.addf %182, %183 : vector<8x128xf32>
    %185 = arith.negf %184 : vector<8x128xf32>
    %186 = math.exp %185 : vector<8x128xf32>
    %cst_43 = arith.constant 1.000000e+00 : f32
    %187 = vector.broadcast %cst_43 : f32 to vector<8x128xf32>
    %188 = arith.addf %187, %186 : vector<8x128xf32>
    %189 = arith.divf %187, %188 : vector<8x128xf32>
    %190 = math.tanh %184 : vector<8x128xf32>
    %191 = vector.extract_strided_slice %189 {offsets = [0, 0], sizes = [8, 32], strides = [1, 1]} : vector<8x128xf32> to vector<8x32xf32>
    %192 = vector.extract_strided_slice %189 {offsets = [0, 32], sizes = [8, 32], strides = [1, 1]} : vector<8x128xf32> to vector<8x32xf32>
    %193 = vector.extract_strided_slice %190 {offsets = [0, 64], sizes = [8, 32], strides = [1, 1]} : vector<8x128xf32> to vector<8x32xf32>
    %194 = vector.extract_strided_slice %189 {offsets = [0, 96], sizes = [8, 32], strides = [1, 1]} : vector<8x128xf32> to vector<8x32xf32>
    %195 = arith.mulf %192, %160 : vector<8x32xf32>
    %196 = arith.mulf %191, %193 : vector<8x32xf32>
    %197 = arith.addf %195, %196 : vector<8x32xf32>
    %198 = math.tanh %197 : vector<8x32xf32>
    %199 = arith.mulf %194, %198 : vector<8x32xf32>
    %200 = vector.extract_strided_slice %24 {offsets = [40, 0], sizes = [8, 128], strides = [1, 1]} : vector<64x128xf32> to vector<8x128xf32>
    %cst_44 = arith.constant dense<0.000000e+00> : vector<8x128xf32>
    %201 = tpu.matmul %180, %0, %cst_44 {dimension_numbers = #tpu.dot_dimension_numbers<[1], [0], [0], [1], [0, 0, 1, 1], [], []>} : vector<8x32xf32>, vector<32x128xf32>, vector<8x128xf32> -> vector<8x128xf32>
    %202 = arith.addf %200, %201 : vector<8x128xf32>
    %203 = arith.negf %202 : vector<8x128xf32>
    %204 = math.exp %203 : vector<8x128xf32>
    %cst_45 = arith.constant 1.000000e+00 : f32
    %205 = vector.broadcast %cst_45 : f32 to vector<8x128xf32>
    %206 = arith.addf %205, %204 : vector<8x128xf32>
    %207 = arith.divf %205, %206 : vector<8x128xf32>
    %208 = math.tanh %202 : vector<8x128xf32>
    %209 = vector.extract_strided_slice %207 {offsets = [0, 0], sizes = [8, 32], strides = [1, 1]} : vector<8x128xf32> to vector<8x32xf32>
    %210 = vector.extract_strided_slice %207 {offsets = [0, 32], sizes = [8, 32], strides = [1, 1]} : vector<8x128xf32> to vector<8x32xf32>
    %211 = vector.extract_strided_slice %208 {offsets = [0, 64], sizes = [8, 32], strides = [1, 1]} : vector<8x128xf32> to vector<8x32xf32>
    %212 = vector.extract_strided_slice %207 {offsets = [0, 96], sizes = [8, 32], strides = [1, 1]} : vector<8x128xf32> to vector<8x32xf32>
    %213 = arith.mulf %210, %178 : vector<8x32xf32>
    %214 = arith.mulf %209, %211 : vector<8x32xf32>
    %215 = arith.addf %213, %214 : vector<8x32xf32>
    %216 = math.tanh %215 : vector<8x32xf32>
    %217 = arith.mulf %212, %216 : vector<8x32xf32>
    %cst_46 = arith.constant dense<0.000000e+00> : vector<8x128xf32>
    %218 = tpu.matmul %217, %4, %cst_46 {dimension_numbers = #tpu.dot_dimension_numbers<[1], [0], [0], [1], [0, 0, 1, 1], [], []>} : vector<8x32xf32>, vector<32x128xf32>, vector<8x128xf32> -> vector<8x128xf32>
    %219 = arith.addf %218, %8 : vector<8x128xf32>
    %cst_47 = arith.constant dense<0.000000e+00> : vector<8x128xf32>
    %220 = tpu.matmul %199, %1, %cst_47 {dimension_numbers = #tpu.dot_dimension_numbers<[1], [0], [0], [1], [0, 0, 1, 1], [], []>} : vector<8x32xf32>, vector<32x128xf32>, vector<8x128xf32> -> vector<8x128xf32>
    %221 = arith.addf %219, %220 : vector<8x128xf32>
    %222 = arith.negf %221 : vector<8x128xf32>
    %223 = math.exp %222 : vector<8x128xf32>
    %cst_48 = arith.constant 1.000000e+00 : f32
    %224 = vector.broadcast %cst_48 : f32 to vector<8x128xf32>
    %225 = arith.addf %224, %223 : vector<8x128xf32>
    %226 = arith.divf %224, %225 : vector<8x128xf32>
    %227 = math.tanh %221 : vector<8x128xf32>
    %228 = vector.extract_strided_slice %226 {offsets = [0, 0], sizes = [8, 32], strides = [1, 1]} : vector<8x128xf32> to vector<8x32xf32>
    %229 = vector.extract_strided_slice %226 {offsets = [0, 32], sizes = [8, 32], strides = [1, 1]} : vector<8x128xf32> to vector<8x32xf32>
    %230 = vector.extract_strided_slice %227 {offsets = [0, 64], sizes = [8, 32], strides = [1, 1]} : vector<8x128xf32> to vector<8x32xf32>
    %231 = vector.extract_strided_slice %226 {offsets = [0, 96], sizes = [8, 32], strides = [1, 1]} : vector<8x128xf32> to vector<8x32xf32>
    %232 = arith.mulf %229, %197 : vector<8x32xf32>
    %233 = arith.mulf %228, %230 : vector<8x32xf32>
    %234 = arith.addf %232, %233 : vector<8x32xf32>
    %235 = math.tanh %234 : vector<8x32xf32>
    %236 = arith.mulf %231, %235 : vector<8x32xf32>
    %237 = vector.extract_strided_slice %24 {offsets = [48, 0], sizes = [8, 128], strides = [1, 1]} : vector<64x128xf32> to vector<8x128xf32>
    %cst_49 = arith.constant dense<0.000000e+00> : vector<8x128xf32>
    %238 = tpu.matmul %217, %0, %cst_49 {dimension_numbers = #tpu.dot_dimension_numbers<[1], [0], [0], [1], [0, 0, 1, 1], [], []>} : vector<8x32xf32>, vector<32x128xf32>, vector<8x128xf32> -> vector<8x128xf32>
    %239 = arith.addf %237, %238 : vector<8x128xf32>
    %240 = arith.negf %239 : vector<8x128xf32>
    %241 = math.exp %240 : vector<8x128xf32>
    %cst_50 = arith.constant 1.000000e+00 : f32
    %242 = vector.broadcast %cst_50 : f32 to vector<8x128xf32>
    %243 = arith.addf %242, %241 : vector<8x128xf32>
    %244 = arith.divf %242, %243 : vector<8x128xf32>
    %245 = math.tanh %239 : vector<8x128xf32>
    %246 = vector.extract_strided_slice %244 {offsets = [0, 0], sizes = [8, 32], strides = [1, 1]} : vector<8x128xf32> to vector<8x32xf32>
    %247 = vector.extract_strided_slice %244 {offsets = [0, 32], sizes = [8, 32], strides = [1, 1]} : vector<8x128xf32> to vector<8x32xf32>
    %248 = vector.extract_strided_slice %245 {offsets = [0, 64], sizes = [8, 32], strides = [1, 1]} : vector<8x128xf32> to vector<8x32xf32>
    %249 = vector.extract_strided_slice %244 {offsets = [0, 96], sizes = [8, 32], strides = [1, 1]} : vector<8x128xf32> to vector<8x32xf32>
    %250 = arith.mulf %247, %215 : vector<8x32xf32>
    %251 = arith.mulf %246, %248 : vector<8x32xf32>
    %252 = arith.addf %250, %251 : vector<8x32xf32>
    %253 = math.tanh %252 : vector<8x32xf32>
    %254 = arith.mulf %249, %253 : vector<8x32xf32>
    %cst_51 = arith.constant dense<0.000000e+00> : vector<8x128xf32>
    %255 = tpu.matmul %254, %4, %cst_51 {dimension_numbers = #tpu.dot_dimension_numbers<[1], [0], [0], [1], [0, 0, 1, 1], [], []>} : vector<8x32xf32>, vector<32x128xf32>, vector<8x128xf32> -> vector<8x128xf32>
    %256 = arith.addf %255, %8 : vector<8x128xf32>
    %cst_52 = arith.constant dense<0.000000e+00> : vector<8x128xf32>
    %257 = tpu.matmul %236, %1, %cst_52 {dimension_numbers = #tpu.dot_dimension_numbers<[1], [0], [0], [1], [0, 0, 1, 1], [], []>} : vector<8x32xf32>, vector<32x128xf32>, vector<8x128xf32> -> vector<8x128xf32>
    %258 = arith.addf %256, %257 : vector<8x128xf32>
    %259 = arith.negf %258 : vector<8x128xf32>
    %260 = math.exp %259 : vector<8x128xf32>
    %cst_53 = arith.constant 1.000000e+00 : f32
    %261 = vector.broadcast %cst_53 : f32 to vector<8x128xf32>
    %262 = arith.addf %261, %260 : vector<8x128xf32>
    %263 = arith.divf %261, %262 : vector<8x128xf32>
    %264 = math.tanh %258 : vector<8x128xf32>
    %265 = vector.extract_strided_slice %263 {offsets = [0, 0], sizes = [8, 32], strides = [1, 1]} : vector<8x128xf32> to vector<8x32xf32>
    %266 = vector.extract_strided_slice %263 {offsets = [0, 32], sizes = [8, 32], strides = [1, 1]} : vector<8x128xf32> to vector<8x32xf32>
    %267 = vector.extract_strided_slice %264 {offsets = [0, 64], sizes = [8, 32], strides = [1, 1]} : vector<8x128xf32> to vector<8x32xf32>
    %268 = vector.extract_strided_slice %263 {offsets = [0, 96], sizes = [8, 32], strides = [1, 1]} : vector<8x128xf32> to vector<8x32xf32>
    %269 = arith.mulf %266, %234 : vector<8x32xf32>
    %270 = arith.mulf %265, %267 : vector<8x32xf32>
    %271 = arith.addf %269, %270 : vector<8x32xf32>
    %272 = math.tanh %271 : vector<8x32xf32>
    %273 = arith.mulf %268, %272 : vector<8x32xf32>
    %274 = vector.extract_strided_slice %24 {offsets = [56, 0], sizes = [8, 128], strides = [1, 1]} : vector<64x128xf32> to vector<8x128xf32>
    %cst_54 = arith.constant dense<0.000000e+00> : vector<8x128xf32>
    %275 = tpu.matmul %254, %0, %cst_54 {dimension_numbers = #tpu.dot_dimension_numbers<[1], [0], [0], [1], [0, 0, 1, 1], [], []>} : vector<8x32xf32>, vector<32x128xf32>, vector<8x128xf32> -> vector<8x128xf32>
    %276 = arith.addf %274, %275 : vector<8x128xf32>
    %277 = arith.negf %276 : vector<8x128xf32>
    %278 = math.exp %277 : vector<8x128xf32>
    %cst_55 = arith.constant 1.000000e+00 : f32
    %279 = vector.broadcast %cst_55 : f32 to vector<8x128xf32>
    %280 = arith.addf %279, %278 : vector<8x128xf32>
    %281 = arith.divf %279, %280 : vector<8x128xf32>
    %282 = math.tanh %276 : vector<8x128xf32>
    %283 = vector.extract_strided_slice %281 {offsets = [0, 0], sizes = [8, 32], strides = [1, 1]} : vector<8x128xf32> to vector<8x32xf32>
    %284 = vector.extract_strided_slice %281 {offsets = [0, 32], sizes = [8, 32], strides = [1, 1]} : vector<8x128xf32> to vector<8x32xf32>
    %285 = vector.extract_strided_slice %282 {offsets = [0, 64], sizes = [8, 32], strides = [1, 1]} : vector<8x128xf32> to vector<8x32xf32>
    %286 = vector.extract_strided_slice %281 {offsets = [0, 96], sizes = [8, 32], strides = [1, 1]} : vector<8x128xf32> to vector<8x32xf32>
    %287 = arith.mulf %284, %252 : vector<8x32xf32>
    %288 = arith.mulf %283, %285 : vector<8x32xf32>
    %289 = arith.addf %287, %288 : vector<8x32xf32>
    %290 = math.tanh %289 : vector<8x32xf32>
    %291 = arith.mulf %286, %290 : vector<8x32xf32>
    %cst_56 = arith.constant dense<0.000000e+00> : vector<8x128xf32>
    %292 = tpu.matmul %291, %4, %cst_56 {dimension_numbers = #tpu.dot_dimension_numbers<[1], [0], [0], [1], [0, 0, 1, 1], [], []>} : vector<8x32xf32>, vector<32x128xf32>, vector<8x128xf32> -> vector<8x128xf32>
    %293 = arith.addf %292, %8 : vector<8x128xf32>
    %cst_57 = arith.constant dense<0.000000e+00> : vector<8x128xf32>
    %294 = tpu.matmul %273, %1, %cst_57 {dimension_numbers = #tpu.dot_dimension_numbers<[1], [0], [0], [1], [0, 0, 1, 1], [], []>} : vector<8x32xf32>, vector<32x128xf32>, vector<8x128xf32> -> vector<8x128xf32>
    %295 = arith.addf %293, %294 : vector<8x128xf32>
    %296 = arith.negf %295 : vector<8x128xf32>
    %297 = math.exp %296 : vector<8x128xf32>
    %cst_58 = arith.constant 1.000000e+00 : f32
    %298 = vector.broadcast %cst_58 : f32 to vector<8x128xf32>
    %299 = arith.addf %298, %297 : vector<8x128xf32>
    %300 = arith.divf %298, %299 : vector<8x128xf32>
    %301 = math.tanh %295 : vector<8x128xf32>
    %302 = vector.extract_strided_slice %300 {offsets = [0, 0], sizes = [8, 32], strides = [1, 1]} : vector<8x128xf32> to vector<8x32xf32>
    %303 = vector.extract_strided_slice %300 {offsets = [0, 32], sizes = [8, 32], strides = [1, 1]} : vector<8x128xf32> to vector<8x32xf32>
    %304 = vector.extract_strided_slice %301 {offsets = [0, 64], sizes = [8, 32], strides = [1, 1]} : vector<8x128xf32> to vector<8x32xf32>
    %305 = vector.extract_strided_slice %300 {offsets = [0, 96], sizes = [8, 32], strides = [1, 1]} : vector<8x128xf32> to vector<8x32xf32>
    %306 = arith.mulf %303, %271 : vector<8x32xf32>
    %307 = arith.mulf %302, %304 : vector<8x32xf32>
    %308 = arith.addf %306, %307 : vector<8x32xf32>
    %309 = math.tanh %308 : vector<8x32xf32>
    %310 = arith.mulf %305, %309 : vector<8x32xf32>
    %cst_59 = arith.constant dense<0.000000e+00> : vector<8x128xf32>
    %311 = tpu.matmul %291, %2, %cst_59 {dimension_numbers = #tpu.dot_dimension_numbers<[1], [0], [0], [1], [0, 0, 1, 1], [], []>} : vector<8x32xf32>, vector<32x128xf32>, vector<8x128xf32> -> vector<8x128xf32>
    %312 = arith.addf %11, %311 : vector<8x128xf32>
    %313 = arith.negf %312 : vector<8x128xf32>
    %314 = math.exp %313 : vector<8x128xf32>
    %cst_60 = arith.constant 1.000000e+00 : f32
    %315 = vector.broadcast %cst_60 : f32 to vector<8x128xf32>
    %316 = arith.addf %315, %314 : vector<8x128xf32>
    %317 = arith.divf %315, %316 : vector<8x128xf32>
    %318 = math.tanh %312 : vector<8x128xf32>
    %319 = vector.extract_strided_slice %317 {offsets = [0, 0], sizes = [8, 32], strides = [1, 1]} : vector<8x128xf32> to vector<8x32xf32>
    %320 = vector.extract_strided_slice %317 {offsets = [0, 32], sizes = [8, 32], strides = [1, 1]} : vector<8x128xf32> to vector<8x32xf32>
    %321 = vector.extract_strided_slice %318 {offsets = [0, 64], sizes = [8, 32], strides = [1, 1]} : vector<8x128xf32> to vector<8x32xf32>
    %322 = vector.extract_strided_slice %317 {offsets = [0, 96], sizes = [8, 32], strides = [1, 1]} : vector<8x128xf32> to vector<8x32xf32>
    %323 = arith.mulf %320, %289 : vector<8x32xf32>
    %324 = arith.mulf %319, %321 : vector<8x32xf32>
    %325 = arith.addf %323, %324 : vector<8x32xf32>
    %326 = math.tanh %325 : vector<8x32xf32>
    %327 = arith.mulf %322, %326 : vector<8x32xf32>
    %cst_61 = arith.constant dense<0.000000e+00> : vector<8x128xf32>
    %328 = tpu.matmul %327, %5, %cst_61 {dimension_numbers = #tpu.dot_dimension_numbers<[1], [0], [0], [1], [0, 0, 1, 1], [], []>} : vector<8x32xf32>, vector<32x128xf32>, vector<8x128xf32> -> vector<8x128xf32>
    %329 = arith.addf %328, %14 : vector<8x128xf32>
    %cst_62 = arith.constant dense<0.000000e+00> : vector<8x128xf32>
    %330 = tpu.matmul %310, %3, %cst_62 {dimension_numbers = #tpu.dot_dimension_numbers<[1], [0], [0], [1], [0, 0, 1, 1], [], []>} : vector<8x32xf32>, vector<32x128xf32>, vector<8x128xf32> -> vector<8x128xf32>
    %331 = arith.addf %329, %330 : vector<8x128xf32>
    %332 = arith.negf %331 : vector<8x128xf32>
    %333 = math.exp %332 : vector<8x128xf32>
    %cst_63 = arith.constant 1.000000e+00 : f32
    %334 = vector.broadcast %cst_63 : f32 to vector<8x128xf32>
    %335 = arith.addf %334, %333 : vector<8x128xf32>
    %336 = arith.divf %334, %335 : vector<8x128xf32>
    %337 = math.tanh %331 : vector<8x128xf32>
    %338 = vector.extract_strided_slice %336 {offsets = [0, 0], sizes = [8, 32], strides = [1, 1]} : vector<8x128xf32> to vector<8x32xf32>
    %339 = vector.extract_strided_slice %336 {offsets = [0, 32], sizes = [8, 32], strides = [1, 1]} : vector<8x128xf32> to vector<8x32xf32>
    %340 = vector.extract_strided_slice %337 {offsets = [0, 64], sizes = [8, 32], strides = [1, 1]} : vector<8x128xf32> to vector<8x32xf32>
    %341 = vector.extract_strided_slice %336 {offsets = [0, 96], sizes = [8, 32], strides = [1, 1]} : vector<8x128xf32> to vector<8x32xf32>
    %342 = arith.mulf %339, %308 : vector<8x32xf32>
    %343 = arith.mulf %338, %340 : vector<8x32xf32>
    %344 = arith.addf %342, %343 : vector<8x32xf32>
    %345 = math.tanh %344 : vector<8x32xf32>
    %346 = arith.mulf %341, %345 : vector<8x32xf32>
    %cst_64 = arith.constant dense<0.000000e+00> : vector<8x16xf32>
    %347 = tpu.matmul %346, %15, %cst_64 {dimension_numbers = #tpu.dot_dimension_numbers<[1], [0], [0], [1], [0, 0, 1, 1], [], []>} : vector<8x32xf32>, vector<32x16xf32>, vector<8x16xf32> -> vector<8x16xf32>
    %348 = arith.addf %347, %18 : vector<8x16xf32>
    %c0_65 = arith.constant 0 : index
    %c0_66 = arith.constant 0 : index
    %349 = vector.load %arg7[%c0_65, %c0_66] : memref<8x128xf32, #tpu.memory_space<vmem>>, vector<8x16xf32>
    tpu.vector_store %arg7[%c0_65, %c0_66], %348 {strides = array<i32>} : memref<8x128xf32, #tpu.memory_space<vmem>>, vector<8x16xf32>,
    %cst_67 = arith.constant dense<0.000000e+00> : vector<8x128xf32>
    %350 = tpu.matmul %327, %2, %cst_67 {dimension_numbers = #tpu.dot_dimension_numbers<[1], [0], [0], [1], [0, 0, 1, 1], [], []>} : vector<8x32xf32>, vector<32x128xf32>, vector<8x128xf32> -> vector<8x128xf32>
    %351 = arith.addf %11, %350 : vector<8x128xf32>
    %352 = arith.negf %351 : vector<8x128xf32>
    %353 = math.exp %352 : vector<8x128xf32>
    %cst_68 = arith.constant 1.000000e+00 : f32
    %354 = vector.broadcast %cst_68 : f32 to vector<8x128xf32>
    %355 = arith.addf %354, %353 : vector<8x128xf32>
    %356 = arith.divf %354, %355 : vector<8x128xf32>
    %357 = math.tanh %351 : vector<8x128xf32>
    %358 = vector.extract_strided_slice %356 {offsets = [0, 0], sizes = [8, 32], strides = [1, 1]} : vector<8x128xf32> to vector<8x32xf32>
    %359 = vector.extract_strided_slice %356 {offsets = [0, 32], sizes = [8, 32], strides = [1, 1]} : vector<8x128xf32> to vector<8x32xf32>
    %360 = vector.extract_strided_slice %357 {offsets = [0, 64], sizes = [8, 32], strides = [1, 1]} : vector<8x128xf32> to vector<8x32xf32>
    %361 = vector.extract_strided_slice %356 {offsets = [0, 96], sizes = [8, 32], strides = [1, 1]} : vector<8x128xf32> to vector<8x32xf32>
    %362 = arith.mulf %359, %325 : vector<8x32xf32>
    %363 = arith.mulf %358, %360 : vector<8x32xf32>
    %364 = arith.addf %362, %363 : vector<8x32xf32>
    %365 = math.tanh %364 : vector<8x32xf32>
    %366 = arith.mulf %361, %365 : vector<8x32xf32>
    %cst_69 = arith.constant dense<0.000000e+00> : vector<8x128xf32>
    %367 = tpu.matmul %366, %5, %cst_69 {dimension_numbers = #tpu.dot_dimension_numbers<[1], [0], [0], [1], [0, 0, 1, 1], [], []>} : vector<8x32xf32>, vector<32x128xf32>, vector<8x128xf32> -> vector<8x128xf32>
    %368 = arith.addf %367, %14 : vector<8x128xf32>
    %cst_70 = arith.constant dense<0.000000e+00> : vector<8x128xf32>
    %369 = tpu.matmul %346, %3, %cst_70 {dimension_numbers = #tpu.dot_dimension_numbers<[1], [0], [0], [1], [0, 0, 1, 1], [], []>} : vector<8x32xf32>, vector<32x128xf32>, vector<8x128xf32> -> vector<8x128xf32>
    %370 = arith.addf %368, %369 : vector<8x128xf32>
    %371 = arith.negf %370 : vector<8x128xf32>
    %372 = math.exp %371 : vector<8x128xf32>
    %cst_71 = arith.constant 1.000000e+00 : f32
    %373 = vector.broadcast %cst_71 : f32 to vector<8x128xf32>
    %374 = arith.addf %373, %372 : vector<8x128xf32>
    %375 = arith.divf %373, %374 : vector<8x128xf32>
    %376 = math.tanh %370 : vector<8x128xf32>
    %377 = vector.extract_strided_slice %375 {offsets = [0, 0], sizes = [8, 32], strides = [1, 1]} : vector<8x128xf32> to vector<8x32xf32>
    %378 = vector.extract_strided_slice %375 {offsets = [0, 32], sizes = [8, 32], strides = [1, 1]} : vector<8x128xf32> to vector<8x32xf32>
    %379 = vector.extract_strided_slice %376 {offsets = [0, 64], sizes = [8, 32], strides = [1, 1]} : vector<8x128xf32> to vector<8x32xf32>
    %380 = vector.extract_strided_slice %375 {offsets = [0, 96], sizes = [8, 32], strides = [1, 1]} : vector<8x128xf32> to vector<8x32xf32>
    %381 = arith.mulf %378, %344 : vector<8x32xf32>
    %382 = arith.mulf %377, %379 : vector<8x32xf32>
    %383 = arith.addf %381, %382 : vector<8x32xf32>
    %384 = math.tanh %383 : vector<8x32xf32>
    %385 = arith.mulf %380, %384 : vector<8x32xf32>
    %cst_72 = arith.constant dense<0.000000e+00> : vector<8x16xf32>
    %386 = tpu.matmul %385, %15, %cst_72 {dimension_numbers = #tpu.dot_dimension_numbers<[1], [0], [0], [1], [0, 0, 1, 1], [], []>} : vector<8x32xf32>, vector<32x16xf32>, vector<8x16xf32> -> vector<8x16xf32>
    %387 = arith.addf %386, %18 : vector<8x16xf32>
    %c0_73 = arith.constant 0 : index
    %c16 = arith.constant 16 : index
    %388 = vector.load %arg7[%c0_73, %c16] : memref<8x128xf32, #tpu.memory_space<vmem>>, vector<8x16xf32>
    tpu.vector_store %arg7[%c0_73, %c16], %387 {strides = array<i32>} : memref<8x128xf32, #tpu.memory_space<vmem>>, vector<8x16xf32>,
    %cst_74 = arith.constant dense<0.000000e+00> : vector<8x128xf32>
    %389 = tpu.matmul %366, %2, %cst_74 {dimension_numbers = #tpu.dot_dimension_numbers<[1], [0], [0], [1], [0, 0, 1, 1], [], []>} : vector<8x32xf32>, vector<32x128xf32>, vector<8x128xf32> -> vector<8x128xf32>
    %390 = arith.addf %11, %389 : vector<8x128xf32>
    %391 = arith.negf %390 : vector<8x128xf32>
    %392 = math.exp %391 : vector<8x128xf32>
    %cst_75 = arith.constant 1.000000e+00 : f32
    %393 = vector.broadcast %cst_75 : f32 to vector<8x128xf32>
    %394 = arith.addf %393, %392 : vector<8x128xf32>
    %395 = arith.divf %393, %394 : vector<8x128xf32>
    %396 = math.tanh %390 : vector<8x128xf32>
    %397 = vector.extract_strided_slice %395 {offsets = [0, 0], sizes = [8, 32], strides = [1, 1]} : vector<8x128xf32> to vector<8x32xf32>
    %398 = vector.extract_strided_slice %395 {offsets = [0, 32], sizes = [8, 32], strides = [1, 1]} : vector<8x128xf32> to vector<8x32xf32>
    %399 = vector.extract_strided_slice %396 {offsets = [0, 64], sizes = [8, 32], strides = [1, 1]} : vector<8x128xf32> to vector<8x32xf32>
    %400 = vector.extract_strided_slice %395 {offsets = [0, 96], sizes = [8, 32], strides = [1, 1]} : vector<8x128xf32> to vector<8x32xf32>
    %401 = arith.mulf %398, %364 : vector<8x32xf32>
    %402 = arith.mulf %397, %399 : vector<8x32xf32>
    %403 = arith.addf %401, %402 : vector<8x32xf32>
    %404 = math.tanh %403 : vector<8x32xf32>
    %405 = arith.mulf %400, %404 : vector<8x32xf32>
    %cst_76 = arith.constant dense<0.000000e+00> : vector<8x128xf32>
    %406 = tpu.matmul %405, %5, %cst_76 {dimension_numbers = #tpu.dot_dimension_numbers<[1], [0], [0], [1], [0, 0, 1, 1], [], []>} : vector<8x32xf32>, vector<32x128xf32>, vector<8x128xf32> -> vector<8x128xf32>
    %407 = arith.addf %406, %14 : vector<8x128xf32>
    %cst_77 = arith.constant dense<0.000000e+00> : vector<8x128xf32>
    %408 = tpu.matmul %385, %3, %cst_77 {dimension_numbers = #tpu.dot_dimension_numbers<[1], [0], [0], [1], [0, 0, 1, 1], [], []>} : vector<8x32xf32>, vector<32x128xf32>, vector<8x128xf32> -> vector<8x128xf32>
    %409 = arith.addf %407, %408 : vector<8x128xf32>
    %410 = arith.negf %409 : vector<8x128xf32>
    %411 = math.exp %410 : vector<8x128xf32>
    %cst_78 = arith.constant 1.000000e+00 : f32
    %412 = vector.broadcast %cst_78 : f32 to vector<8x128xf32>
    %413 = arith.addf %412, %411 : vector<8x128xf32>
    %414 = arith.divf %412, %413 : vector<8x128xf32>
    %415 = math.tanh %409 : vector<8x128xf32>
    %416 = vector.extract_strided_slice %414 {offsets = [0, 0], sizes = [8, 32], strides = [1, 1]} : vector<8x128xf32> to vector<8x32xf32>
    %417 = vector.extract_strided_slice %414 {offsets = [0, 32], sizes = [8, 32], strides = [1, 1]} : vector<8x128xf32> to vector<8x32xf32>
    %418 = vector.extract_strided_slice %415 {offsets = [0, 64], sizes = [8, 32], strides = [1, 1]} : vector<8x128xf32> to vector<8x32xf32>
    %419 = vector.extract_strided_slice %414 {offsets = [0, 96], sizes = [8, 32], strides = [1, 1]} : vector<8x128xf32> to vector<8x32xf32>
    %420 = arith.mulf %417, %383 : vector<8x32xf32>
    %421 = arith.mulf %416, %418 : vector<8x32xf32>
    %422 = arith.addf %420, %421 : vector<8x32xf32>
    %423 = math.tanh %422 : vector<8x32xf32>
    %424 = arith.mulf %419, %423 : vector<8x32xf32>
    %cst_79 = arith.constant dense<0.000000e+00> : vector<8x16xf32>
    %425 = tpu.matmul %424, %15, %cst_79 {dimension_numbers = #tpu.dot_dimension_numbers<[1], [0], [0], [1], [0, 0, 1, 1], [], []>} : vector<8x32xf32>, vector<32x16xf32>, vector<8x16xf32> -> vector<8x16xf32>
    %426 = arith.addf %425, %18 : vector<8x16xf32>
    %c0_80 = arith.constant 0 : index
    %c32_81 = arith.constant 32 : index
    %427 = vector.load %arg7[%c0_80, %c32_81] : memref<8x128xf32, #tpu.memory_space<vmem>>, vector<8x16xf32>
    tpu.vector_store %arg7[%c0_80, %c32_81], %426 {strides = array<i32>} : memref<8x128xf32, #tpu.memory_space<vmem>>, vector<8x16xf32>,
    %cst_82 = arith.constant dense<0.000000e+00> : vector<8x128xf32>
    %428 = tpu.matmul %405, %2, %cst_82 {dimension_numbers = #tpu.dot_dimension_numbers<[1], [0], [0], [1], [0, 0, 1, 1], [], []>} : vector<8x32xf32>, vector<32x128xf32>, vector<8x128xf32> -> vector<8x128xf32>
    %429 = arith.addf %11, %428 : vector<8x128xf32>
    %430 = arith.negf %429 : vector<8x128xf32>
    %431 = math.exp %430 : vector<8x128xf32>
    %cst_83 = arith.constant 1.000000e+00 : f32
    %432 = vector.broadcast %cst_83 : f32 to vector<8x128xf32>
    %433 = arith.addf %432, %431 : vector<8x128xf32>
    %434 = arith.divf %432, %433 : vector<8x128xf32>
    %435 = math.tanh %429 : vector<8x128xf32>
    %436 = vector.extract_strided_slice %434 {offsets = [0, 0], sizes = [8, 32], strides = [1, 1]} : vector<8x128xf32> to vector<8x32xf32>
    %437 = vector.extract_strided_slice %434 {offsets = [0, 32], sizes = [8, 32], strides = [1, 1]} : vector<8x128xf32> to vector<8x32xf32>
    %438 = vector.extract_strided_slice %435 {offsets = [0, 64], sizes = [8, 32], strides = [1, 1]} : vector<8x128xf32> to vector<8x32xf32>
    %439 = vector.extract_strided_slice %434 {offsets = [0, 96], sizes = [8, 32], strides = [1, 1]} : vector<8x128xf32> to vector<8x32xf32>
    %440 = arith.mulf %437, %403 : vector<8x32xf32>
    %441 = arith.mulf %436, %438 : vector<8x32xf32>
    %442 = arith.addf %440, %441 : vector<8x32xf32>
    %443 = math.tanh %442 : vector<8x32xf32>
    %444 = arith.mulf %439, %443 : vector<8x32xf32>
    %cst_84 = arith.constant dense<0.000000e+00> : vector<8x128xf32>
    %445 = tpu.matmul %444, %5, %cst_84 {dimension_numbers = #tpu.dot_dimension_numbers<[1], [0], [0], [1], [0, 0, 1, 1], [], []>} : vector<8x32xf32>, vector<32x128xf32>, vector<8x128xf32> -> vector<8x128xf32>
    %446 = arith.addf %445, %14 : vector<8x128xf32>
    %cst_85 = arith.constant dense<0.000000e+00> : vector<8x128xf32>
    %447 = tpu.matmul %424, %3, %cst_85 {dimension_numbers = #tpu.dot_dimension_numbers<[1], [0], [0], [1], [0, 0, 1, 1], [], []>} : vector<8x32xf32>, vector<32x128xf32>, vector<8x128xf32> -> vector<8x128xf32>
    %448 = arith.addf %446, %447 : vector<8x128xf32>
    %449 = arith.negf %448 : vector<8x128xf32>
    %450 = math.exp %449 : vector<8x128xf32>
    %cst_86 = arith.constant 1.000000e+00 : f32
    %451 = vector.broadcast %cst_86 : f32 to vector<8x128xf32>
    %452 = arith.addf %451, %450 : vector<8x128xf32>
    %453 = arith.divf %451, %452 : vector<8x128xf32>
    %454 = math.tanh %448 : vector<8x128xf32>
    %455 = vector.extract_strided_slice %453 {offsets = [0, 0], sizes = [8, 32], strides = [1, 1]} : vector<8x128xf32> to vector<8x32xf32>
    %456 = vector.extract_strided_slice %453 {offsets = [0, 32], sizes = [8, 32], strides = [1, 1]} : vector<8x128xf32> to vector<8x32xf32>
    %457 = vector.extract_strided_slice %454 {offsets = [0, 64], sizes = [8, 32], strides = [1, 1]} : vector<8x128xf32> to vector<8x32xf32>
    %458 = vector.extract_strided_slice %453 {offsets = [0, 96], sizes = [8, 32], strides = [1, 1]} : vector<8x128xf32> to vector<8x32xf32>
    %459 = arith.mulf %456, %422 : vector<8x32xf32>
    %460 = arith.mulf %455, %457 : vector<8x32xf32>
    %461 = arith.addf %459, %460 : vector<8x32xf32>
    %462 = math.tanh %461 : vector<8x32xf32>
    %463 = arith.mulf %458, %462 : vector<8x32xf32>
    %cst_87 = arith.constant dense<0.000000e+00> : vector<8x16xf32>
    %464 = tpu.matmul %463, %15, %cst_87 {dimension_numbers = #tpu.dot_dimension_numbers<[1], [0], [0], [1], [0, 0, 1, 1], [], []>} : vector<8x32xf32>, vector<32x16xf32>, vector<8x16xf32> -> vector<8x16xf32>
    %465 = arith.addf %464, %18 : vector<8x16xf32>
    %c0_88 = arith.constant 0 : index
    %c48 = arith.constant 48 : index
    %466 = vector.load %arg7[%c0_88, %c48] : memref<8x128xf32, #tpu.memory_space<vmem>>, vector<8x16xf32>
    tpu.vector_store %arg7[%c0_88, %c48], %465 {strides = array<i32>} : memref<8x128xf32, #tpu.memory_space<vmem>>, vector<8x16xf32>,
    %cst_89 = arith.constant dense<0.000000e+00> : vector<8x128xf32>
    %467 = tpu.matmul %444, %2, %cst_89 {dimension_numbers = #tpu.dot_dimension_numbers<[1], [0], [0], [1], [0, 0, 1, 1], [], []>} : vector<8x32xf32>, vector<32x128xf32>, vector<8x128xf32> -> vector<8x128xf32>
    %468 = arith.addf %11, %467 : vector<8x128xf32>
    %469 = arith.negf %468 : vector<8x128xf32>
    %470 = math.exp %469 : vector<8x128xf32>
    %cst_90 = arith.constant 1.000000e+00 : f32
    %471 = vector.broadcast %cst_90 : f32 to vector<8x128xf32>
    %472 = arith.addf %471, %470 : vector<8x128xf32>
    %473 = arith.divf %471, %472 : vector<8x128xf32>
    %474 = math.tanh %468 : vector<8x128xf32>
    %475 = vector.extract_strided_slice %473 {offsets = [0, 0], sizes = [8, 32], strides = [1, 1]} : vector<8x128xf32> to vector<8x32xf32>
    %476 = vector.extract_strided_slice %473 {offsets = [0, 32], sizes = [8, 32], strides = [1, 1]} : vector<8x128xf32> to vector<8x32xf32>
    %477 = vector.extract_strided_slice %474 {offsets = [0, 64], sizes = [8, 32], strides = [1, 1]} : vector<8x128xf32> to vector<8x32xf32>
    %478 = vector.extract_strided_slice %473 {offsets = [0, 96], sizes = [8, 32], strides = [1, 1]} : vector<8x128xf32> to vector<8x32xf32>
    %479 = arith.mulf %476, %442 : vector<8x32xf32>
    %480 = arith.mulf %475, %477 : vector<8x32xf32>
    %481 = arith.addf %479, %480 : vector<8x32xf32>
    %482 = math.tanh %481 : vector<8x32xf32>
    %483 = arith.mulf %478, %482 : vector<8x32xf32>
    %cst_91 = arith.constant dense<0.000000e+00> : vector<8x128xf32>
    %484 = tpu.matmul %483, %5, %cst_91 {dimension_numbers = #tpu.dot_dimension_numbers<[1], [0], [0], [1], [0, 0, 1, 1], [], []>} : vector<8x32xf32>, vector<32x128xf32>, vector<8x128xf32> -> vector<8x128xf32>
    %485 = arith.addf %484, %14 : vector<8x128xf32>
    %cst_92 = arith.constant dense<0.000000e+00> : vector<8x128xf32>
    %486 = tpu.matmul %463, %3, %cst_92 {dimension_numbers = #tpu.dot_dimension_numbers<[1], [0], [0], [1], [0, 0, 1, 1], [], []>} : vector<8x32xf32>, vector<32x128xf32>, vector<8x128xf32> -> vector<8x128xf32>
    %487 = arith.addf %485, %486 : vector<8x128xf32>
    %488 = arith.negf %487 : vector<8x128xf32>
    %489 = math.exp %488 : vector<8x128xf32>
    %cst_93 = arith.constant 1.000000e+00 : f32
    %490 = vector.broadcast %cst_93 : f32 to vector<8x128xf32>
    %491 = arith.addf %490, %489 : vector<8x128xf32>
    %492 = arith.divf %490, %491 : vector<8x128xf32>
    %493 = math.tanh %487 : vector<8x128xf32>
    %494 = vector.extract_strided_slice %492 {offsets = [0, 0], sizes = [8, 32], strides = [1, 1]} : vector<8x128xf32> to vector<8x32xf32>
    %495 = vector.extract_strided_slice %492 {offsets = [0, 32], sizes = [8, 32], strides = [1, 1]} : vector<8x128xf32> to vector<8x32xf32>
    %496 = vector.extract_strided_slice %493 {offsets = [0, 64], sizes = [8, 32], strides = [1, 1]} : vector<8x128xf32> to vector<8x32xf32>
    %497 = vector.extract_strided_slice %492 {offsets = [0, 96], sizes = [8, 32], strides = [1, 1]} : vector<8x128xf32> to vector<8x32xf32>
    %498 = arith.mulf %495, %461 : vector<8x32xf32>
    %499 = arith.mulf %494, %496 : vector<8x32xf32>
    %500 = arith.addf %498, %499 : vector<8x32xf32>
    %501 = math.tanh %500 : vector<8x32xf32>
    %502 = arith.mulf %497, %501 : vector<8x32xf32>
    %cst_94 = arith.constant dense<0.000000e+00> : vector<8x16xf32>
    %503 = tpu.matmul %502, %15, %cst_94 {dimension_numbers = #tpu.dot_dimension_numbers<[1], [0], [0], [1], [0, 0, 1, 1], [], []>} : vector<8x32xf32>, vector<32x16xf32>, vector<8x16xf32> -> vector<8x16xf32>
    %504 = arith.addf %503, %18 : vector<8x16xf32>
    %c0_95 = arith.constant 0 : index
    %c64_96 = arith.constant 64 : index
    %505 = vector.load %arg7[%c0_95, %c64_96] : memref<8x128xf32, #tpu.memory_space<vmem>>, vector<8x16xf32>
    tpu.vector_store %arg7[%c0_95, %c64_96], %504 {strides = array<i32>} : memref<8x128xf32, #tpu.memory_space<vmem>>, vector<8x16xf32>,
    %cst_97 = arith.constant dense<0.000000e+00> : vector<8x128xf32>
    %506 = tpu.matmul %483, %2, %cst_97 {dimension_numbers = #tpu.dot_dimension_numbers<[1], [0], [0], [1], [0, 0, 1, 1], [], []>} : vector<8x32xf32>, vector<32x128xf32>, vector<8x128xf32> -> vector<8x128xf32>
    %507 = arith.addf %11, %506 : vector<8x128xf32>
    %508 = arith.negf %507 : vector<8x128xf32>
    %509 = math.exp %508 : vector<8x128xf32>
    %cst_98 = arith.constant 1.000000e+00 : f32
    %510 = vector.broadcast %cst_98 : f32 to vector<8x128xf32>
    %511 = arith.addf %510, %509 : vector<8x128xf32>
    %512 = arith.divf %510, %511 : vector<8x128xf32>
    %513 = math.tanh %507 : vector<8x128xf32>
    %514 = vector.extract_strided_slice %512 {offsets = [0, 0], sizes = [8, 32], strides = [1, 1]} : vector<8x128xf32> to vector<8x32xf32>
    %515 = vector.extract_strided_slice %512 {offsets = [0, 32], sizes = [8, 32], strides = [1, 1]} : vector<8x128xf32> to vector<8x32xf32>
    %516 = vector.extract_strided_slice %513 {offsets = [0, 64], sizes = [8, 32], strides = [1, 1]} : vector<8x128xf32> to vector<8x32xf32>
    %517 = vector.extract_strided_slice %512 {offsets = [0, 96], sizes = [8, 32], strides = [1, 1]} : vector<8x128xf32> to vector<8x32xf32>
    %518 = arith.mulf %515, %481 : vector<8x32xf32>
    %519 = arith.mulf %514, %516 : vector<8x32xf32>
    %520 = arith.addf %518, %519 : vector<8x32xf32>
    %521 = math.tanh %520 : vector<8x32xf32>
    %522 = arith.mulf %517, %521 : vector<8x32xf32>
    %cst_99 = arith.constant dense<0.000000e+00> : vector<8x128xf32>
    %523 = tpu.matmul %522, %5, %cst_99 {dimension_numbers = #tpu.dot_dimension_numbers<[1], [0], [0], [1], [0, 0, 1, 1], [], []>} : vector<8x32xf32>, vector<32x128xf32>, vector<8x128xf32> -> vector<8x128xf32>
    %524 = arith.addf %523, %14 : vector<8x128xf32>
    %cst_100 = arith.constant dense<0.000000e+00> : vector<8x128xf32>
    %525 = tpu.matmul %502, %3, %cst_100 {dimension_numbers = #tpu.dot_dimension_numbers<[1], [0], [0], [1], [0, 0, 1, 1], [], []>} : vector<8x32xf32>, vector<32x128xf32>, vector<8x128xf32> -> vector<8x128xf32>
    %526 = arith.addf %524, %525 : vector<8x128xf32>
    %527 = arith.negf %526 : vector<8x128xf32>
    %528 = math.exp %527 : vector<8x128xf32>
    %cst_101 = arith.constant 1.000000e+00 : f32
    %529 = vector.broadcast %cst_101 : f32 to vector<8x128xf32>
    %530 = arith.addf %529, %528 : vector<8x128xf32>
    %531 = arith.divf %529, %530 : vector<8x128xf32>
    %532 = math.tanh %526 : vector<8x128xf32>
    %533 = vector.extract_strided_slice %531 {offsets = [0, 0], sizes = [8, 32], strides = [1, 1]} : vector<8x128xf32> to vector<8x32xf32>
    %534 = vector.extract_strided_slice %531 {offsets = [0, 32], sizes = [8, 32], strides = [1, 1]} : vector<8x128xf32> to vector<8x32xf32>
    %535 = vector.extract_strided_slice %532 {offsets = [0, 64], sizes = [8, 32], strides = [1, 1]} : vector<8x128xf32> to vector<8x32xf32>
    %536 = vector.extract_strided_slice %531 {offsets = [0, 96], sizes = [8, 32], strides = [1, 1]} : vector<8x128xf32> to vector<8x32xf32>
    %537 = arith.mulf %534, %500 : vector<8x32xf32>
    %538 = arith.mulf %533, %535 : vector<8x32xf32>
    %539 = arith.addf %537, %538 : vector<8x32xf32>
    %540 = math.tanh %539 : vector<8x32xf32>
    %541 = arith.mulf %536, %540 : vector<8x32xf32>
    %cst_102 = arith.constant dense<0.000000e+00> : vector<8x16xf32>
    %542 = tpu.matmul %541, %15, %cst_102 {dimension_numbers = #tpu.dot_dimension_numbers<[1], [0], [0], [1], [0, 0, 1, 1], [], []>} : vector<8x32xf32>, vector<32x16xf32>, vector<8x16xf32> -> vector<8x16xf32>
    %543 = arith.addf %542, %18 : vector<8x16xf32>
    %c0_103 = arith.constant 0 : index
    %c80 = arith.constant 80 : index
    %544 = vector.load %arg7[%c0_103, %c80] : memref<8x128xf32, #tpu.memory_space<vmem>>, vector<8x16xf32>
    tpu.vector_store %arg7[%c0_103, %c80], %543 {strides = array<i32>} : memref<8x128xf32, #tpu.memory_space<vmem>>, vector<8x16xf32>,
    %cst_104 = arith.constant dense<0.000000e+00> : vector<8x128xf32>
    %545 = tpu.matmul %522, %2, %cst_104 {dimension_numbers = #tpu.dot_dimension_numbers<[1], [0], [0], [1], [0, 0, 1, 1], [], []>} : vector<8x32xf32>, vector<32x128xf32>, vector<8x128xf32> -> vector<8x128xf32>
    %546 = arith.addf %11, %545 : vector<8x128xf32>
    %547 = arith.negf %546 : vector<8x128xf32>
    %548 = math.exp %547 : vector<8x128xf32>
    %cst_105 = arith.constant 1.000000e+00 : f32
    %549 = vector.broadcast %cst_105 : f32 to vector<8x128xf32>
    %550 = arith.addf %549, %548 : vector<8x128xf32>
    %551 = arith.divf %549, %550 : vector<8x128xf32>
    %552 = math.tanh %546 : vector<8x128xf32>
    %553 = vector.extract_strided_slice %551 {offsets = [0, 0], sizes = [8, 32], strides = [1, 1]} : vector<8x128xf32> to vector<8x32xf32>
    %554 = vector.extract_strided_slice %551 {offsets = [0, 32], sizes = [8, 32], strides = [1, 1]} : vector<8x128xf32> to vector<8x32xf32>
    %555 = vector.extract_strided_slice %552 {offsets = [0, 64], sizes = [8, 32], strides = [1, 1]} : vector<8x128xf32> to vector<8x32xf32>
    %556 = vector.extract_strided_slice %551 {offsets = [0, 96], sizes = [8, 32], strides = [1, 1]} : vector<8x128xf32> to vector<8x32xf32>
    %557 = arith.mulf %554, %520 : vector<8x32xf32>
    %558 = arith.mulf %553, %555 : vector<8x32xf32>
    %559 = arith.addf %557, %558 : vector<8x32xf32>
    %560 = math.tanh %559 : vector<8x32xf32>
    %561 = arith.mulf %556, %560 : vector<8x32xf32>
    %cst_106 = arith.constant dense<0.000000e+00> : vector<8x128xf32>
    %562 = tpu.matmul %561, %5, %cst_106 {dimension_numbers = #tpu.dot_dimension_numbers<[1], [0], [0], [1], [0, 0, 1, 1], [], []>} : vector<8x32xf32>, vector<32x128xf32>, vector<8x128xf32> -> vector<8x128xf32>
    %563 = arith.addf %562, %14 : vector<8x128xf32>
    %cst_107 = arith.constant dense<0.000000e+00> : vector<8x128xf32>
    %564 = tpu.matmul %541, %3, %cst_107 {dimension_numbers = #tpu.dot_dimension_numbers<[1], [0], [0], [1], [0, 0, 1, 1], [], []>} : vector<8x32xf32>, vector<32x128xf32>, vector<8x128xf32> -> vector<8x128xf32>
    %565 = arith.addf %563, %564 : vector<8x128xf32>
    %566 = arith.negf %565 : vector<8x128xf32>
    %567 = math.exp %566 : vector<8x128xf32>
    %cst_108 = arith.constant 1.000000e+00 : f32
    %568 = vector.broadcast %cst_108 : f32 to vector<8x128xf32>
    %569 = arith.addf %568, %567 : vector<8x128xf32>
    %570 = arith.divf %568, %569 : vector<8x128xf32>
    %571 = math.tanh %565 : vector<8x128xf32>
    %572 = vector.extract_strided_slice %570 {offsets = [0, 0], sizes = [8, 32], strides = [1, 1]} : vector<8x128xf32> to vector<8x32xf32>
    %573 = vector.extract_strided_slice %570 {offsets = [0, 32], sizes = [8, 32], strides = [1, 1]} : vector<8x128xf32> to vector<8x32xf32>
    %574 = vector.extract_strided_slice %571 {offsets = [0, 64], sizes = [8, 32], strides = [1, 1]} : vector<8x128xf32> to vector<8x32xf32>
    %575 = vector.extract_strided_slice %570 {offsets = [0, 96], sizes = [8, 32], strides = [1, 1]} : vector<8x128xf32> to vector<8x32xf32>
    %576 = arith.mulf %573, %539 : vector<8x32xf32>
    %577 = arith.mulf %572, %574 : vector<8x32xf32>
    %578 = arith.addf %576, %577 : vector<8x32xf32>
    %579 = math.tanh %578 : vector<8x32xf32>
    %580 = arith.mulf %575, %579 : vector<8x32xf32>
    %cst_109 = arith.constant dense<0.000000e+00> : vector<8x16xf32>
    %581 = tpu.matmul %580, %15, %cst_109 {dimension_numbers = #tpu.dot_dimension_numbers<[1], [0], [0], [1], [0, 0, 1, 1], [], []>} : vector<8x32xf32>, vector<32x16xf32>, vector<8x16xf32> -> vector<8x16xf32>
    %582 = arith.addf %581, %18 : vector<8x16xf32>
    %c0_110 = arith.constant 0 : index
    %c96_111 = arith.constant 96 : index
    %583 = vector.load %arg7[%c0_110, %c96_111] : memref<8x128xf32, #tpu.memory_space<vmem>>, vector<8x16xf32>
    tpu.vector_store %arg7[%c0_110, %c96_111], %582 {strides = array<i32>} : memref<8x128xf32, #tpu.memory_space<vmem>>, vector<8x16xf32>,
    %cst_112 = arith.constant dense<0.000000e+00> : vector<8x128xf32>
    %584 = tpu.matmul %561, %2, %cst_112 {dimension_numbers = #tpu.dot_dimension_numbers<[1], [0], [0], [1], [0, 0, 1, 1], [], []>} : vector<8x32xf32>, vector<32x128xf32>, vector<8x128xf32> -> vector<8x128xf32>
    %585 = arith.addf %11, %584 : vector<8x128xf32>
    %586 = arith.negf %585 : vector<8x128xf32>
    %587 = math.exp %586 : vector<8x128xf32>
    %cst_113 = arith.constant 1.000000e+00 : f32
    %588 = vector.broadcast %cst_113 : f32 to vector<8x128xf32>
    %589 = arith.addf %588, %587 : vector<8x128xf32>
    %590 = arith.divf %588, %589 : vector<8x128xf32>
    %591 = math.tanh %585 : vector<8x128xf32>
    %592 = vector.extract_strided_slice %590 {offsets = [0, 0], sizes = [8, 32], strides = [1, 1]} : vector<8x128xf32> to vector<8x32xf32>
    %593 = vector.extract_strided_slice %590 {offsets = [0, 32], sizes = [8, 32], strides = [1, 1]} : vector<8x128xf32> to vector<8x32xf32>
    %594 = vector.extract_strided_slice %591 {offsets = [0, 64], sizes = [8, 32], strides = [1, 1]} : vector<8x128xf32> to vector<8x32xf32>
    %595 = vector.extract_strided_slice %590 {offsets = [0, 96], sizes = [8, 32], strides = [1, 1]} : vector<8x128xf32> to vector<8x32xf32>
    %596 = arith.mulf %593, %559 : vector<8x32xf32>
    %597 = arith.mulf %592, %594 : vector<8x32xf32>
    %598 = arith.addf %596, %597 : vector<8x32xf32>
    %599 = math.tanh %598 : vector<8x32xf32>
    %600 = arith.mulf %595, %599 : vector<8x32xf32>
    %cst_114 = arith.constant dense<0.000000e+00> : vector<8x128xf32>
    %601 = tpu.matmul %600, %5, %cst_114 {dimension_numbers = #tpu.dot_dimension_numbers<[1], [0], [0], [1], [0, 0, 1, 1], [], []>} : vector<8x32xf32>, vector<32x128xf32>, vector<8x128xf32> -> vector<8x128xf32>
    %602 = arith.addf %601, %14 : vector<8x128xf32>
    %cst_115 = arith.constant dense<0.000000e+00> : vector<8x128xf32>
    %603 = tpu.matmul %580, %3, %cst_115 {dimension_numbers = #tpu.dot_dimension_numbers<[1], [0], [0], [1], [0, 0, 1, 1], [], []>} : vector<8x32xf32>, vector<32x128xf32>, vector<8x128xf32> -> vector<8x128xf32>
    %604 = arith.addf %602, %603 : vector<8x128xf32>
    %605 = arith.negf %604 : vector<8x128xf32>
    %606 = math.exp %605 : vector<8x128xf32>
    %cst_116 = arith.constant 1.000000e+00 : f32
    %607 = vector.broadcast %cst_116 : f32 to vector<8x128xf32>
    %608 = arith.addf %607, %606 : vector<8x128xf32>
    %609 = arith.divf %607, %608 : vector<8x128xf32>
    %610 = math.tanh %604 : vector<8x128xf32>
    %611 = vector.extract_strided_slice %609 {offsets = [0, 0], sizes = [8, 32], strides = [1, 1]} : vector<8x128xf32> to vector<8x32xf32>
    %612 = vector.extract_strided_slice %609 {offsets = [0, 32], sizes = [8, 32], strides = [1, 1]} : vector<8x128xf32> to vector<8x32xf32>
    %613 = vector.extract_strided_slice %610 {offsets = [0, 64], sizes = [8, 32], strides = [1, 1]} : vector<8x128xf32> to vector<8x32xf32>
    %614 = vector.extract_strided_slice %609 {offsets = [0, 96], sizes = [8, 32], strides = [1, 1]} : vector<8x128xf32> to vector<8x32xf32>
    %615 = arith.mulf %612, %578 : vector<8x32xf32>
    %616 = arith.mulf %611, %613 : vector<8x32xf32>
    %617 = arith.addf %615, %616 : vector<8x32xf32>
    %618 = math.tanh %617 : vector<8x32xf32>
    %619 = arith.mulf %614, %618 : vector<8x32xf32>
    %cst_117 = arith.constant dense<0.000000e+00> : vector<8x16xf32>
    %620 = tpu.matmul %619, %15, %cst_117 {dimension_numbers = #tpu.dot_dimension_numbers<[1], [0], [0], [1], [0, 0, 1, 1], [], []>} : vector<8x32xf32>, vector<32x16xf32>, vector<8x16xf32> -> vector<8x16xf32>
    %621 = arith.addf %620, %18 : vector<8x16xf32>
    %c0_118 = arith.constant 0 : index
    %c112 = arith.constant 112 : index
    %622 = vector.load %arg7[%c0_118, %c112] : memref<8x128xf32, #tpu.memory_space<vmem>>, vector<8x16xf32>
    tpu.vector_store %arg7[%c0_118, %c112], %621 {strides = array<i32>} : memref<8x128xf32, #tpu.memory_space<vmem>>, vector<8x16xf32>,
    return
  }
}

</mosaic_0001>

<llo_original>
// kernel: lstmae_forward.1
$region0: #{lstmae_forward.1}
  #allocation0 [shape = 'u32[]', space=smem, size = 0x4, offset = 0x4, fixed_abs, tag = 'smem constant byte address 0x4 - core index']
  #allocation1 [shape = 'u32[144,128]{1,0:T(1,128)}', space=vmem, size = 0x12000, scoped, tag = 'internal scratch']
  %s0 = inlined_call_operand.vmem [shape: f32[64,16], index: 0, kind: input, shape index: {}]
  %s1 = inlined_call_operand.vmem [shape: f32[16,128], index: 1, kind: input, shape index: {}]
  %s2 = inlined_call_operand.vmem [shape: f32[64,128], index: 2, kind: input, shape index: {}]
  %s3 = inlined_call_operand.vmem [shape: f32[128,128], index: 3, kind: input, shape index: {}]
  %s4 = inlined_call_operand.vmem [shape: f32[4,128], index: 4, kind: input, shape index: {}]
  %s5 = inlined_call_operand.vmem [shape: f32[32,16], index: 5, kind: input, shape index: {}]
  %s6 = inlined_call_operand.vmem [shape: f32[1,16], index: 6, kind: input, shape index: {}]
  %s7 = inlined_call_operand.vmem [shape: f32[8,128], index: 7, kind: output, shape index: {}]
  %s8 = sld [smem:[#allocation0]]
  $region38: #{lstmae_forward.1} parent=0
    _
  %s10 = ssub.s32 1, %s8
  %s11 = scalar_select 0, %s10, %s8
  // Predicated region
  $region2: #{lstmae_forward.1} parent=0 // pred_check
    _
  $region3: #{lstmae_forward.1} parent=0 // pred_check_branch
    %13 = sbr.rel (0) target = $region5
  $region4: #{lstmae_forward.1} parent=0 // pred_region
    _
  $region5: #{lstmae_forward.1} parent=0 // pred_fallthru
    _
  // Predicated region
  $region6: #{lstmae_forward.1} parent=0 // pred_check
    _
  $region7: #{lstmae_forward.1} parent=0 // pred_check_branch
    %15 = sbr.rel (0) target = $region9
  $region8: #{lstmae_forward.1} parent=0 // pred_region
    _
  $region9: #{lstmae_forward.1} parent=0 // pred_fallthru
    _
  // Predicated region
  $region10: #{lstmae_forward.1} parent=0 // pred_check
    _
  $region11: #{lstmae_forward.1} parent=0 // pred_check_branch
    %17 = sbr.rel (0) target = $region13
  $region12: #{lstmae_forward.1} parent=0 // pred_region
    _
  $region13: #{lstmae_forward.1} parent=0 // pred_fallthru
    _
  // Predicated region
  $region14: #{lstmae_forward.1} parent=0 // pred_check
    _
  $region15: #{lstmae_forward.1} parent=0 // pred_check_branch
    %19 = sbr.rel (0) target = $region17
  $region16: #{lstmae_forward.1} parent=0 // pred_region
    _
  $region17: #{lstmae_forward.1} parent=0 // pred_fallthru
    _
  // Predicated region
  $region18: #{lstmae_forward.1} parent=0 // pred_check
    _
  $region19: #{lstmae_forward.1} parent=0 // pred_check_branch
    %21 = sbr.rel (0) target = $region21
  $region20: #{lstmae_forward.1} parent=0 // pred_region
    _
  $region21: #{lstmae_forward.1} parent=0 // pred_fallthru
    _
  // Predicated region
  $region22: #{lstmae_forward.1} parent=0 // pred_check
    _
  $region23: #{lstmae_forward.1} parent=0 // pred_check_branch
    %23 = sbr.rel (0) target = $region25
  $region24: #{lstmae_forward.1} parent=0 // pred_region
    _
  $region25: #{lstmae_forward.1} parent=0 // pred_fallthru
    _
  // Predicated region
  $region26: #{lstmae_forward.1} parent=0 // pred_check
    _
  $region27: #{lstmae_forward.1} parent=0 // pred_check_branch
    %25 = sbr.rel (0) target = $region29
  $region28: #{lstmae_forward.1} parent=0 // pred_region
    _
  $region29: #{lstmae_forward.1} parent=0 // pred_fallthru
    _
  %v26 = vld [vmem:[%s3] sm:$0xff]
  %v27 = vld [vmem:[%s3 + $0x8] sm:$0xff]
  %v28 = vld [vmem:[%s3 + $0x10] sm:$0xff]
  %v29 = vld [vmem:[%s3 + $0x18] sm:$0xff]
  %v30 = vld [vmem:[%s3 + $0x20] sm:$0xff]
  %v31 = vld [vmem:[%s3 + $0x28] sm:$0xff]
  %v32 = vld [vmem:[%s3 + $0x30] sm:$0xff]
  %v33 = vld [vmem:[%s3 + $0x38] sm:$0xff]
  %v34 = vld [vmem:[%s3 + $0x40] sm:$0xff]
  %v35 = vld [vmem:[%s3 + $0x48] sm:$0xff]
  %v36 = vld [vmem:[%s3 + $0x50] sm:$0xff]
  %v37 = vld [vmem:[%s3 + $0x58] sm:$0xff]
  %v38 = vld [vmem:[%s3 + $0x60] sm:$0xff]
  %v39 = vld [vmem:[%s3 + $0x68] sm:$0xff]
  %v40 = vld [vmem:[%s3 + $0x70] sm:$0xff]
  %v41 = vld [vmem:[%s3 + $0x78] sm:$0xff]
  %v42 = vld [vmem:[%s2] sm:$0xff]
  %v43 = vld [vmem:[%s2 + $0x8] sm:$0xff]
  %v44 = vld [vmem:[%s2 + $0x10] sm:$0xff]
  %v45 = vld [vmem:[%s2 + $0x18] sm:$0xff]
  %v46 = vld [vmem:[%s2 + $0x20] sm:$0xff]
  %v47 = vld [vmem:[%s2 + $0x28] sm:$0xff]
  %v48 = vld [vmem:[%s2 + $0x30] sm:$0xff]
  %v49 = vld [vmem:[%s2 + $0x38] sm:$0xff]
  %v50 = vld [vmem:[%s4 + $0x1] sm:$0x1]
  %v51 = vlaneseq
  %v52 = vshrl.u32 %v51, 7
  %v53 = vsub.s32 0, %v52
  %v54 = vrot.slane %v50, %v53
  %v55 = vld [vmem:[%s4 + $0x2] sm:$0x1]
  %v56 = vlaneseq
  %v57 = vshrl.u32 %v56, 7
  %v58 = vsub.s32 0, %v57
  %v59 = vrot.slane %v55, %v58
  %v60 = vld [vmem:[%s4 + $0x3] sm:$0x1]
  %v61 = vlaneseq
  %v62 = vshrl.u32 %v61, 7
  %v63 = vsub.s32 0, %v62
  %v64 = vrot.slane %v60, %v63
  %v65 = vld [vmem:[%s5] sm:$0xff]
  %v66 = vld [vmem:[%s5 + $0x8] sm:$0xff]
  %v67 = vld [vmem:[%s5 + $0x10] sm:$0xff]
  %v68 = vld [vmem:[%s5 + $0x18] sm:$0xff]
  %v69 = vld [vmem:[%s6] sm:$0x1]
  %v71 = vlaneseq
  %v72 = vshrl.u32 %v71, 7
  %v73 = vsub.s32 0, %v72
  %v74 = vrot.slane %v69, %v73
  %v76 = vld [vmem:[%s0] sm:$0xff]
  %v77 = vld [vmem:[%s0 + $0x8] sm:$0xff]
  %v78 = vld [vmem:[%s0 + $0x10] sm:$0xff]
  %v79 = vld [vmem:[%s0 + $0x18] sm:$0xff]
  %v80 = vld [vmem:[%s0 + $0x20] sm:$0xff]
  %v81 = vld [vmem:[%s0 + $0x28] sm:$0xff]
  %v82 = vld [vmem:[%s0 + $0x30] sm:$0xff]
  %v83 = vld [vmem:[%s0 + $0x38] sm:$0xff]
  %v84 = vld [vmem:[%s1] sm:$0xff]
  %v85 = vld [vmem:[%s1 + $0x8] sm:$0xff]
  %v86 = vld [vmem:[%s4] sm:$0x1]
  %v87 = vlaneseq
  %v88 = vshrl.u32 %v87, 7
  %v89 = vsub.s32 0, %v88
  %v90 = vrot.slane %v86, %v89
  %vm91 = vcmask 130048
  %v93 = vsel %vm91, %v76, 0
  %v96 = vsel %vm91, %v77, 0
  %v99 = vsel %vm91, %v78, 0
  %v102 = vsel %vm91, %v79, 0
  %v105 = vsel %vm91, %v80, 0
  %v108 = vsel %vm91, %v81, 0
  %v111 = vsel %vm91, %v82, 0
  %v114 = vsel %vm91, %v83, 0
  %116 = vmatprep.subr.mxu0 0.0
  %117 = vmatpush1.msra.mxu0 %v84
  %118 = vmatprep.subr.mxu0 0.0
  %119 = vmatpush1.msra.mxu0 %v85
  %120 = vmatprep.subr.mxu0 0.0
  %121 = vmatpush1.msra.mxu0 0.0
  %122 = vmatprep.subr.mxu0 0.0
  %123 = vmatpush1.msra.mxu0 0.0
  %124 = vmatprep.subr.mxu0 0.0
  %125 = vmatpush1.msra.mxu0 0.0
  %126 = vmatprep.subr.mxu0 0.0
  %127 = vmatpush1.msra.mxu0 0.0
  %128 = vmatprep.subr.mxu0 0.0
  %129 = vmatpush1.msra.mxu0 0.0
  %130 = vmatprep.subr.mxu0 0.0
  %131 = vmatpush1.msra.mxu0 0.0
  %132 = vmatprep.subr.mxu0 0.0
  %133 = vmatpush1.msra.mxu0 0.0
  %134 = vmatprep.subr.mxu0 0.0
  %135 = vmatpush1.msra.mxu0 0.0
  %136 = vmatprep.subr.mxu0 0.0
  %137 = vmatpush1.msra.mxu0 0.0
  %138 = vmatprep.subr.mxu0 0.0
  %139 = vmatpush1.msra.mxu0 0.0
  %140 = vmatprep.subr.mxu0 0.0
  %141 = vmatpush1.msra.mxu0 0.0
  %142 = vmatprep.subr.mxu0 0.0
  %143 = vmatpush1.msra.mxu0 0.0
  %144 = vmatprep.subr.mxu0 0.0
  %145 = vmatpush1.msra.mxu0 0.0
  %146 = vmatprep.subr.mxu0 0.0
  %147 = vmatpush1.msra.mxu0 0.0
  %148 = vmatprep.subr.mxu0 0.0
  %149 = vmatpush1.msra.mxu0 0.0
  %150 = vmatprep.subr.mxu0 0.0
  %151 = vmatpush1.msra.mxu0 0.0
  %152 = vmatprep.subr.mxu0 0.0
  %153 = vmatpush1.msra.mxu0 0.0
  %154 = vmatprep.subr.mxu0 0.0
  %155 = vmatpush1.msra.mxu0 0.0
  %156 = vmatprep.subr.mxu0 0.0
  %157 = vmatpush1.msra.mxu0 0.0
  %158 = vmatprep.subr.mxu0 0.0
  %159 = vmatpush1.msra.mxu0 0.0
  %160 = vmatprep.subr.mxu0 0.0
  %161 = vmatpush1.msra.mxu0 0.0
  %162 = vmatprep.subr.mxu0 0.0
  %163 = vmatpush1.msra.mxu0 0.0
  %164 = vmatprep.subr.mxu0 0.0
  %165 = vmatpush1.msra.mxu0 0.0
  %166 = vmatprep.subr.mxu0 0.0
  %167 = vmatpush1.msra.mxu0 0.0
  %168 = vmatprep.subr.mxu0 0.0
  %169 = vmatpush1.msra.mxu0 0.0
  %170 = vmatprep.subr.mxu0 0.0
  %171 = vmatpush1.msra.mxu0 0.0
  %172 = vmatprep.subr.mxu0 0.0
  %173 = vmatpush1.msra.mxu0 0.0
  %174 = vmatprep.subr.mxu0 0.0
  %175 = vmatpush1.msra.mxu0 0.0
  %176 = vmatprep.subr.mxu0 0.0
  %177 = vmatpush1.msra.mxu0 0.0
  %178 = vmatprep.subr.mxu0 0.0
  %179 = vmatpush1.msra.mxu0 0.0
  %180 = vmatprep.mubr.f32.mxu0 0.0
  %181 = vmatmul.mubr.f32.gmra.mrb[0].mxu0 %v93
  %v182 = vpop.f32.mrb[0].mxu0
  %v183 = vadd.f32 %v90, %v182
  %v184 = vpop.f32.mrb[0].mxu0
  %185 = vmatprep.mubr.f32.mxu0 0.0
  %186 = vmatmul.mubr.f32.gmra.mrb[0].mxu0 %v96
  %v187 = vpop.f32.mrb[0].mxu0
  %v188 = vadd.f32 %v90, %v187
  %v189 = vpop.f32.mrb[0].mxu0
  %190 = vmatprep.mubr.f32.mxu0 0.0
  %191 = vmatmul.mubr.f32.gmra.mrb[0].mxu0 %v99
  %v192 = vpop.f32.mrb[0].mxu0
  %v193 = vadd.f32 %v90, %v192
  %v194 = vpop.f32.mrb[0].mxu0
  %195 = vmatprep.mubr.f32.mxu0 0.0
  %196 = vmatmul.mubr.f32.gmra.mrb[0].mxu0 %v102
  %v197 = vpop.f32.mrb[0].mxu0
  %v198 = vadd.f32 %v90, %v197
  %v199 = vpop.f32.mrb[0].mxu0
  %200 = vmatprep.mubr.f32.mxu0 0.0
  %201 = vmatmul.mubr.f32.gmra.mrb[0].mxu0 %v105
  %v202 = vpop.f32.mrb[0].mxu0
  %v203 = vadd.f32 %v90, %v202
  %v204 = vpop.f32.mrb[0].mxu0
  %205 = vmatprep.mubr.f32.mxu0 0.0
  %206 = vmatmul.mubr.f32.gmra.mrb[0].mxu0 %v108
  %v207 = vpop.f32.mrb[0].mxu0
  %v208 = vadd.f32 %v90, %v207
  %v209 = vpop.f32.mrb[0].mxu0
  %210 = vmatprep.mubr.f32.mxu0 0.0
  %211 = vmatmul.mubr.f32.gmra.mrb[0].mxu0 %v111
  %v212 = vpop.f32.mrb[0].mxu0
  %v213 = vadd.f32 %v90, %v212
  %v214 = vpop.f32.mrb[0].mxu0
  %215 = vmatprep.mubr.f32.mxu0 0.0
  %216 = vmatmul.mubr.f32.gmra.mrb[0].mxu0 %v114
  %v217 = vpop.f32.mrb[0].mxu0
  %v218 = vadd.f32 %v90, %v217
  %v219 = vpop.f32.mrb[0].mxu0
  %220 = vdwg.mxu0
  %v221 = vxor.u32 %v183, 2147483648
  %v222 = vmul.f32 %v221, 1.442695
  %v223 = vpow.pop %v222
  %v224 = vadd.f32 %v223, 1.0
  %v225 = vrcp.pop %v224
  %v226 = vmul.f32 1.0, %v225
  %v227 = vtanh.pop %v183
  %229 = vrot.lane.b32.xlu0 %v227, 64
  %v230 = vpop.permute.xlu0 %229
  %v232 = vmul.f32 %v226, %v230
  %v233 = vtanh.pop %v232
  %235 = vrot.lane.b32.xlu0 %v233, 96
  %v236 = vpop.permute.xlu0 %235
  %v238 = vmul.f32 %v226, %v236
  %240 = vrot.lane.b32.xlu0 %v238, 32
  %v241 = vpop.permute.xlu0 %240
  %vm242 = vcmask 261120
  %v243 = vsel %vm242, %v241, 0
  %245 = vmatprep.subr.mxu0 0.0
  %246 = vmatpush1.msra.mxu0 %v42
  %247 = vmatprep.subr.mxu0 0.0
  %248 = vmatpush1.msra.mxu0 %v43
  %249 = vmatprep.subr.mxu0 0.0
  %250 = vmatpush1.msra.mxu0 %v44
  %251 = vmatprep.subr.mxu0 0.0
  %252 = vmatpush1.msra.mxu0 %v45
  %253 = vmatprep.subr.mxu0 0.0
  %254 = vmatpush1.msra.mxu0 0.0
  %255 = vmatprep.subr.mxu0 0.0
  %256 = vmatpush1.msra.mxu0 0.0
  %257 = vmatprep.subr.mxu0 0.0
  %258 = vmatpush1.msra.mxu0 0.0
  %259 = vmatprep.subr.mxu0 0.0
  %260 = vmatpush1.msra.mxu0 0.0
  %261 = vmatprep.subr.mxu0 0.0
  %262 = vmatpush1.msra.mxu0 0.0
  %263 = vmatprep.subr.mxu0 0.0
  %264 = vmatpush1.msra.mxu0 0.0
  %265 = vmatprep.subr.mxu0 0.0
  %266 = vmatpush1.msra.mxu0 0.0
  %267 = vmatprep.subr.mxu0 0.0
  %268 = vmatpush1.msra.mxu0 0.0
  %269 = vmatprep.subr.mxu0 0.0
  %270 = vmatpush1.msra.mxu0 0.0
  %271 = vmatprep.subr.mxu0 0.0
  %272 = vmatpush1.msra.mxu0 0.0
  %273 = vmatprep.subr.mxu0 0.0
  %274 = vmatpush1.msra.mxu0 0.0
  %275 = vmatprep.subr.mxu0 0.0
  %276 = vmatpush1.msra.mxu0 0.0
  %277 = vmatprep.subr.mxu0 0.0
  %278 = vmatpush1.msra.mxu0 0.0
  %279 = vmatprep.subr.mxu0 0.0
  %280 = vmatpush1.msra.mxu0 0.0
  %281 = vmatprep.subr.mxu0 0.0
  %282 = vmatpush1.msra.mxu0 0.0
  %283 = vmatprep.subr.mxu0 0.0
  %284 = vmatpush1.msra.mxu0 0.0
  %285 = vmatprep.subr.mxu0 0.0
  %286 = vmatpush1.msra.mxu0 0.0
  %287 = vmatprep.subr.mxu0 0.0
  %288 = vmatpush1.msra.mxu0 0.0
  %289 = vmatprep.subr.mxu0 0.0
  %290 = vmatpush1.msra.mxu0 0.0
  %291 = vmatprep.subr.mxu0 0.0
  %292 = vmatpush1.msra.mxu0 0.0
  %293 = vmatprep.subr.mxu0 0.0
  %294 = vmatpush1.msra.mxu0 0.0
  %295 = vmatprep.subr.mxu0 0.0
  %296 = vmatpush1.msra.mxu0 0.0
  %297 = vmatprep.subr.mxu0 0.0
  %298 = vmatpush1.msra.mxu0 0.0
  %299 = vmatprep.subr.mxu0 0.0
  %300 = vmatpush1.msra.mxu0 0.0
  %301 = vmatprep.subr.mxu0 0.0
  %302 = vmatpush1.msra.mxu0 0.0
  %303 = vmatprep.subr.mxu0 0.0
  %304 = vmatpush1.msra.mxu0 0.0
  %305 = vmatprep.subr.mxu0 0.0
  %306 = vmatpush1.msra.mxu0 0.0
  %307 = vmatprep.subr.mxu0 0.0
  %308 = vmatpush1.msra.mxu0 0.0
  %309 = vmatprep.mubr.f32.mxu0 0.0
  %310 = vmatmul.mubr.f32.gmra.mrb[0].mxu0 %v243
  %v311 = vpop.f32.mrb[0].mxu0
  %v312 = vadd.f32 %v54, %v311
  %v313 = vpop.f32.mrb[0].mxu0
  %314 = vdwg.mxu0
  %v315 = vxor.u32 %v312, 2147483648
  %v316 = vmul.f32 %v315, 1.442695
  %v317 = vpow.pop %v316
  %v318 = vadd.f32 %v317, 1.0
  %v319 = vrcp.pop %v318
  %v320 = vmul.f32 1.0, %v319
  %v321 = vtanh.pop %v312
  %323 = vrot.lane.b32.xlu0 %v321, 64
  %v324 = vpop.permute.xlu0 %323
  %v326 = vmul.f32 %v320, %v324
  %v327 = vtanh.pop %v326
  %329 = vrot.lane.b32.xlu0 %v327, 96
  %v330 = vpop.permute.xlu0 %329
  %v332 = vmul.f32 %v320, %v330
  %333 = vmatprep.subr.mxu0 0.0
  %334 = vmatpush1.msra.mxu0 %v26
  %335 = vmatprep.subr.mxu0 0.0
  %336 = vmatpush1.msra.mxu0 %v27
  %337 = vmatprep.subr.mxu0 0.0
  %338 = vmatpush1.msra.mxu0 %v28
  %339 = vmatprep.subr.mxu0 0.0
  %340 = vmatpush1.msra.mxu0 %v29
  %341 = vmatprep.subr.mxu0 0.0
  %342 = vmatpush1.msra.mxu0 0.0
  %343 = vmatprep.subr.mxu0 0.0
  %344 = vmatpush1.msra.mxu0 0.0
  %345 = vmatprep.subr.mxu0 0.0
  %346 = vmatpush1.msra.mxu0 0.0
  %347 = vmatprep.subr.mxu0 0.0
  %348 = vmatpush1.msra.mxu0 0.0
  %349 = vmatprep.subr.mxu0 0.0
  %350 = vmatpush1.msra.mxu0 0.0
  %351 = vmatprep.subr.mxu0 0.0
  %352 = vmatpush1.msra.mxu0 0.0
  %353 = vmatprep.subr.mxu0 0.0
  %354 = vmatpush1.msra.mxu0 0.0
  %355 = vmatprep.subr.mxu0 0.0
  %356 = vmatpush1.msra.mxu0 0.0
  %357 = vmatprep.subr.mxu0 0.0
  %358 = vmatpush1.msra.mxu0 0.0
  %359 = vmatprep.subr.mxu0 0.0
  %360 = vmatpush1.msra.mxu0 0.0
  %361 = vmatprep.subr.mxu0 0.0
  %362 = vmatpush1.msra.mxu0 0.0
  %363 = vmatprep.subr.mxu0 0.0
  %364 = vmatpush1.msra.mxu0 0.0
  %365 = vmatprep.subr.mxu0 0.0
  %366 = vmatpush1.msra.mxu0 0.0
  %367 = vmatprep.subr.mxu0 0.0
  %368 = vmatpush1.msra.mxu0 0.0
  %369 = vmatprep.subr.mxu0 0.0
  %370 = vmatpush1.msra.mxu0 0.0
  %371 = vmatprep.subr.mxu0 0.0
  %372 = vmatpush1.msra.mxu0 0.0
  %373 = vmatprep.subr.mxu0 0.0
  %374 = vmatpush1.msra.mxu0 0.0
  %375 = vmatprep.subr.mxu0 0.0
  %376 = vmatpush1.msra.mxu0 0.0
  %377 = vmatprep.subr.mxu0 0.0
  %378 = vmatpush1.msra.mxu0 0.0
  %379 = vmatprep.subr.mxu0 0.0
  %380 = vmatpush1.msra.mxu0 0.0
  %381 = vmatprep.subr.mxu0 0.0
  %382 = vmatpush1.msra.mxu0 0.0
  %383 = vmatprep.subr.mxu0 0.0
  %384 = vmatpush1.msra.mxu0 0.0
  %385 = vmatprep.subr.mxu0 0.0
  %386 = vmatpush1.msra.mxu0 0.0
  %387 = vmatprep.subr.mxu0 0.0
  %388 = vmatpush1.msra.mxu0 0.0
  %389 = vmatprep.subr.mxu0 0.0
  %390 = vmatpush1.msra.mxu0 0.0
  %391 = vmatprep.subr.mxu0 0.0
  %392 = vmatpush1.msra.mxu0 0.0
  %393 = vmatprep.subr.mxu0 0.0
  %394 = vmatpush1.msra.mxu0 0.0
  %395 = vmatprep.subr.mxu0 0.0
  %396 = vmatpush1.msra.mxu0 0.0
  %397 = vmatprep.mubr.f32.mxu0 0.0
  %398 = vmatmul.mubr.f32.gmra.mrb[0].mxu0 %v243
  %v399 = vpop.f32.mrb[0].mxu0
  %v400 = vadd.f32 0.0, %v399
  %v401 = vpop.f32.mrb[0].mxu0
  %402 = vdwg.mxu0
  %v403 = vadd.f32 %v188, %v400
  %v404 = vxor.u32 %v403, 2147483648
  %v405 = vmul.f32 %v404, 1.442695
  %v406 = vpow.pop %v405
  %v407 = vadd.f32 %v406, 1.0
  %v408 = vrcp.pop %v407
  %v409 = vmul.f32 1.0, %v408
  %v410 = vtanh.pop %v403
  %412 = vrot.lane.b32.xlu0 %v232, 32
  %v413 = vpop.permute.xlu0 %412
  %v415 = vmul.f32 %v409, %v413
  %417 = vrot.lane.b32.xlu0 %v410, 64
  %v418 = vpop.permute.xlu0 %417
  %v420 = vmul.f32 %v409, %v418
  %422 = vrot.lane.b32.xlu0 %v420, 32
  %v423 = vpop.permute.xlu0 %422
  %v425 = vadd.f32 %v415, %v423
  %v426 = vtanh.pop %v425
  %428 = vrot.lane.b32.xlu0 %v426, 64
  %v429 = vpop.permute.xlu0 %428
  %v431 = vmul.f32 %v409, %v429
  %433 = vrot.lane.b32.xlu0 %v431, 32
  %v434 = vpop.permute.xlu0 %433
  %v435 = vsel %vm242, %v434, 0
  %437 = vmatprep.subr.mxu0 0.0
  %438 = vmatpush1.msra.mxu0 %v42
  %439 = vmatprep.subr.mxu0 0.0
  %440 = vmatpush1.msra.mxu0 %v43
  %441 = vmatprep.subr.mxu0 0.0
  %442 = vmatpush1.msra.mxu0 %v44
  %443 = vmatprep.subr.mxu0 0.0
  %444 = vmatpush1.msra.mxu0 %v45
  %445 = vmatprep.subr.mxu0 0.0
  %446 = vmatpush1.msra.mxu0 0.0
  %447 = vmatprep.subr.mxu0 0.0
  %448 = vmatpush1.msra.mxu0 0.0
  %449 = vmatprep.subr.mxu0 0.0
  %450 = vmatpush1.msra.mxu0 0.0
  %451 = vmatprep.subr.mxu0 0.0
  %452 = vmatpush1.msra.mxu0 0.0
  %453 = vmatprep.subr.mxu0 0.0
  %454 = vmatpush1.msra.mxu0 0.0
  %455 = vmatprep.subr.mxu0 0.0
  %456 = vmatpush1.msra.mxu0 0.0
  %457 = vmatprep.subr.mxu0 0.0
  %458 = vmatpush1.msra.mxu0 0.0
  %459 = vmatprep.subr.mxu0 0.0
  %460 = vmatpush1.msra.mxu0 0.0
  %461 = vmatprep.subr.mxu0 0.0
  %462 = vmatpush1.msra.mxu0 0.0
  %463 = vmatprep.subr.mxu0 0.0
  %464 = vmatpush1.msra.mxu0 0.0
  %465 = vmatprep.subr.mxu0 0.0
  %466 = vmatpush1.msra.mxu0 0.0
  %467 = vmatprep.subr.mxu0 0.0
  %468 = vmatpush1.msra.mxu0 0.0
  %469 = vmatprep.subr.mxu0 0.0
  %470 = vmatpush1.msra.mxu0 0.0
  %471 = vmatprep.subr.mxu0 0.0
  %472 = vmatpush1.msra.mxu0 0.0
  %473 = vmatprep.subr.mxu0 0.0
  %474 = vmatpush1.msra.mxu0 0.0
  %475 = vmatprep.subr.mxu0 0.0
  %476 = vmatpush1.msra.mxu0 0.0
  %477 = vmatprep.subr.mxu0 0.0
  %478 = vmatpush1.msra.mxu0 0.0
  %479 = vmatprep.subr.mxu0 0.0
  %480 = vmatpush1.msra.mxu0 0.0
  %481 = vmatprep.subr.mxu0 0.0
  %482 = vmatpush1.msra.mxu0 0.0
  %483 = vmatprep.subr.mxu0 0.0
  %484 = vmatpush1.msra.mxu0 0.0
  %485 = vmatprep.subr.mxu0 0.0
  %486 = vmatpush1.msra.mxu0 0.0
  %487 = vmatprep.subr.mxu0 0.0
  %488 = vmatpush1.msra.mxu0 0.0
  %489 = vmatprep.subr.mxu0 0.0
  %490 = vmatpush1.msra.mxu0 0.0
  %491 = vmatprep.subr.mxu0 0.0
  %492 = vmatpush1.msra.mxu0 0.0
  %493 = vmatprep.subr.mxu0 0.0
  %494 = vmatpush1.msra.mxu0 0.0
  %495 = vmatprep.subr.mxu0 0.0
  %496 = vmatpush1.msra.mxu0 0.0
  %497 = vmatprep.subr.mxu0 0.0
  %498 = vmatpush1.msra.mxu0 0.0
  %499 = vmatprep.subr.mxu0 0.0
  %500 = vmatpush1.msra.mxu0 0.0
  %501 = vmatprep.mubr.f32.mxu0 0.0
  %502 = vmatmul.mubr.f32.gmra.mrb[0].mxu0 %v435
  %v503 = vpop.f32.mrb[0].mxu0
  %v504 = vadd.f32 %v54, %v503
  %v505 = vpop.f32.mrb[0].mxu0
  %506 = vdwg.mxu0
  %508 = vrot.lane.b32.xlu0 %v332, 32
  %v509 = vpop.permute.xlu0 %508
  %v510 = vsel %vm242, %v509, 0
  %512 = vmatprep.subr.mxu0 0.0
  %513 = vmatpush1.msra.mxu0 %v30
  %514 = vmatprep.subr.mxu0 0.0
  %515 = vmatpush1.msra.mxu0 %v31
  %516 = vmatprep.subr.mxu0 0.0
  %517 = vmatpush1.msra.mxu0 %v32
  %518 = vmatprep.subr.mxu0 0.0
  %519 = vmatpush1.msra.mxu0 %v33
  %520 = vmatprep.subr.mxu0 0.0
  %521 = vmatpush1.msra.mxu0 0.0
  %522 = vmatprep.subr.mxu0 0.0
  %523 = vmatpush1.msra.mxu0 0.0
  %524 = vmatprep.subr.mxu0 0.0
  %525 = vmatpush1.msra.mxu0 0.0
  %526 = vmatprep.subr.mxu0 0.0
  %527 = vmatpush1.msra.mxu0 0.0
  %528 = vmatprep.subr.mxu0 0.0
  %529 = vmatpush1.msra.mxu0 0.0
  %530 = vmatprep.subr.mxu0 0.0
  %531 = vmatpush1.msra.mxu0 0.0
  %532 = vmatprep.subr.mxu0 0.0
  %533 = vmatpush1.msra.mxu0 0.0
  %534 = vmatprep.subr.mxu0 0.0
  %535 = vmatpush1.msra.mxu0 0.0
  %536 = vmatprep.subr.mxu0 0.0
  %537 = vmatpush1.msra.mxu0 0.0
  %538 = vmatprep.subr.mxu0 0.0
  %539 = vmatpush1.msra.mxu0 0.0
  %540 = vmatprep.subr.mxu0 0.0
  %541 = vmatpush1.msra.mxu0 0.0
  %542 = vmatprep.subr.mxu0 0.0
  %543 = vmatpush1.msra.mxu0 0.0
  %544 = vmatprep.subr.mxu0 0.0
  %545 = vmatpush1.msra.mxu0 0.0
  %546 = vmatprep.subr.mxu0 0.0
  %547 = vmatpush1.msra.mxu0 0.0
  %548 = vmatprep.subr.mxu0 0.0
  %549 = vmatpush1.msra.mxu0 0.0
  %550 = vmatprep.subr.mxu0 0.0
  %551 = vmatpush1.msra.mxu0 0.0
  %552 = vmatprep.subr.mxu0 0.0
  %553 = vmatpush1.msra.mxu0 0.0
  %554 = vmatprep.subr.mxu0 0.0
  %555 = vmatpush1.msra.mxu0 0.0
  %556 = vmatprep.subr.mxu0 0.0
  %557 = vmatpush1.msra.mxu0 0.0
  %558 = vmatprep.subr.mxu0 0.0
  %559 = vmatpush1.msra.mxu0 0.0
  %560 = vmatprep.subr.mxu0 0.0
  %561 = vmatpush1.msra.mxu0 0.0
  %562 = vmatprep.subr.mxu0 0.0
  %563 = vmatpush1.msra.mxu0 0.0
  %564 = vmatprep.subr.mxu0 0.0
  %565 = vmatpush1.msra.mxu0 0.0
  %566 = vmatprep.subr.mxu0 0.0
  %567 = vmatpush1.msra.mxu0 0.0
  %568 = vmatprep.subr.mxu0 0.0
  %569 = vmatpush1.msra.mxu0 0.0
  %570 = vmatprep.subr.mxu0 0.0
  %571 = vmatpush1.msra.mxu0 0.0
  %572 = vmatprep.subr.mxu0 0.0
  %573 = vmatpush1.msra.mxu0 0.0
  %574 = vmatprep.subr.mxu0 0.0
  %575 = vmatpush1.msra.mxu0 0.0
  %576 = vmatprep.mubr.f32.mxu0 0.0
  %577 = vmatmul.mubr.f32.gmra.mrb[0].mxu0 %v510
  %v578 = vpop.f32.mrb[0].mxu0
  %v579 = vadd.f32 0.0, %v578
  %v580 = vpop.f32.mrb[0].mxu0
  %581 = vdwg.mxu0
  %v582 = vadd.f32 %v504, %v579
  %v583 = vxor.u32 %v582, 2147483648
  %v584 = vmul.f32 %v583, 1.442695
  %v585 = vpow.pop %v584
  %v586 = vadd.f32 %v585, 1.0
  %v587 = vrcp.pop %v586
  %v588 = vmul.f32 1.0, %v587
  %v589 = vtanh.pop %v582
  %591 = vrot.lane.b32.xlu0 %v326, 32
  %v592 = vpop.permute.xlu0 %591
  %v594 = vmul.f32 %v588, %v592
  %596 = vrot.lane.b32.xlu0 %v589, 64
  %v597 = vpop.permute.xlu0 %596
  %v599 = vmul.f32 %v588, %v597
  %601 = vrot.lane.b32.xlu0 %v599, 32
  %v602 = vpop.permute.xlu0 %601
  %v604 = vadd.f32 %v594, %v602
  %v605 = vtanh.pop %v604
  %607 = vrot.lane.b32.xlu0 %v605, 64
  %v608 = vpop.permute.xlu0 %607
  %v610 = vmul.f32 %v588, %v608
  %611 = vmatprep.subr.mxu0 0.0
  %612 = vmatpush1.msra.mxu0 %v26
  %613 = vmatprep.subr.mxu0 0.0
  %614 = vmatpush1.msra.mxu0 %v27
  %615 = vmatprep.subr.mxu0 0.0
  %616 = vmatpush1.msra.mxu0 %v28
  %617 = vmatprep.subr.mxu0 0.0
  %618 = vmatpush1.msra.mxu0 %v29
  %619 = vmatprep.subr.mxu0 0.0
  %620 = vmatpush1.msra.mxu0 0.0
  %621 = vmatprep.subr.mxu0 0.0
  %622 = vmatpush1.msra.mxu0 0.0
  %623 = vmatprep.subr.mxu0 0.0
  %624 = vmatpush1.msra.mxu0 0.0
  %625 = vmatprep.subr.mxu0 0.0
  %626 = vmatpush1.msra.mxu0 0.0
  %627 = vmatprep.subr.mxu0 0.0
  %628 = vmatpush1.msra.mxu0 0.0
  %629 = vmatprep.subr.mxu0 0.0
  %630 = vmatpush1.msra.mxu0 0.0
  %631 = vmatprep.subr.mxu0 0.0
  %632 = vmatpush1.msra.mxu0 0.0
  %633 = vmatprep.subr.mxu0 0.0
  %634 = vmatpush1.msra.mxu0 0.0
  %635 = vmatprep.subr.mxu0 0.0
  %636 = vmatpush1.msra.mxu0 0.0
  %637 = vmatprep.subr.mxu0 0.0
  %638 = vmatpush1.msra.mxu0 0.0
  %639 = vmatprep.subr.mxu0 0.0
  %640 = vmatpush1.msra.mxu0 0.0
  %641 = vmatprep.subr.mxu0 0.0
  %642 = vmatpush1.msra.mxu0 0.0
  %643 = vmatprep.subr.mxu0 0.0
  %644 = vmatpush1.msra.mxu0 0.0
  %645 = vmatprep.subr.mxu0 0.0
  %646 = vmatpush1.msra.mxu0 0.0
  %647 = vmatprep.subr.mxu0 0.0
  %648 = vmatpush1.msra.mxu0 0.0
  %649 = vmatprep.subr.mxu0 0.0
  %650 = vmatpush1.msra.mxu0 0.0
  %651 = vmatprep.subr.mxu0 0.0
  %652 = vmatpush1.msra.mxu0 0.0
  %653 = vmatprep.subr.mxu0 0.0
  %654 = vmatpush1.msra.mxu0 0.0
  %655 = vmatprep.subr.mxu0 0.0
  %656 = vmatpush1.msra.mxu0 0.0
  %657 = vmatprep.subr.mxu0 0.0
  %658 = vmatpush1.msra.mxu0 0.0
  %659 = vmatprep.subr.mxu0 0.0
  %660 = vmatpush1.msra.mxu0 0.0
  %661 = vmatprep.subr.mxu0 0.0
  %662 = vmatpush1.msra.mxu0 0.0
  %663 = vmatprep.subr.mxu0 0.0
  %664 = vmatpush1.msra.mxu0 0.0
  %665 = vmatprep.subr.mxu0 0.0
  %666 = vmatpush1.msra.mxu0 0.0
  %667 = vmatprep.subr.mxu0 0.0
  %668 = vmatpush1.msra.mxu0 0.0
  %669 = vmatprep.subr.mxu0 0.0
  %670 = vmatpush1.msra.mxu0 0.0
  %671 = vmatprep.subr.mxu0 0.0
  %672 = vmatpush1.msra.mxu0 0.0
  %673 = vmatprep.subr.mxu0 0.0
  %674 = vmatpush1.msra.mxu0 0.0
  %675 = vmatprep.mubr.f32.mxu0 0.0
  %676 = vmatmul.mubr.f32.gmra.mrb[0].mxu0 %v435
  %v677 = vpop.f32.mrb[0].mxu0
  %v678 = vadd.f32 0.0, %v677
  %v679 = vpop.f32.mrb[0].mxu0
  %680 = vdwg.mxu0
  %v681 = vadd.f32 %v193, %v678
  %v682 = vxor.u32 %v681, 2147483648
  %v683 = vmul.f32 %v682, 1.442695
  %v684 = vpow.pop %v683
  %v685 = vadd.f32 %v684, 1.0
  %v686 = vrcp.pop %v685
  %v687 = vmul.f32 1.0, %v686
  %v688 = vtanh.pop %v681
  %v689 = vmul.f32 %v687, %v425
  %691 = vrot.lane.b32.xlu0 %v688, 64
  %v692 = vpop.permute.xlu0 %691
  %v694 = vmul.f32 %v687, %v692
  %696 = vrot.lane.b32.xlu0 %v694, 32
  %v697 = vpop.permute.xlu0 %696
  %v699 = vadd.f32 %v689, %v697
  %v700 = vtanh.pop %v699
  %702 = vrot.lane.b32.xlu0 %v700, 64
  %v703 = vpop.permute.xlu0 %702
  %v705 = vmul.f32 %v687, %v703
  %707 = vrot.lane.b32.xlu0 %v705, 32
  %v708 = vpop.permute.xlu0 %707
  %v709 = vsel %vm242, %v708, 0
  %711 = vmatprep.subr.mxu0 0.0
  %712 = vmatpush1.msra.mxu0 %v42
  %713 = vmatprep.subr.mxu0 0.0
  %714 = vmatpush1.msra.mxu0 %v43
  %715 = vmatprep.subr.mxu0 0.0
  %716 = vmatpush1.msra.mxu0 %v44
  %717 = vmatprep.subr.mxu0 0.0
  %718 = vmatpush1.msra.mxu0 %v45
  %719 = vmatprep.subr.mxu0 0.0
  %720 = vmatpush1.msra.mxu0 0.0
  %721 = vmatprep.subr.mxu0 0.0
  %722 = vmatpush1.msra.mxu0 0.0
  %723 = vmatprep.subr.mxu0 0.0
  %724 = vmatpush1.msra.mxu0 0.0
  %725 = vmatprep.subr.mxu0 0.0
  %726 = vmatpush1.msra.mxu0 0.0
  %727 = vmatprep.subr.mxu0 0.0
  %728 = vmatpush1.msra.mxu0 0.0
  %729 = vmatprep.subr.mxu0 0.0
  %730 = vmatpush1.msra.mxu0 0.0
  %731 = vmatprep.subr.mxu0 0.0
  %732 = vmatpush1.msra.mxu0 0.0
  %733 = vmatprep.subr.mxu0 0.0
  %734 = vmatpush1.msra.mxu0 0.0
  %735 = vmatprep.subr.mxu0 0.0
  %736 = vmatpush1.msra.mxu0 0.0
  %737 = vmatprep.subr.mxu0 0.0
  %738 = vmatpush1.msra.mxu0 0.0
  %739 = vmatprep.subr.mxu0 0.0
  %740 = vmatpush1.msra.mxu0 0.0
  %741 = vmatprep.subr.mxu0 0.0
  %742 = vmatpush1.msra.mxu0 0.0
  %743 = vmatprep.subr.mxu0 0.0
  %744 = vmatpush1.msra.mxu0 0.0
  %745 = vmatprep.subr.mxu0 0.0
  %746 = vmatpush1.msra.mxu0 0.0
  %747 = vmatprep.subr.mxu0 0.0
  %748 = vmatpush1.msra.mxu0 0.0
  %749 = vmatprep.subr.mxu0 0.0
  %750 = vmatpush1.msra.mxu0 0.0
  %751 = vmatprep.subr.mxu0 0.0
  %752 = vmatpush1.msra.mxu0 0.0
  %753 = vmatprep.subr.mxu0 0.0
  %754 = vmatpush1.msra.mxu0 0.0
  %755 = vmatprep.subr.mxu0 0.0
  %756 = vmatpush1.msra.mxu0 0.0
  %757 = vmatprep.subr.mxu0 0.0
  %758 = vmatpush1.msra.mxu0 0.0
  %759 = vmatprep.subr.mxu0 0.0
  %760 = vmatpush1.msra.mxu0 0.0
  %761 = vmatprep.subr.mxu0 0.0
  %762 = vmatpush1.msra.mxu0 0.0
  %763 = vmatprep.subr.mxu0 0.0
  %764 = vmatpush1.msra.mxu0 0.0
  %765 = vmatprep.subr.mxu0 0.0
  %766 = vmatpush1.msra.mxu0 0.0
  %767 = vmatprep.subr.mxu0 0.0
  %768 = vmatpush1.msra.mxu0 0.0
  %769 = vmatprep.subr.mxu0 0.0
  %770 = vmatpush1.msra.mxu0 0.0
  %771 = vmatprep.subr.mxu0 0.0
  %772 = vmatpush1.msra.mxu0 0.0
  %773 = vmatprep.subr.mxu0 0.0
  %774 = vmatpush1.msra.mxu0 0.0
  %775 = vmatprep.mubr.f32.mxu0 0.0
  %776 = vmatmul.mubr.f32.gmra.mrb[0].mxu0 %v709
  %v777 = vpop.f32.mrb[0].mxu0
  %v778 = vadd.f32 %v54, %v777
  %v779 = vpop.f32.mrb[0].mxu0
  %780 = vdwg.mxu0
  %782 = vrot.lane.b32.xlu0 %v610, 32
  %v783 = vpop.permute.xlu0 %782
  %v784 = vsel %vm242, %v783, 0
  %786 = vmatprep.subr.mxu0 0.0
  %787 = vmatpush1.msra.mxu0 %v30
  %788 = vmatprep.subr.mxu0 0.0
  %789 = vmatpush1.msra.mxu0 %v31
  %790 = vmatprep.subr.mxu0 0.0
  %791 = vmatpush1.msra.mxu0 %v32
  %792 = vmatprep.subr.mxu0 0.0
  %793 = vmatpush1.msra.mxu0 %v33
  %794 = vmatprep.subr.mxu0 0.0
  %795 = vmatpush1.msra.mxu0 0.0
  %796 = vmatprep.subr.mxu0 0.0
  %797 = vmatpush1.msra.mxu0 0.0
  %798 = vmatprep.subr.mxu0 0.0
  %799 = vmatpush1.msra.mxu0 0.0
  %800 = vmatprep.subr.mxu0 0.0
  %801 = vmatpush1.msra.mxu0 0.0
  %802 = vmatprep.subr.mxu0 0.0
  %803 = vmatpush1.msra.mxu0 0.0
  %804 = vmatprep.subr.mxu0 0.0
  %805 = vmatpush1.msra.mxu0 0.0
  %806 = vmatprep.subr.mxu0 0.0
  %807 = vmatpush1.msra.mxu0 0.0
  %808 = vmatprep.subr.mxu0 0.0
  %809 = vmatpush1.msra.mxu0 0.0
  %810 = vmatprep.subr.mxu0 0.0
  %811 = vmatpush1.msra.mxu0 0.0
  %812 = vmatprep.subr.mxu0 0.0
  %813 = vmatpush1.msra.mxu0 0.0
  %814 = vmatprep.subr.mxu0 0.0
  %815 = vmatpush1.msra.mxu0 0.0
  %816 = vmatprep.subr.mxu0 0.0
  %817 = vmatpush1.msra.mxu0 0.0
  %818 = vmatprep.subr.mxu0 0.0
  %819 = vmatpush1.msra.mxu0 0.0
  %820 = vmatprep.subr.mxu0 0.0
  %821 = vmatpush1.msra.mxu0 0.0
  %822 = vmatprep.subr.mxu0 0.0
  %823 = vmatpush1.msra.mxu0 0.0
  %824 = vmatprep.subr.mxu0 0.0
  %825 = vmatpush1.msra.mxu0 0.0
  %826 = vmatprep.subr.mxu0 0.0
  %827 = vmatpush1.msra.mxu0 0.0
  %828 = vmatprep.subr.mxu0 0.0
  %829 = vmatpush1.msra.mxu0 0.0
  %830 = vmatprep.subr.mxu0 0.0
  %831 = vmatpush1.msra.mxu0 0.0
  %832 = vmatprep.subr.mxu0 0.0
  %833 = vmatpush1.msra.mxu0 0.0
  %834 = vmatprep.subr.mxu0 0.0
  %835 = vmatpush1.msra.mxu0 0.0
  %836 = vmatprep.subr.mxu0 0.0
  %837 = vmatpush1.msra.mxu0 0.0
  %838 = vmatprep.subr.mxu0 0.0
  %839 = vmatpush1.msra.mxu0 0.0
  %840 = vmatprep.subr.mxu0 0.0
  %841 = vmatpush1.msra.mxu0 0.0
  %842 = vmatprep.subr.mxu0 0.0
  %843 = vmatpush1.msra.mxu0 0.0
  %844 = vmatprep.subr.mxu0 0.0
  %845 = vmatpush1.msra.mxu0 0.0
  %846 = vmatprep.subr.mxu0 0.0
  %847 = vmatpush1.msra.mxu0 0.0
  %848 = vmatprep.subr.mxu0 0.0
  %849 = vmatpush1.msra.mxu0 0.0
  %850 = vmatprep.mubr.f32.mxu0 0.0
  %851 = vmatmul.mubr.f32.gmra.mrb[0].mxu0 %v784
  %v852 = vpop.f32.mrb[0].mxu0
  %v853 = vadd.f32 0.0, %v852
  %v854 = vpop.f32.mrb[0].mxu0
  %855 = vdwg.mxu0
  %v856 = vadd.f32 %v778, %v853
  %v857 = vxor.u32 %v856, 2147483648
  %v858 = vmul.f32 %v857, 1.442695
  %v859 = vpow.pop %v858
  %v860 = vadd.f32 %v859, 1.0
  %v861 = vrcp.pop %v860
  %v862 = vmul.f32 1.0, %v861
  %v863 = vtanh.pop %v856
  %v864 = vmul.f32 %v862, %v604
  %866 = vrot.lane.b32.xlu0 %v863, 64
  %v867 = vpop.permute.xlu0 %866
  %v869 = vmul.f32 %v862, %v867
  %871 = vrot.lane.b32.xlu0 %v869, 32
  %v872 = vpop.permute.xlu0 %871
  %v874 = vadd.f32 %v864, %v872
  %v875 = vtanh.pop %v874
  %877 = vrot.lane.b32.xlu0 %v875, 64
  %v878 = vpop.permute.xlu0 %877
  %v880 = vmul.f32 %v862, %v878
  %881 = vmatprep.subr.mxu0 0.0
  %882 = vmatpush1.msra.mxu0 %v26
  %883 = vmatprep.subr.mxu0 0.0
  %884 = vmatpush1.msra.mxu0 %v27
  %885 = vmatprep.subr.mxu0 0.0
  %886 = vmatpush1.msra.mxu0 %v28
  %887 = vmatprep.subr.mxu0 0.0
  %888 = vmatpush1.msra.mxu0 %v29
  %889 = vmatprep.subr.mxu0 0.0
  %890 = vmatpush1.msra.mxu0 0.0
  %891 = vmatprep.subr.mxu0 0.0
  %892 = vmatpush1.msra.mxu0 0.0
  %893 = vmatprep.subr.mxu0 0.0
  %894 = vmatpush1.msra.mxu0 0.0
  %895 = vmatprep.subr.mxu0 0.0
  %896 = vmatpush1.msra.mxu0 0.0
  %897 = vmatprep.subr.mxu0 0.0
  %898 = vmatpush1.msra.mxu0 0.0
  %899 = vmatprep.subr.mxu0 0.0
  %900 = vmatpush1.msra.mxu0 0.0
  %901 = vmatprep.subr.mxu0 0.0
  %902 = vmatpush1.msra.mxu0 0.0
  %903 = vmatprep.subr.mxu0 0.0
  %904 = vmatpush1.msra.mxu0 0.0
  %905 = vmatprep.subr.mxu0 0.0
  %906 = vmatpush1.msra.mxu0 0.0
  %907 = vmatprep.subr.mxu0 0.0
  %908 = vmatpush1.msra.mxu0 0.0
  %909 = vmatprep.subr.mxu0 0.0
  %910 = vmatpush1.msra.mxu0 0.0
  %911 = vmatprep.subr.mxu0 0.0
  %912 = vmatpush1.msra.mxu0 0.0
  %913 = vmatprep.subr.mxu0 0.0
  %914 = vmatpush1.msra.mxu0 0.0
  %915 = vmatprep.subr.mxu0 0.0
  %916 = vmatpush1.msra.mxu0 0.0
  %917 = vmatprep.subr.mxu0 0.0
  %918 = vmatpush1.msra.mxu0 0.0
  %919 = vmatprep.subr.mxu0 0.0
  %920 = vmatpush1.msra.mxu0 0.0
  %921 = vmatprep.subr.mxu0 0.0
  %922 = vmatpush1.msra.mxu0 0.0
  %923 = vmatprep.subr.mxu0 0.0
  %924 = vmatpush1.msra.mxu0 0.0
  %925 = vmatprep.subr.mxu0 0.0
  %926 = vmatpush1.msra.mxu0 0.0
  %927 = vmatprep.subr.mxu0 0.0
  %928 = vmatpush1.msra.mxu0 0.0
  %929 = vmatprep.subr.mxu0 0.0
  %930 = vmatpush1.msra.mxu0 0.0
  %931 = vmatprep.subr.mxu0 0.0
  %932 = vmatpush1.msra.mxu0 0.0
  %933 = vmatprep.subr.mxu0 0.0
  %934 = vmatpush1.msra.mxu0 0.0
  %935 = vmatprep.subr.mxu0 0.0
  %936 = vmatpush1.msra.mxu0 0.0
  %937 = vmatprep.subr.mxu0 0.0
  %938 = vmatpush1.msra.mxu0 0.0
  %939 = vmatprep.subr.mxu0 0.0
  %940 = vmatpush1.msra.mxu0 0.0
  %941 = vmatprep.subr.mxu0 0.0
  %942 = vmatpush1.msra.mxu0 0.0
  %943 = vmatprep.subr.mxu0 0.0
  %944 = vmatpush1.msra.mxu0 0.0
  %945 = vmatprep.mubr.f32.mxu0 0.0
  %946 = vmatmul.mubr.f32.gmra.mrb[0].mxu0 %v709
  %v947 = vpop.f32.mrb[0].mxu0
  %v948 = vadd.f32 0.0, %v947
  %v949 = vpop.f32.mrb[0].mxu0
  %950 = vdwg.mxu0
  %v951 = vadd.f32 %v198, %v948
  %v952 = vxor.u32 %v951, 2147483648
  %v953 = vmul.f32 %v952, 1.442695
  %v954 = vpow.pop %v953
  %v955 = vadd.f32 %v954, 1.0
  %v956 = vrcp.pop %v955
  %v957 = vmul.f32 1.0, %v956
  %v958 = vtanh.pop %v951
  %v959 = vmul.f32 %v957, %v699
  %961 = vrot.lane.b32.xlu0 %v958, 64
  %v962 = vpop.permute.xlu0 %961
  %v964 = vmul.f32 %v957, %v962
  %966 = vrot.lane.b32.xlu0 %v964, 32
  %v967 = vpop.permute.xlu0 %966
  %v969 = vadd.f32 %v959, %v967
  %v970 = vtanh.pop %v969
  %972 = vrot.lane.b32.xlu0 %v970, 64
  %v973 = vpop.permute.xlu0 %972
  %v975 = vmul.f32 %v957, %v973
  %977 = vrot.lane.b32.xlu0 %v975, 32
  %v978 = vpop.permute.xlu0 %977
  %v979 = vsel %vm242, %v978, 0
  %981 = vmatprep.subr.mxu0 0.0
  %982 = vmatpush1.msra.mxu0 %v42
  %983 = vmatprep.subr.mxu0 0.0
  %984 = vmatpush1.msra.mxu0 %v43
  %985 = vmatprep.subr.mxu0 0.0
  %986 = vmatpush1.msra.mxu0 %v44
  %987 = vmatprep.subr.mxu0 0.0
  %988 = vmatpush1.msra.mxu0 %v45
  %989 = vmatprep.subr.mxu0 0.0
  %990 = vmatpush1.msra.mxu0 0.0
  %991 = vmatprep.subr.mxu0 0.0
  %992 = vmatpush1.msra.mxu0 0.0
  %993 = vmatprep.subr.mxu0 0.0
  %994 = vmatpush1.msra.mxu0 0.0
  %995 = vmatprep.subr.mxu0 0.0
  %996 = vmatpush1.msra.mxu0 0.0
  %997 = vmatprep.subr.mxu0 0.0
  %998 = vmatpush1.msra.mxu0 0.0
  %999 = vmatprep.subr.mxu0 0.0
  %1000 = vmatpush1.msra.mxu0 0.0
  %1001 = vmatprep.subr.mxu0 0.0
  %1002 = vmatpush1.msra.mxu0 0.0
  %1003 = vmatprep.subr.mxu0 0.0
  %1004 = vmatpush1.msra.mxu0 0.0
  %1005 = vmatprep.subr.mxu0 0.0
  %1006 = vmatpush1.msra.mxu0 0.0
  %1007 = vmatprep.subr.mxu0 0.0
  %1008 = vmatpush1.msra.mxu0 0.0
  %1009 = vmatprep.subr.mxu0 0.0
  %1010 = vmatpush1.msra.mxu0 0.0
  %1011 = vmatprep.subr.mxu0 0.0
  %1012 = vmatpush1.msra.mxu0 0.0
  %1013 = vmatprep.subr.mxu0 0.0
  %1014 = vmatpush1.msra.mxu0 0.0
  %1015 = vmatprep.subr.mxu0 0.0
  %1016 = vmatpush1.msra.mxu0 0.0
  %1017 = vmatprep.subr.mxu0 0.0
  %1018 = vmatpush1.msra.mxu0 0.0
  %1019 = vmatprep.subr.mxu0 0.0
  %1020 = vmatpush1.msra.mxu0 0.0
  %1021 = vmatprep.subr.mxu0 0.0
  %1022 = vmatpush1.msra.mxu0 0.0
  %1023 = vmatprep.subr.mxu0 0.0
  %1024 = vmatpush1.msra.mxu0 0.0
  %1025 = vmatprep.subr.mxu0 0.0
  %1026 = vmatpush1.msra.mxu0 0.0
  %1027 = vmatprep.subr.mxu0 0.0
  %1028 = vmatpush1.msra.mxu0 0.0
  %1029 = vmatprep.subr.mxu0 0.0
  %1030 = vmatpush1.msra.mxu0 0.0
  %1031 = vmatprep.subr.mxu0 0.0
  %1032 = vmatpush1.msra.mxu0 0.0
  %1033 = vmatprep.subr.mxu0 0.0
  %1034 = vmatpush1.msra.mxu0 0.0
  %1035 = vmatprep.subr.mxu0 0.0
  %1036 = vmatpush1.msra.mxu0 0.0
  %1037 = vmatprep.subr.mxu0 0.0
  %1038 = vmatpush1.msra.mxu0 0.0
  %1039 = vmatprep.subr.mxu0 0.0
  %1040 = vmatpush1.msra.mxu0 0.0
  %1041 = vmatprep.subr.mxu0 0.0
  %1042 = vmatpush1.msra.mxu0 0.0
  %1043 = vmatprep.subr.mxu0 0.0
  %1044 = vmatpush1.msra.mxu0 0.0
  %1045 = vmatprep.mubr.f32.mxu0 0.0
  %1046 = vmatmul.mubr.f32.gmra.mrb[0].mxu0 %v979
  %v1047 = vpop.f32.mrb[0].mxu0
  %v1048 = vadd.f32 %v54, %v1047
  %v1049 = vpop.f32.mrb[0].mxu0
  %1050 = vdwg.mxu0
  %1052 = vrot.lane.b32.xlu0 %v880, 32
  %v1053 = vpop.permute.xlu0 %1052
  %v1054 = vsel %vm242, %v1053, 0
  %1056 = vmatprep.subr.mxu0 0.0
  %1057 = vmatpush1.msra.mxu0 %v30
  %1058 = vmatprep.subr.mxu0 0.0
  %1059 = vmatpush1.msra.mxu0 %v31
  %1060 = vmatprep.subr.mxu0 0.0
  %1061 = vmatpush1.msra.mxu0 %v32
  %1062 = vmatprep.subr.mxu0 0.0
  %1063 = vmatpush1.msra.mxu0 %v33
  %1064 = vmatprep.subr.mxu0 0.0
  %1065 = vmatpush1.msra.mxu0 0.0
  %1066 = vmatprep.subr.mxu0 0.0
  %1067 = vmatpush1.msra.mxu0 0.0
  %1068 = vmatprep.subr.mxu0 0.0
  %1069 = vmatpush1.msra.mxu0 0.0
  %1070 = vmatprep.subr.mxu0 0.0
  %1071 = vmatpush1.msra.mxu0 0.0
  %1072 = vmatprep.subr.mxu0 0.0
  %1073 = vmatpush1.msra.mxu0 0.0
  %1074 = vmatprep.subr.mxu0 0.0
  %1075 = vmatpush1.msra.mxu0 0.0
  %1076 = vmatprep.subr.mxu0 0.0
  %1077 = vmatpush1.msra.mxu0 0.0
  %1078 = vmatprep.subr.mxu0 0.0
  %1079 = vmatpush1.msra.mxu0 0.0
  %1080 = vmatprep.subr.mxu0 0.0
  %1081 = vmatpush1.msra.mxu0 0.0
  %1082 = vmatprep.subr.mxu0 0.0
  %1083 = vmatpush1.msra.mxu0 0.0
  %1084 = vmatprep.subr.mxu0 0.0
  %1085 = vmatpush1.msra.mxu0 0.0
  %1086 = vmatprep.subr.mxu0 0.0
  %1087 = vmatpush1.msra.mxu0 0.0
  %1088 = vmatprep.subr.mxu0 0.0
  %1089 = vmatpush1.msra.mxu0 0.0
  %1090 = vmatprep.subr.mxu0 0.0
  %1091 = vmatpush1.msra.mxu0 0.0
  %1092 = vmatprep.subr.mxu0 0.0
  %1093 = vmatpush1.msra.mxu0 0.0
  %1094 = vmatprep.subr.mxu0 0.0
  %1095 = vmatpush1.msra.mxu0 0.0
  %1096 = vmatprep.subr.mxu0 0.0
  %1097 = vmatpush1.msra.mxu0 0.0
  %1098 = vmatprep.subr.mxu0 0.0
  %1099 = vmatpush1.msra.mxu0 0.0
  %1100 = vmatprep.subr.mxu0 0.0
  %1101 = vmatpush1.msra.mxu0 0.0
  %1102 = vmatprep.subr.mxu0 0.0
  %1103 = vmatpush1.msra.mxu0 0.0
  %1104 = vmatprep.subr.mxu0 0.0
  %1105 = vmatpush1.msra.mxu0 0.0
  %1106 = vmatprep.subr.mxu0 0.0
  %1107 = vmatpush1.msra.mxu0 0.0
  %1108 = vmatprep.subr.mxu0 0.0
  %1109 = vmatpush1.msra.mxu0 0.0
  %1110 = vmatprep.subr.mxu0 0.0
  %1111 = vmatpush1.msra.mxu0 0.0
  %1112 = vmatprep.subr.mxu0 0.0
  %1113 = vmatpush1.msra.mxu0 0.0
  %1114 = vmatprep.subr.mxu0 0.0
  %1115 = vmatpush1.msra.mxu0 0.0
  %1116 = vmatprep.subr.mxu0 0.0
  %1117 = vmatpush1.msra.mxu0 0.0
  %1118 = vmatprep.subr.mxu0 0.0
  %1119 = vmatpush1.msra.mxu0 0.0
  %1120 = vmatprep.mubr.f32.mxu0 0.0
  %1121 = vmatmul.mubr.f32.gmra.mrb[0].mxu0 %v1054
  %v1122 = vpop.f32.mrb[0].mxu0
  %v1123 = vadd.f32 0.0, %v1122
  %v1124 = vpop.f32.mrb[0].mxu0
  %1125 = vdwg.mxu0
  %v1126 = vadd.f32 %v1048, %v1123
  %v1127 = vxor.u32 %v1126, 2147483648
  %v1128 = vmul.f32 %v1127, 1.442695
  %v1129 = vpow.pop %v1128
  %v1130 = vadd.f32 %v1129, 1.0
  %v1131 = vrcp.pop %v1130
  %v1132 = vmul.f32 1.0, %v1131
  %v1133 = vtanh.pop %v1126
  %v1134 = vmul.f32 %v1132, %v874
  %1136 = vrot.lane.b32.xlu0 %v1133, 64
  %v1137 = vpop.permute.xlu0 %1136
  %v1139 = vmul.f32 %v1132, %v1137
  %1141 = vrot.lane.b32.xlu0 %v1139, 32
  %v1142 = vpop.permute.xlu0 %1141
  %v1144 = vadd.f32 %v1134, %v1142
  %v1145 = vtanh.pop %v1144
  %1147 = vrot.lane.b32.xlu0 %v1145, 64
  %v1148 = vpop.permute.xlu0 %1147
  %v1150 = vmul.f32 %v1132, %v1148
  %1151 = vmatprep.subr.mxu0 0.0
  %1152 = vmatpush1.msra.mxu0 %v26
  %1153 = vmatprep.subr.mxu0 0.0
  %1154 = vmatpush1.msra.mxu0 %v27
  %1155 = vmatprep.subr.mxu0 0.0
  %1156 = vmatpush1.msra.mxu0 %v28
  %1157 = vmatprep.subr.mxu0 0.0
  %1158 = vmatpush1.msra.mxu0 %v29
  %1159 = vmatprep.subr.mxu0 0.0
  %1160 = vmatpush1.msra.mxu0 0.0
  %1161 = vmatprep.subr.mxu0 0.0
  %1162 = vmatpush1.msra.mxu0 0.0
  %1163 = vmatprep.subr.mxu0 0.0
  %1164 = vmatpush1.msra.mxu0 0.0
  %1165 = vmatprep.subr.mxu0 0.0
  %1166 = vmatpush1.msra.mxu0 0.0
  %1167 = vmatprep.subr.mxu0 0.0
  %1168 = vmatpush1.msra.mxu0 0.0
  %1169 = vmatprep.subr.mxu0 0.0
  %1170 = vmatpush1.msra.mxu0 0.0
  %1171 = vmatprep.subr.mxu0 0.0
  %1172 = vmatpush1.msra.mxu0 0.0
  %1173 = vmatprep.subr.mxu0 0.0
  %1174 = vmatpush1.msra.mxu0 0.0
  %1175 = vmatprep.subr.mxu0 0.0
  %1176 = vmatpush1.msra.mxu0 0.0
  %1177 = vmatprep.subr.mxu0 0.0
  %1178 = vmatpush1.msra.mxu0 0.0
  %1179 = vmatprep.subr.mxu0 0.0
  %1180 = vmatpush1.msra.mxu0 0.0
  %1181 = vmatprep.subr.mxu0 0.0
  %1182 = vmatpush1.msra.mxu0 0.0
  %1183 = vmatprep.subr.mxu0 0.0
  %1184 = vmatpush1.msra.mxu0 0.0
  %1185 = vmatprep.subr.mxu0 0.0
  %1186 = vmatpush1.msra.mxu0 0.0
  %1187 = vmatprep.subr.mxu0 0.0
  %1188 = vmatpush1.msra.mxu0 0.0
  %1189 = vmatprep.subr.mxu0 0.0
  %1190 = vmatpush1.msra.mxu0 0.0
  %1191 = vmatprep.subr.mxu0 0.0
  %1192 = vmatpush1.msra.mxu0 0.0
  %1193 = vmatprep.subr.mxu0 0.0
  %1194 = vmatpush1.msra.mxu0 0.0
  %1195 = vmatprep.subr.mxu0 0.0
  %1196 = vmatpush1.msra.mxu0 0.0
  %1197 = vmatprep.subr.mxu0 0.0
  %1198 = vmatpush1.msra.mxu0 0.0
  %1199 = vmatprep.subr.mxu0 0.0
  %1200 = vmatpush1.msra.mxu0 0.0
  %1201 = vmatprep.subr.mxu0 0.0
  %1202 = vmatpush1.msra.mxu0 0.0
  %1203 = vmatprep.subr.mxu0 0.0
  %1204 = vmatpush1.msra.mxu0 0.0
  %1205 = vmatprep.subr.mxu0 0.0
  %1206 = vmatpush1.msra.mxu0 0.0
  %1207 = vmatprep.subr.mxu0 0.0
  %1208 = vmatpush1.msra.mxu0 0.0
  %1209 = vmatprep.subr.mxu0 0.0
  %1210 = vmatpush1.msra.mxu0 0.0
  %1211 = vmatprep.subr.mxu0 0.0
  %1212 = vmatpush1.msra.mxu0 0.0
  %1213 = vmatprep.subr.mxu0 0.0
  %1214 = vmatpush1.msra.mxu0 0.0
  %1215 = vmatprep.mubr.f32.mxu0 0.0
  %1216 = vmatmul.mubr.f32.gmra.mrb[0].mxu0 %v979
  %v1217 = vpop.f32.mrb[0].mxu0
  %v1218 = vadd.f32 0.0, %v1217
  %v1219 = vpop.f32.mrb[0].mxu0
  %1220 = vdwg.mxu0
  %v1221 = vadd.f32 %v203, %v1218
  %v1222 = vxor.u32 %v1221, 2147483648
  %v1223 = vmul.f32 %v1222, 1.442695
  %v1224 = vpow.pop %v1223
  %v1225 = vadd.f32 %v1224, 1.0
  %v1226 = vrcp.pop %v1225
  %v1227 = vmul.f32 1.0, %v1226
  %v1228 = vtanh.pop %v1221
  %v1229 = vmul.f32 %v1227, %v969
  %1231 = vrot.lane.b32.xlu0 %v1228, 64
  %v1232 = vpop.permute.xlu0 %1231
  %v1234 = vmul.f32 %v1227, %v1232
  %1236 = vrot.lane.b32.xlu0 %v1234, 32
  %v1237 = vpop.permute.xlu0 %1236
  %v1239 = vadd.f32 %v1229, %v1237
  %v1240 = vtanh.pop %v1239
  %1242 = vrot.lane.b32.xlu0 %v1240, 64
  %v1243 = vpop.permute.xlu0 %1242
  %v1245 = vmul.f32 %v1227, %v1243
  %1247 = vrot.lane.b32.xlu0 %v1245, 32
  %v1248 = vpop.permute.xlu0 %1247
  %v1249 = vsel %vm242, %v1248, 0
  %1251 = vmatprep.subr.mxu0 0.0
  %1252 = vmatpush1.msra.mxu0 %v42
  %1253 = vmatprep.subr.mxu0 0.0
  %1254 = vmatpush1.msra.mxu0 %v43
  %1255 = vmatprep.subr.mxu0 0.0
  %1256 = vmatpush1.msra.mxu0 %v44
  %1257 = vmatprep.subr.mxu0 0.0
  %1258 = vmatpush1.msra.mxu0 %v45
  %1259 = vmatprep.subr.mxu0 0.0
  %1260 = vmatpush1.msra.mxu0 0.0
  %1261 = vmatprep.subr.mxu0 0.0
  %1262 = vmatpush1.msra.mxu0 0.0
  %1263 = vmatprep.subr.mxu0 0.0
  %1264 = vmatpush1.msra.mxu0 0.0
  %1265 = vmatprep.subr.mxu0 0.0
  %1266 = vmatpush1.msra.mxu0 0.0
  %1267 = vmatprep.subr.mxu0 0.0
  %1268 = vmatpush1.msra.mxu0 0.0
  %1269 = vmatprep.subr.mxu0 0.0
  %1270 = vmatpush1.msra.mxu0 0.0
  %1271 = vmatprep.subr.mxu0 0.0
  %1272 = vmatpush1.msra.mxu0 0.0
  %1273 = vmatprep.subr.mxu0 0.0
  %1274 = vmatpush1.msra.mxu0 0.0
  %1275 = vmatprep.subr.mxu0 0.0
  %1276 = vmatpush1.msra.mxu0 0.0
  %1277 = vmatprep.subr.mxu0 0.0
  %1278 = vmatpush1.msra.mxu0 0.0
  %1279 = vmatprep.subr.mxu0 0.0
  %1280 = vmatpush1.msra.mxu0 0.0
  %1281 = vmatprep.subr.mxu0 0.0
  %1282 = vmatpush1.msra.mxu0 0.0
  %1283 = vmatprep.subr.mxu0 0.0
  %1284 = vmatpush1.msra.mxu0 0.0
  %1285 = vmatprep.subr.mxu0 0.0
  %1286 = vmatpush1.msra.mxu0 0.0
  %1287 = vmatprep.subr.mxu0 0.0
  %1288 = vmatpush1.msra.mxu0 0.0
  %1289 = vmatprep.subr.mxu0 0.0
  %1290 = vmatpush1.msra.mxu0 0.0
  %1291 = vmatprep.subr.mxu0 0.0
  %1292 = vmatpush1.msra.mxu0 0.0
  %1293 = vmatprep.subr.mxu0 0.0
  %1294 = vmatpush1.msra.mxu0 0.0
  %1295 = vmatprep.subr.mxu0 0.0
  %1296 = vmatpush1.msra.mxu0 0.0
  %1297 = vmatprep.subr.mxu0 0.0
  %1298 = vmatpush1.msra.mxu0 0.0
  %1299 = vmatprep.subr.mxu0 0.0
  %1300 = vmatpush1.msra.mxu0 0.0
  %1301 = vmatprep.subr.mxu0 0.0
  %1302 = vmatpush1.msra.mxu0 0.0
  %1303 = vmatprep.subr.mxu0 0.0
  %1304 = vmatpush1.msra.mxu0 0.0
  %1305 = vmatprep.subr.mxu0 0.0
  %1306 = vmatpush1.msra.mxu0 0.0
  %1307 = vmatprep.subr.mxu0 0.0
  %1308 = vmatpush1.msra.mxu0 0.0
  %1309 = vmatprep.subr.mxu0 0.0
  %1310 = vmatpush1.msra.mxu0 0.0
  %1311 = vmatprep.subr.mxu0 0.0
  %1312 = vmatpush1.msra.mxu0 0.0
  %1313 = vmatprep.subr.mxu0 0.0
  %1314 = vmatpush1.msra.mxu0 0.0
  %1315 = vmatprep.mubr.f32.mxu0 0.0
  %1316 = vmatmul.mubr.f32.gmra.mrb[0].mxu0 %v1249
  %v1317 = vpop.f32.mrb[0].mxu0
  %v1318 = vadd.f32 %v54, %v1317
  %v1319 = vpop.f32.mrb[0].mxu0
  %1320 = vdwg.mxu0
  %1322 = vrot.lane.b32.xlu0 %v1150, 32
  %v1323 = vpop.permute.xlu0 %1322
  %v1324 = vsel %vm242, %v1323, 0
  %1326 = vmatprep.subr.mxu0 0.0
  %1327 = vmatpush1.msra.mxu0 %v30
  %1328 = vmatprep.subr.mxu0 0.0
  %1329 = vmatpush1.msra.mxu0 %v31
  %1330 = vmatprep.subr.mxu0 0.0
  %1331 = vmatpush1.msra.mxu0 %v32
  %1332 = vmatprep.subr.mxu0 0.0
  %1333 = vmatpush1.msra.mxu0 %v33
  %1334 = vmatprep.subr.mxu0 0.0
  %1335 = vmatpush1.msra.mxu0 0.0
  %1336 = vmatprep.subr.mxu0 0.0
  %1337 = vmatpush1.msra.mxu0 0.0
  %1338 = vmatprep.subr.mxu0 0.0
  %1339 = vmatpush1.msra.mxu0 0.0
  %1340 = vmatprep.subr.mxu0 0.0
  %1341 = vmatpush1.msra.mxu0 0.0
  %1342 = vmatprep.subr.mxu0 0.0
  %1343 = vmatpush1.msra.mxu0 0.0
  %1344 = vmatprep.subr.mxu0 0.0
  %1345 = vmatpush1.msra.mxu0 0.0
  %1346 = vmatprep.subr.mxu0 0.0
  %1347 = vmatpush1.msra.mxu0 0.0
  %1348 = vmatprep.subr.mxu0 0.0
  %1349 = vmatpush1.msra.mxu0 0.0
  %1350 = vmatprep.subr.mxu0 0.0
  %1351 = vmatpush1.msra.mxu0 0.0
  %1352 = vmatprep.subr.mxu0 0.0
  %1353 = vmatpush1.msra.mxu0 0.0
  %1354 = vmatprep.subr.mxu0 0.0
  %1355 = vmatpush1.msra.mxu0 0.0
  %1356 = vmatprep.subr.mxu0 0.0
  %1357 = vmatpush1.msra.mxu0 0.0
  %1358 = vmatprep.subr.mxu0 0.0
  %1359 = vmatpush1.msra.mxu0 0.0
  %1360 = vmatprep.subr.mxu0 0.0
  %1361 = vmatpush1.msra.mxu0 0.0
  %1362 = vmatprep.subr.mxu0 0.0
  %1363 = vmatpush1.msra.mxu0 0.0
  %1364 = vmatprep.subr.mxu0 0.0
  %1365 = vmatpush1.msra.mxu0 0.0
  %1366 = vmatprep.subr.mxu0 0.0
  %1367 = vmatpush1.msra.mxu0 0.0
  %1368 = vmatprep.subr.mxu0 0.0
  %1369 = vmatpush1.msra.mxu0 0.0
  %1370 = vmatprep.subr.mxu0 0.0
  %1371 = vmatpush1.msra.mxu0 0.0
  %1372 = vmatprep.subr.mxu0 0.0
  %1373 = vmatpush1.msra.mxu0 0.0
  %1374 = vmatprep.subr.mxu0 0.0
  %1375 = vmatpush1.msra.mxu0 0.0
  %1376 = vmatprep.subr.mxu0 0.0
  %1377 = vmatpush1.msra.mxu0 0.0
  %1378 = vmatprep.subr.mxu0 0.0
  %1379 = vmatpush1.msra.mxu0 0.0
  %1380 = vmatprep.subr.mxu0 0.0
  %1381 = vmatpush1.msra.mxu0 0.0
  %1382 = vmatprep.subr.mxu0 0.0
  %1383 = vmatpush1.msra.mxu0 0.0
  %1384 = vmatprep.subr.mxu0 0.0
  %1385 = vmatpush1.msra.mxu0 0.0
  %1386 = vmatprep.subr.mxu0 0.0
  %1387 = vmatpush1.msra.mxu0 0.0
  %1388 = vmatprep.subr.mxu0 0.0
  %1389 = vmatpush1.msra.mxu0 0.0
  %1390 = vmatprep.mubr.f32.mxu0 0.0
  %1391 = vmatmul.mubr.f32.gmra.mrb[0].mxu0 %v1324
  %v1392 = vpop.f32.mrb[0].mxu0
  %v1393 = vadd.f32 0.0, %v1392
  %v1394 = vpop.f32.mrb[0].mxu0
  %1395 = vdwg.mxu0
  %v1396 = vadd.f32 %v1318, %v1393
  %v1397 = vxor.u32 %v1396, 2147483648
  %v1398 = vmul.f32 %v1397, 1.442695
  %v1399 = vpow.pop %v1398
  %v1400 = vadd.f32 %v1399, 1.0
  %v1401 = vrcp.pop %v1400
  %v1402 = vmul.f32 1.0, %v1401
  %v1403 = vtanh.pop %v1396
  %v1404 = vmul.f32 %v1402, %v1144
  %1406 = vrot.lane.b32.xlu0 %v1403, 64
  %v1407 = vpop.permute.xlu0 %1406
  %v1409 = vmul.f32 %v1402, %v1407
  %1411 = vrot.lane.b32.xlu0 %v1409, 32
  %v1412 = vpop.permute.xlu0 %1411
  %v1414 = vadd.f32 %v1404, %v1412
  %v1415 = vtanh.pop %v1414
  %1417 = vrot.lane.b32.xlu0 %v1415, 64
  %v1418 = vpop.permute.xlu0 %1417
  %v1420 = vmul.f32 %v1402, %v1418
  %1421 = vmatprep.subr.mxu0 0.0
  %1422 = vmatpush1.msra.mxu0 %v26
  %1423 = vmatprep.subr.mxu0 0.0
  %1424 = vmatpush1.msra.mxu0 %v27
  %1425 = vmatprep.subr.mxu0 0.0
  %1426 = vmatpush1.msra.mxu0 %v28
  %1427 = vmatprep.subr.mxu0 0.0
  %1428 = vmatpush1.msra.mxu0 %v29
  %1429 = vmatprep.subr.mxu0 0.0
  %1430 = vmatpush1.msra.mxu0 0.0
  %1431 = vmatprep.subr.mxu0 0.0
  %1432 = vmatpush1.msra.mxu0 0.0
  %1433 = vmatprep.subr.mxu0 0.0
  %1434 = vmatpush1.msra.mxu0 0.0
  %1435 = vmatprep.subr.mxu0 0.0
  %1436 = vmatpush1.msra.mxu0 0.0
  %1437 = vmatprep.subr.mxu0 0.0
  %1438 = vmatpush1.msra.mxu0 0.0
  %1439 = vmatprep.subr.mxu0 0.0
  %1440 = vmatpush1.msra.mxu0 0.0
  %1441 = vmatprep.subr.mxu0 0.0
  %1442 = vmatpush1.msra.mxu0 0.0
  %1443 = vmatprep.subr.mxu0 0.0
  %1444 = vmatpush1.msra.mxu0 0.0
  %1445 = vmatprep.subr.mxu0 0.0
  %1446 = vmatpush1.msra.mxu0 0.0
  %1447 = vmatprep.subr.mxu0 0.0
  %1448 = vmatpush1.msra.mxu0 0.0
  %1449 = vmatprep.subr.mxu0 0.0
  %1450 = vmatpush1.msra.mxu0 0.0
  %1451 = vmatprep.subr.mxu0 0.0
  %1452 = vmatpush1.msra.mxu0 0.0
  %1453 = vmatprep.subr.mxu0 0.0
  %1454 = vmatpush1.msra.mxu0 0.0
  %1455 = vmatprep.subr.mxu0 0.0
  %1456 = vmatpush1.msra.mxu0 0.0
  %1457 = vmatprep.subr.mxu0 0.0
  %1458 = vmatpush1.msra.mxu0 0.0
  %1459 = vmatprep.subr.mxu0 0.0
  %1460 = vmatpush1.msra.mxu0 0.0
  %1461 = vmatprep.subr.mxu0 0.0
  %1462 = vmatpush1.msra.mxu0 0.0
  %1463 = vmatprep.subr.mxu0 0.0
  %1464 = vmatpush1.msra.mxu0 0.0
  %1465 = vmatprep.subr.mxu0 0.0
  %1466 = vmatpush1.msra.mxu0 0.0
  %1467 = vmatprep.subr.mxu0 0.0
  %1468 = vmatpush1.msra.mxu0 0.0
  %1469 = vmatprep.subr.mxu0 0.0
  %1470 = vmatpush1.msra.mxu0 0.0
  %1471 = vmatprep.subr.mxu0 0.0
  %1472 = vmatpush1.msra.mxu0 0.0
  %1473 = vmatprep.subr.mxu0 0.0
  %1474 = vmatpush1.msra.mxu0 0.0
  %1475 = vmatprep.subr.mxu0 0.0
  %1476 = vmatpush1.msra.mxu0 0.0
  %1477 = vmatprep.subr.mxu0 0.0
  %1478 = vmatpush1.msra.mxu0 0.0
  %1479 = vmatprep.subr.mxu0 0.0
  %1480 = vmatpush1.msra.mxu0 0.0
  %1481 = vmatprep.subr.mxu0 0.0
  %1482 = vmatpush1.msra.mxu0 0.0
  %1483 = vmatprep.subr.mxu0 0.0
  %1484 = vmatpush1.msra.mxu0 0.0
  %1485 = vmatprep.mubr.f32.mxu0 0.0
  %1486 = vmatmul.mubr.f32.gmra.mrb[0].mxu0 %v1249
  %v1487 = vpop.f32.mrb[0].mxu0
  %v1488 = vadd.f32 0.0, %v1487
  %v1489 = vpop.f32.mrb[0].mxu0
  %1490 = vdwg.mxu0
  %v1491 = vadd.f32 %v208, %v1488
  %v1492 = vxor.u32 %v1491, 2147483648
  %v1493 = vmul.f32 %v1492, 1.442695
  %v1494 = vpow.pop %v1493
  %v1495 = vadd.f32 %v1494, 1.0
  %v1496 = vrcp.pop %v1495
  %v1497 = vmul.f32 1.0, %v1496
  %v1498 = vtanh.pop %v1491
  %v1499 = vmul.f32 %v1497, %v1239
  %1501 = vrot.lane.b32.xlu0 %v1498, 64
  %v1502 = vpop.permute.xlu0 %1501
  %v1504 = vmul.f32 %v1497, %v1502
  %1506 = vrot.lane.b32.xlu0 %v1504, 32
  %v1507 = vpop.permute.xlu0 %1506
  %v1509 = vadd.f32 %v1499, %v1507
  %v1510 = vtanh.pop %v1509
  %1512 = vrot.lane.b32.xlu0 %v1510, 64
  %v1513 = vpop.permute.xlu0 %1512
  %v1515 = vmul.f32 %v1497, %v1513
  %1517 = vrot.lane.b32.xlu0 %v1515, 32
  %v1518 = vpop.permute.xlu0 %1517
  %v1519 = vsel %vm242, %v1518, 0
  %1521 = vmatprep.subr.mxu0 0.0
  %1522 = vmatpush1.msra.mxu0 %v42
  %1523 = vmatprep.subr.mxu0 0.0
  %1524 = vmatpush1.msra.mxu0 %v43
  %1525 = vmatprep.subr.mxu0 0.0
  %1526 = vmatpush1.msra.mxu0 %v44
  %1527 = vmatprep.subr.mxu0 0.0
  %1528 = vmatpush1.msra.mxu0 %v45
  %1529 = vmatprep.subr.mxu0 0.0
  %1530 = vmatpush1.msra.mxu0 0.0
  %1531 = vmatprep.subr.mxu0 0.0
  %1532 = vmatpush1.msra.mxu0 0.0
  %1533 = vmatprep.subr.mxu0 0.0
  %1534 = vmatpush1.msra.mxu0 0.0
  %1535 = vmatprep.subr.mxu0 0.0
  %1536 = vmatpush1.msra.mxu0 0.0
  %1537 = vmatprep.subr.mxu0 0.0
  %1538 = vmatpush1.msra.mxu0 0.0
  %1539 = vmatprep.subr.mxu0 0.0
  %1540 = vmatpush1.msra.mxu0 0.0
  %1541 = vmatprep.subr.mxu0 0.0
  %1542 = vmatpush1.msra.mxu0 0.0
  %1543 = vmatprep.subr.mxu0 0.0
  %1544 = vmatpush1.msra.mxu0 0.0
  %1545 = vmatprep.subr.mxu0 0.0
  %1546 = vmatpush1.msra.mxu0 0.0
  %1547 = vmatprep.subr.mxu0 0.0
  %1548 = vmatpush1.msra.mxu0 0.0
  %1549 = vmatprep.subr.mxu0 0.0
  %1550 = vmatpush1.msra.mxu0 0.0
  %1551 = vmatprep.subr.mxu0 0.0
  %1552 = vmatpush1.msra.mxu0 0.0
  %1553 = vmatprep.subr.mxu0 0.0
  %1554 = vmatpush1.msra.mxu0 0.0
  %1555 = vmatprep.subr.mxu0 0.0
  %1556 = vmatpush1.msra.mxu0 0.0
  %1557 = vmatprep.subr.mxu0 0.0
  %1558 = vmatpush1.msra.mxu0 0.0
  %1559 = vmatprep.subr.mxu0 0.0
  %1560 = vmatpush1.msra.mxu0 0.0
  %1561 = vmatprep.subr.mxu0 0.0
  %1562 = vmatpush1.msra.mxu0 0.0
  %1563 = vmatprep.subr.mxu0 0.0
  %1564 = vmatpush1.msra.mxu0 0.0
  %1565 = vmatprep.subr.mxu0 0.0
  %1566 = vmatpush1.msra.mxu0 0.0
  %1567 = vmatprep.subr.mxu0 0.0
  %1568 = vmatpush1.msra.mxu0 0.0
  %1569 = vmatprep.subr.mxu0 0.0
  %1570 = vmatpush1.msra.mxu0 0.0
  %1571 = vmatprep.subr.mxu0 0.0
  %1572 = vmatpush1.msra.mxu0 0.0
  %1573 = vmatprep.subr.mxu0 0.0
  %1574 = vmatpush1.msra.mxu0 0.0
  %1575 = vmatprep.subr.mxu0 0.0
  %1576 = vmatpush1.msra.mxu0 0.0
  %1577 = vmatprep.subr.mxu0 0.0
  %1578 = vmatpush1.msra.mxu0 0.0
  %1579 = vmatprep.subr.mxu0 0.0
  %1580 = vmatpush1.msra.mxu0 0.0
  %1581 = vmatprep.subr.mxu0 0.0
  %1582 = vmatpush1.msra.mxu0 0.0
  %1583 = vmatprep.subr.mxu0 0.0
  %1584 = vmatpush1.msra.mxu0 0.0
  %1585 = vmatprep.mubr.f32.mxu0 0.0
  %1586 = vmatmul.mubr.f32.gmra.mrb[0].mxu0 %v1519
  %v1587 = vpop.f32.mrb[0].mxu0
  %v1588 = vadd.f32 %v54, %v1587
  %v1589 = vpop.f32.mrb[0].mxu0
  %1590 = vdwg.mxu0
  %1592 = vrot.lane.b32.xlu0 %v1420, 32
  %v1593 = vpop.permute.xlu0 %1592
  %v1594 = vsel %vm242, %v1593, 0
  %1596 = vmatprep.subr.mxu0 0.0
  %1597 = vmatpush1.msra.mxu0 %v30
  %1598 = vmatprep.subr.mxu0 0.0
  %1599 = vmatpush1.msra.mxu0 %v31
  %1600 = vmatprep.subr.mxu0 0.0
  %1601 = vmatpush1.msra.mxu0 %v32
  %1602 = vmatprep.subr.mxu0 0.0
  %1603 = vmatpush1.msra.mxu0 %v33
  %1604 = vmatprep.subr.mxu0 0.0
  %1605 = vmatpush1.msra.mxu0 0.0
  %1606 = vmatprep.subr.mxu0 0.0
  %1607 = vmatpush1.msra.mxu0 0.0
  %1608 = vmatprep.subr.mxu0 0.0
  %1609 = vmatpush1.msra.mxu0 0.0
  %1610 = vmatprep.subr.mxu0 0.0
  %1611 = vmatpush1.msra.mxu0 0.0
  %1612 = vmatprep.subr.mxu0 0.0
  %1613 = vmatpush1.msra.mxu0 0.0
  %1614 = vmatprep.subr.mxu0 0.0
  %1615 = vmatpush1.msra.mxu0 0.0
  %1616 = vmatprep.subr.mxu0 0.0
  %1617 = vmatpush1.msra.mxu0 0.0
  %1618 = vmatprep.subr.mxu0 0.0
  %1619 = vmatpush1.msra.mxu0 0.0
  %1620 = vmatprep.subr.mxu0 0.0
  %1621 = vmatpush1.msra.mxu0 0.0
  %1622 = vmatprep.subr.mxu0 0.0
  %1623 = vmatpush1.msra.mxu0 0.0
  %1624 = vmatprep.subr.mxu0 0.0
  %1625 = vmatpush1.msra.mxu0 0.0
  %1626 = vmatprep.subr.mxu0 0.0
  %1627 = vmatpush1.msra.mxu0 0.0
  %1628 = vmatprep.subr.mxu0 0.0
  %1629 = vmatpush1.msra.mxu0 0.0
  %1630 = vmatprep.subr.mxu0 0.0
  %1631 = vmatpush1.msra.mxu0 0.0
  %1632 = vmatprep.subr.mxu0 0.0
  %1633 = vmatpush1.msra.mxu0 0.0
  %1634 = vmatprep.subr.mxu0 0.0
  %1635 = vmatpush1.msra.mxu0 0.0
  %1636 = vmatprep.subr.mxu0 0.0
  %1637 = vmatpush1.msra.mxu0 0.0
  %1638 = vmatprep.subr.mxu0 0.0
  %1639 = vmatpush1.msra.mxu0 0.0
  %1640 = vmatprep.subr.mxu0 0.0
  %1641 = vmatpush1.msra.mxu0 0.0
  %1642 = vmatprep.subr.mxu0 0.0
  %1643 = vmatpush1.msra.mxu0 0.0
  %1644 = vmatprep.subr.mxu0 0.0
  %1645 = vmatpush1.msra.mxu0 0.0
  %1646 = vmatprep.subr.mxu0 0.0
  %1647 = vmatpush1.msra.mxu0 0.0
  %1648 = vmatprep.subr.mxu0 0.0
  %1649 = vmatpush1.msra.mxu0 0.0
  %1650 = vmatprep.subr.mxu0 0.0
  %1651 = vmatpush1.msra.mxu0 0.0
  %1652 = vmatprep.subr.mxu0 0.0
  %1653 = vmatpush1.msra.mxu0 0.0
  %1654 = vmatprep.subr.mxu0 0.0
  %1655 = vmatpush1.msra.mxu0 0.0
  %1656 = vmatprep.subr.mxu0 0.0
  %1657 = vmatpush1.msra.mxu0 0.0
  %1658 = vmatprep.subr.mxu0 0.0
  %1659 = vmatpush1.msra.mxu0 0.0
  %1660 = vmatprep.mubr.f32.mxu0 0.0
  %1661 = vmatmul.mubr.f32.gmra.mrb[0].mxu0 %v1594
  %v1662 = vpop.f32.mrb[0].mxu0
  %v1663 = vadd.f32 0.0, %v1662
  %v1664 = vpop.f32.mrb[0].mxu0
  %1665 = vdwg.mxu0
  %v1666 = vadd.f32 %v1588, %v1663
  %v1667 = vxor.u32 %v1666, 2147483648
  %v1668 = vmul.f32 %v1667, 1.442695
  %v1669 = vpow.pop %v1668
  %v1670 = vadd.f32 %v1669, 1.0
  %v1671 = vrcp.pop %v1670
  %v1672 = vmul.f32 1.0, %v1671
  %v1673 = vtanh.pop %v1666
  %v1674 = vmul.f32 %v1672, %v1414
  %1676 = vrot.lane.b32.xlu0 %v1673, 64
  %v1677 = vpop.permute.xlu0 %1676
  %v1679 = vmul.f32 %v1672, %v1677
  %1681 = vrot.lane.b32.xlu0 %v1679, 32
  %v1682 = vpop.permute.xlu0 %1681
  %v1684 = vadd.f32 %v1674, %v1682
  %v1685 = vtanh.pop %v1684
  %1687 = vrot.lane.b32.xlu0 %v1685, 64
  %v1688 = vpop.permute.xlu0 %1687
  %v1690 = vmul.f32 %v1672, %v1688
  %1691 = vmatprep.subr.mxu0 0.0
  %1692 = vmatpush1.msra.mxu0 %v26
  %1693 = vmatprep.subr.mxu0 0.0
  %1694 = vmatpush1.msra.mxu0 %v27
  %1695 = vmatprep.subr.mxu0 0.0
  %1696 = vmatpush1.msra.mxu0 %v28
  %1697 = vmatprep.subr.mxu0 0.0
  %1698 = vmatpush1.msra.mxu0 %v29
  %1699 = vmatprep.subr.mxu0 0.0
  %1700 = vmatpush1.msra.mxu0 0.0
  %1701 = vmatprep.subr.mxu0 0.0
  %1702 = vmatpush1.msra.mxu0 0.0
  %1703 = vmatprep.subr.mxu0 0.0
  %1704 = vmatpush1.msra.mxu0 0.0
  %1705 = vmatprep.subr.mxu0 0.0
  %1706 = vmatpush1.msra.mxu0 0.0
  %1707 = vmatprep.subr.mxu0 0.0
  %1708 = vmatpush1.msra.mxu0 0.0
  %1709 = vmatprep.subr.mxu0 0.0
  %1710 = vmatpush1.msra.mxu0 0.0
  %1711 = vmatprep.subr.mxu0 0.0
  %1712 = vmatpush1.msra.mxu0 0.0
  %1713 = vmatprep.subr.mxu0 0.0
  %1714 = vmatpush1.msra.mxu0 0.0
  %1715 = vmatprep.subr.mxu0 0.0
  %1716 = vmatpush1.msra.mxu0 0.0
  %1717 = vmatprep.subr.mxu0 0.0
  %1718 = vmatpush1.msra.mxu0 0.0
  %1719 = vmatprep.subr.mxu0 0.0
  %1720 = vmatpush1.msra.mxu0 0.0
  %1721 = vmatprep.subr.mxu0 0.0
  %1722 = vmatpush1.msra.mxu0 0.0
  %1723 = vmatprep.subr.mxu0 0.0
  %1724 = vmatpush1.msra.mxu0 0.0
  %1725 = vmatprep.subr.mxu0 0.0
  %1726 = vmatpush1.msra.mxu0 0.0
  %1727 = vmatprep.subr.mxu0 0.0
  %1728 = vmatpush1.msra.mxu0 0.0
  %1729 = vmatprep.subr.mxu0 0.0
  %1730 = vmatpush1.msra.mxu0 0.0
  %1731 = vmatprep.subr.mxu0 0.0
  %1732 = vmatpush1.msra.mxu0 0.0
  %1733 = vmatprep.subr.mxu0 0.0
  %1734 = vmatpush1.msra.mxu0 0.0
  %1735 = vmatprep.subr.mxu0 0.0
  %1736 = vmatpush1.msra.mxu0 0.0
  %1737 = vmatprep.subr.mxu0 0.0
  %1738 = vmatpush1.msra.mxu0 0.0
  %1739 = vmatprep.subr.mxu0 0.0
  %1740 = vmatpush1.msra.mxu0 0.0
  %1741 = vmatprep.subr.mxu0 0.0
  %1742 = vmatpush1.msra.mxu0 0.0
  %1743 = vmatprep.subr.mxu0 0.0
  %1744 = vmatpush1.msra.mxu0 0.0
  %1745 = vmatprep.subr.mxu0 0.0
  %1746 = vmatpush1.msra.mxu0 0.0
  %1747 = vmatprep.subr.mxu0 0.0
  %1748 = vmatpush1.msra.mxu0 0.0
  %1749 = vmatprep.subr.mxu0 0.0
  %1750 = vmatpush1.msra.mxu0 0.0
  %1751 = vmatprep.subr.mxu0 0.0
  %1752 = vmatpush1.msra.mxu0 0.0
  %1753 = vmatprep.subr.mxu0 0.0
  %1754 = vmatpush1.msra.mxu0 0.0
  %1755 = vmatprep.mubr.f32.mxu0 0.0
  %1756 = vmatmul.mubr.f32.gmra.mrb[0].mxu0 %v1519
  %v1757 = vpop.f32.mrb[0].mxu0
  %v1758 = vadd.f32 0.0, %v1757
  %v1759 = vpop.f32.mrb[0].mxu0
  %1760 = vdwg.mxu0
  %v1761 = vadd.f32 %v213, %v1758
  %v1762 = vxor.u32 %v1761, 2147483648
  %v1763 = vmul.f32 %v1762, 1.442695
  %v1764 = vpow.pop %v1763
  %v1765 = vadd.f32 %v1764, 1.0
  %v1766 = vrcp.pop %v1765
  %v1767 = vmul.f32 1.0, %v1766
  %v1768 = vtanh.pop %v1761
  %v1769 = vmul.f32 %v1767, %v1509
  %1771 = vrot.lane.b32.xlu0 %v1768, 64
  %v1772 = vpop.permute.xlu0 %1771
  %v1774 = vmul.f32 %v1767, %v1772
  %1776 = vrot.lane.b32.xlu0 %v1774, 32
  %v1777 = vpop.permute.xlu0 %1776
  %v1779 = vadd.f32 %v1769, %v1777
  %v1780 = vtanh.pop %v1779
  %1782 = vrot.lane.b32.xlu0 %v1780, 64
  %v1783 = vpop.permute.xlu0 %1782
  %v1785 = vmul.f32 %v1767, %v1783
  %1787 = vrot.lane.b32.xlu0 %v1785, 32
  %v1788 = vpop.permute.xlu0 %1787
  %v1789 = vsel %vm242, %v1788, 0
  %1791 = vmatprep.subr.mxu0 0.0
  %1792 = vmatpush1.msra.mxu0 %v42
  %1793 = vmatprep.subr.mxu0 0.0
  %1794 = vmatpush1.msra.mxu0 %v43
  %1795 = vmatprep.subr.mxu0 0.0
  %1796 = vmatpush1.msra.mxu0 %v44
  %1797 = vmatprep.subr.mxu0 0.0
  %1798 = vmatpush1.msra.mxu0 %v45
  %1799 = vmatprep.subr.mxu0 0.0
  %1800 = vmatpush1.msra.mxu0 0.0
  %1801 = vmatprep.subr.mxu0 0.0
  %1802 = vmatpush1.msra.mxu0 0.0
  %1803 = vmatprep.subr.mxu0 0.0
  %1804 = vmatpush1.msra.mxu0 0.0
  %1805 = vmatprep.subr.mxu0 0.0
  %1806 = vmatpush1.msra.mxu0 0.0
  %1807 = vmatprep.subr.mxu0 0.0
  %1808 = vmatpush1.msra.mxu0 0.0
  %1809 = vmatprep.subr.mxu0 0.0
  %1810 = vmatpush1.msra.mxu0 0.0
  %1811 = vmatprep.subr.mxu0 0.0
  %1812 = vmatpush1.msra.mxu0 0.0
  %1813 = vmatprep.subr.mxu0 0.0
  %1814 = vmatpush1.msra.mxu0 0.0
  %1815 = vmatprep.subr.mxu0 0.0
  %1816 = vmatpush1.msra.mxu0 0.0
  %1817 = vmatprep.subr.mxu0 0.0
  %1818 = vmatpush1.msra.mxu0 0.0
  %1819 = vmatprep.subr.mxu0 0.0
  %1820 = vmatpush1.msra.mxu0 0.0
  %1821 = vmatprep.subr.mxu0 0.0
  %1822 = vmatpush1.msra.mxu0 0.0
  %1823 = vmatprep.subr.mxu0 0.0
  %1824 = vmatpush1.msra.mxu0 0.0
  %1825 = vmatprep.subr.mxu0 0.0
  %1826 = vmatpush1.msra.mxu0 0.0
  %1827 = vmatprep.subr.mxu0 0.0
  %1828 = vmatpush1.msra.mxu0 0.0
  %1829 = vmatprep.subr.mxu0 0.0
  %1830 = vmatpush1.msra.mxu0 0.0
  %1831 = vmatprep.subr.mxu0 0.0
  %1832 = vmatpush1.msra.mxu0 0.0
  %1833 = vmatprep.subr.mxu0 0.0
  %1834 = vmatpush1.msra.mxu0 0.0
  %1835 = vmatprep.subr.mxu0 0.0
  %1836 = vmatpush1.msra.mxu0 0.0
  %1837 = vmatprep.subr.mxu0 0.0
  %1838 = vmatpush1.msra.mxu0 0.0
  %1839 = vmatprep.subr.mxu0 0.0
  %1840 = vmatpush1.msra.mxu0 0.0
  %1841 = vmatprep.subr.mxu0 0.0
  %1842 = vmatpush1.msra.mxu0 0.0
  %1843 = vmatprep.subr.mxu0 0.0
  %1844 = vmatpush1.msra.mxu0 0.0
  %1845 = vmatprep.subr.mxu0 0.0
  %1846 = vmatpush1.msra.mxu0 0.0
  %1847 = vmatprep.subr.mxu0 0.0
  %1848 = vmatpush1.msra.mxu0 0.0
  %1849 = vmatprep.subr.mxu0 0.0
  %1850 = vmatpush1.msra.mxu0 0.0
  %1851 = vmatprep.subr.mxu0 0.0
  %1852 = vmatpush1.msra.mxu0 0.0
  %1853 = vmatprep.subr.mxu0 0.0
  %1854 = vmatpush1.msra.mxu0 0.0
  %1855 = vmatprep.mubr.f32.mxu0 0.0
  %1856 = vmatmul.mubr.f32.gmra.mrb[0].mxu0 %v1789
  %v1857 = vpop.f32.mrb[0].mxu0
  %v1858 = vadd.f32 %v54, %v1857
  %v1859 = vpop.f32.mrb[0].mxu0
  %1860 = vdwg.mxu0
  %1862 = vrot.lane.b32.xlu0 %v1690, 32
  %v1863 = vpop.permute.xlu0 %1862
  %v1864 = vsel %vm242, %v1863, 0
  %1866 = vmatprep.subr.mxu0 0.0
  %1867 = vmatpush1.msra.mxu0 %v30
  %1868 = vmatprep.subr.mxu0 0.0
  %1869 = vmatpush1.msra.mxu0 %v31
  %1870 = vmatprep.subr.mxu0 0.0
  %1871 = vmatpush1.msra.mxu0 %v32
  %1872 = vmatprep.subr.mxu0 0.0
  %1873 = vmatpush1.msra.mxu0 %v33
  %1874 = vmatprep.subr.mxu0 0.0
  %1875 = vmatpush1.msra.mxu0 0.0
  %1876 = vmatprep.subr.mxu0 0.0
  %1877 = vmatpush1.msra.mxu0 0.0
  %1878 = vmatprep.subr.mxu0 0.0
  %1879 = vmatpush1.msra.mxu0 0.0
  %1880 = vmatprep.subr.mxu0 0.0
  %1881 = vmatpush1.msra.mxu0 0.0
  %1882 = vmatprep.subr.mxu0 0.0
  %1883 = vmatpush1.msra.mxu0 0.0
  %1884 = vmatprep.subr.mxu0 0.0
  %1885 = vmatpush1.msra.mxu0 0.0
  %1886 = vmatprep.subr.mxu0 0.0
  %1887 = vmatpush1.msra.mxu0 0.0
  %1888 = vmatprep.subr.mxu0 0.0
  %1889 = vmatpush1.msra.mxu0 0.0
  %1890 = vmatprep.subr.mxu0 0.0
  %1891 = vmatpush1.msra.mxu0 0.0
  %1892 = vmatprep.subr.mxu0 0.0
  %1893 = vmatpush1.msra.mxu0 0.0
  %1894 = vmatprep.subr.mxu0 0.0
  %1895 = vmatpush1.msra.mxu0 0.0
  %1896 = vmatprep.subr.mxu0 0.0
  %1897 = vmatpush1.msra.mxu0 0.0
  %1898 = vmatprep.subr.mxu0 0.0
  %1899 = vmatpush1.msra.mxu0 0.0
  %1900 = vmatprep.subr.mxu0 0.0
  %1901 = vmatpush1.msra.mxu0 0.0
  %1902 = vmatprep.subr.mxu0 0.0
  %1903 = vmatpush1.msra.mxu0 0.0
  %1904 = vmatprep.subr.mxu0 0.0
  %1905 = vmatpush1.msra.mxu0 0.0
  %1906 = vmatprep.subr.mxu0 0.0
  %1907 = vmatpush1.msra.mxu0 0.0
  %1908 = vmatprep.subr.mxu0 0.0
  %1909 = vmatpush1.msra.mxu0 0.0
  %1910 = vmatprep.subr.mxu0 0.0
  %1911 = vmatpush1.msra.mxu0 0.0
  %1912 = vmatprep.subr.mxu0 0.0
  %1913 = vmatpush1.msra.mxu0 0.0
  %1914 = vmatprep.subr.mxu0 0.0
  %1915 = vmatpush1.msra.mxu0 0.0
  %1916 = vmatprep.subr.mxu0 0.0
  %1917 = vmatpush1.msra.mxu0 0.0
  %1918 = vmatprep.subr.mxu0 0.0
  %1919 = vmatpush1.msra.mxu0 0.0
  %1920 = vmatprep.subr.mxu0 0.0
  %1921 = vmatpush1.msra.mxu0 0.0
  %1922 = vmatprep.subr.mxu0 0.0
  %1923 = vmatpush1.msra.mxu0 0.0
  %1924 = vmatprep.subr.mxu0 0.0
  %1925 = vmatpush1.msra.mxu0 0.0
  %1926 = vmatprep.subr.mxu0 0.0
  %1927 = vmatpush1.msra.mxu0 0.0
  %1928 = vmatprep.subr.mxu0 0.0
  %1929 = vmatpush1.msra.mxu0 0.0
  %1930 = vmatprep.mubr.f32.mxu0 0.0
  %1931 = vmatmul.mubr.f32.gmra.mrb[0].mxu0 %v1864
  %v1932 = vpop.f32.mrb[0].mxu0
  %v1933 = vadd.f32 0.0, %v1932
  %v1934 = vpop.f32.mrb[0].mxu0
  %1935 = vdwg.mxu0
  %v1936 = vadd.f32 %v1858, %v1933
  %v1937 = vxor.u32 %v1936, 2147483648
  %v1938 = vmul.f32 %v1937, 1.442695
  %v1939 = vpow.pop %v1938
  %v1940 = vadd.f32 %v1939, 1.0
  %v1941 = vrcp.pop %v1940
  %v1942 = vmul.f32 1.0, %v1941
  %v1943 = vtanh.pop %v1936
  %v1944 = vmul.f32 %v1942, %v1684
  %1946 = vrot.lane.b32.xlu0 %v1943, 64
  %v1947 = vpop.permute.xlu0 %1946
  %v1949 = vmul.f32 %v1942, %v1947
  %1951 = vrot.lane.b32.xlu0 %v1949, 32
  %v1952 = vpop.permute.xlu0 %1951
  %v1954 = vadd.f32 %v1944, %v1952
  %v1955 = vtanh.pop %v1954
  %1957 = vrot.lane.b32.xlu0 %v1955, 64
  %v1958 = vpop.permute.xlu0 %1957
  %v1960 = vmul.f32 %v1942, %v1958
  %1961 = vmatprep.subr.mxu0 0.0
  %1962 = vmatpush1.msra.mxu0 %v26
  %1963 = vmatprep.subr.mxu0 0.0
  %1964 = vmatpush1.msra.mxu0 %v27
  %1965 = vmatprep.subr.mxu0 0.0
  %1966 = vmatpush1.msra.mxu0 %v28
  %1967 = vmatprep.subr.mxu0 0.0
  %1968 = vmatpush1.msra.mxu0 %v29
  %1969 = vmatprep.subr.mxu0 0.0
  %1970 = vmatpush1.msra.mxu0 0.0
  %1971 = vmatprep.subr.mxu0 0.0
  %1972 = vmatpush1.msra.mxu0 0.0
  %1973 = vmatprep.subr.mxu0 0.0
  %1974 = vmatpush1.msra.mxu0 0.0
  %1975 = vmatprep.subr.mxu0 0.0
  %1976 = vmatpush1.msra.mxu0 0.0
  %1977 = vmatprep.subr.mxu0 0.0
  %1978 = vmatpush1.msra.mxu0 0.0
  %1979 = vmatprep.subr.mxu0 0.0
  %1980 = vmatpush1.msra.mxu0 0.0
  %1981 = vmatprep.subr.mxu0 0.0
  %1982 = vmatpush1.msra.mxu0 0.0
  %1983 = vmatprep.subr.mxu0 0.0
  %1984 = vmatpush1.msra.mxu0 0.0
  %1985 = vmatprep.subr.mxu0 0.0
  %1986 = vmatpush1.msra.mxu0 0.0
  %1987 = vmatprep.subr.mxu0 0.0
  %1988 = vmatpush1.msra.mxu0 0.0
  %1989 = vmatprep.subr.mxu0 0.0
  %1990 = vmatpush1.msra.mxu0 0.0
  %1991 = vmatprep.subr.mxu0 0.0
  %1992 = vmatpush1.msra.mxu0 0.0
  %1993 = vmatprep.subr.mxu0 0.0
  %1994 = vmatpush1.msra.mxu0 0.0
  %1995 = vmatprep.subr.mxu0 0.0
  %1996 = vmatpush1.msra.mxu0 0.0
  %1997 = vmatprep.subr.mxu0 0.0
  %1998 = vmatpush1.msra.mxu0 0.0
  %1999 = vmatprep.subr.mxu0 0.0
  %2000 = vmatpush1.msra.mxu0 0.0
  %2001 = vmatprep.subr.mxu0 0.0
  %2002 = vmatpush1.msra.mxu0 0.0
  %2003 = vmatprep.subr.mxu0 0.0
  %2004 = vmatpush1.msra.mxu0 0.0
  %2005 = vmatprep.subr.mxu0 0.0
  %2006 = vmatpush1.msra.mxu0 0.0
  %2007 = vmatprep.subr.mxu0 0.0
  %2008 = vmatpush1.msra.mxu0 0.0
  %2009 = vmatprep.subr.mxu0 0.0
  %2010 = vmatpush1.msra.mxu0 0.0
  %2011 = vmatprep.subr.mxu0 0.0
  %2012 = vmatpush1.msra.mxu0 0.0
  %2013 = vmatprep.subr.mxu0 0.0
  %2014 = vmatpush1.msra.mxu0 0.0
  %2015 = vmatprep.subr.mxu0 0.0
  %2016 = vmatpush1.msra.mxu0 0.0
  %2017 = vmatprep.subr.mxu0 0.0
  %2018 = vmatpush1.msra.mxu0 0.0
  %2019 = vmatprep.subr.mxu0 0.0
  %2020 = vmatpush1.msra.mxu0 0.0
  %2021 = vmatprep.subr.mxu0 0.0
  %2022 = vmatpush1.msra.mxu0 0.0
  %2023 = vmatprep.subr.mxu0 0.0
  %2024 = vmatpush1.msra.mxu0 0.0
  %2025 = vmatprep.mubr.f32.mxu0 0.0
  %2026 = vmatmul.mubr.f32.gmra.mrb[0].mxu0 %v1789
  %v2027 = vpop.f32.mrb[0].mxu0
  %v2028 = vadd.f32 0.0, %v2027
  %v2029 = vpop.f32.mrb[0].mxu0
  %2030 = vdwg.mxu0
  %v2031 = vadd.f32 %v218, %v2028
  %v2032 = vxor.u32 %v2031, 2147483648
  %v2033 = vmul.f32 %v2032, 1.442695
  %v2034 = vpow.pop %v2033
  %v2035 = vadd.f32 %v2034, 1.0
  %v2036 = vrcp.pop %v2035
  %v2037 = vmul.f32 1.0, %v2036
  %v2038 = vtanh.pop %v2031
  %v2039 = vmul.f32 %v2037, %v1779
  %2041 = vrot.lane.b32.xlu0 %v2038, 64
  %v2042 = vpop.permute.xlu0 %2041
  %v2044 = vmul.f32 %v2037, %v2042
  %2046 = vrot.lane.b32.xlu0 %v2044, 32
  %v2047 = vpop.permute.xlu0 %2046
  %v2049 = vadd.f32 %v2039, %v2047
  %v2050 = vtanh.pop %v2049
  %2052 = vrot.lane.b32.xlu0 %v2050, 64
  %v2053 = vpop.permute.xlu0 %2052
  %v2055 = vmul.f32 %v2037, %v2053
  %2057 = vrot.lane.b32.xlu0 %v2055, 32
  %v2058 = vpop.permute.xlu0 %2057
  %v2059 = vsel %vm242, %v2058, 0
  %2061 = vmatprep.subr.mxu0 0.0
  %2062 = vmatpush1.msra.mxu0 %v42
  %2063 = vmatprep.subr.mxu0 0.0
  %2064 = vmatpush1.msra.mxu0 %v43
  %2065 = vmatprep.subr.mxu0 0.0
  %2066 = vmatpush1.msra.mxu0 %v44
  %2067 = vmatprep.subr.mxu0 0.0
  %2068 = vmatpush1.msra.mxu0 %v45
  %2069 = vmatprep.subr.mxu0 0.0
  %2070 = vmatpush1.msra.mxu0 0.0
  %2071 = vmatprep.subr.mxu0 0.0
  %2072 = vmatpush1.msra.mxu0 0.0
  %2073 = vmatprep.subr.mxu0 0.0
  %2074 = vmatpush1.msra.mxu0 0.0
  %2075 = vmatprep.subr.mxu0 0.0
  %2076 = vmatpush1.msra.mxu0 0.0
  %2077 = vmatprep.subr.mxu0 0.0
  %2078 = vmatpush1.msra.mxu0 0.0
  %2079 = vmatprep.subr.mxu0 0.0
  %2080 = vmatpush1.msra.mxu0 0.0
  %2081 = vmatprep.subr.mxu0 0.0
  %2082 = vmatpush1.msra.mxu0 0.0
  %2083 = vmatprep.subr.mxu0 0.0
  %2084 = vmatpush1.msra.mxu0 0.0
  %2085 = vmatprep.subr.mxu0 0.0
  %2086 = vmatpush1.msra.mxu0 0.0
  %2087 = vmatprep.subr.mxu0 0.0
  %2088 = vmatpush1.msra.mxu0 0.0
  %2089 = vmatprep.subr.mxu0 0.0
  %2090 = vmatpush1.msra.mxu0 0.0
  %2091 = vmatprep.subr.mxu0 0.0
  %2092 = vmatpush1.msra.mxu0 0.0
  %2093 = vmatprep.subr.mxu0 0.0
  %2094 = vmatpush1.msra.mxu0 0.0
  %2095 = vmatprep.subr.mxu0 0.0
  %2096 = vmatpush1.msra.mxu0 0.0
  %2097 = vmatprep.subr.mxu0 0.0
  %2098 = vmatpush1.msra.mxu0 0.0
  %2099 = vmatprep.subr.mxu0 0.0
  %2100 = vmatpush1.msra.mxu0 0.0
  %2101 = vmatprep.subr.mxu0 0.0
  %2102 = vmatpush1.msra.mxu0 0.0
  %2103 = vmatprep.subr.mxu0 0.0
  %2104 = vmatpush1.msra.mxu0 0.0
  %2105 = vmatprep.subr.mxu0 0.0
  %2106 = vmatpush1.msra.mxu0 0.0
  %2107 = vmatprep.subr.mxu0 0.0
  %2108 = vmatpush1.msra.mxu0 0.0
  %2109 = vmatprep.subr.mxu0 0.0
  %2110 = vmatpush1.msra.mxu0 0.0
  %2111 = vmatprep.subr.mxu0 0.0
  %2112 = vmatpush1.msra.mxu0 0.0
  %2113 = vmatprep.subr.mxu0 0.0
  %2114 = vmatpush1.msra.mxu0 0.0
  %2115 = vmatprep.subr.mxu0 0.0
  %2116 = vmatpush1.msra.mxu0 0.0
  %2117 = vmatprep.subr.mxu0 0.0
  %2118 = vmatpush1.msra.mxu0 0.0
  %2119 = vmatprep.subr.mxu0 0.0
  %2120 = vmatpush1.msra.mxu0 0.0
  %2121 = vmatprep.subr.mxu0 0.0
  %2122 = vmatpush1.msra.mxu0 0.0
  %2123 = vmatprep.subr.mxu0 0.0
  %2124 = vmatpush1.msra.mxu0 0.0
  %2125 = vmatprep.mubr.f32.mxu0 0.0
  %2126 = vmatmul.mubr.f32.gmra.mrb[0].mxu0 %v2059
  %v2127 = vpop.f32.mrb[0].mxu0
  %v2128 = vadd.f32 %v54, %v2127
  %v2129 = vpop.f32.mrb[0].mxu0
  %2130 = vdwg.mxu0
  %2132 = vrot.lane.b32.xlu0 %v1960, 32
  %v2133 = vpop.permute.xlu0 %2132
  %v2134 = vsel %vm242, %v2133, 0
  %2136 = vmatprep.subr.mxu0 0.0
  %2137 = vmatpush1.msra.mxu0 %v30
  %2138 = vmatprep.subr.mxu0 0.0
  %2139 = vmatpush1.msra.mxu0 %v31
  %2140 = vmatprep.subr.mxu0 0.0
  %2141 = vmatpush1.msra.mxu0 %v32
  %2142 = vmatprep.subr.mxu0 0.0
  %2143 = vmatpush1.msra.mxu0 %v33
  %2144 = vmatprep.subr.mxu0 0.0
  %2145 = vmatpush1.msra.mxu0 0.0
  %2146 = vmatprep.subr.mxu0 0.0
  %2147 = vmatpush1.msra.mxu0 0.0
  %2148 = vmatprep.subr.mxu0 0.0
  %2149 = vmatpush1.msra.mxu0 0.0
  %2150 = vmatprep.subr.mxu0 0.0
  %2151 = vmatpush1.msra.mxu0 0.0
  %2152 = vmatprep.subr.mxu0 0.0
  %2153 = vmatpush1.msra.mxu0 0.0
  %2154 = vmatprep.subr.mxu0 0.0
  %2155 = vmatpush1.msra.mxu0 0.0
  %2156 = vmatprep.subr.mxu0 0.0
  %2157 = vmatpush1.msra.mxu0 0.0
  %2158 = vmatprep.subr.mxu0 0.0
  %2159 = vmatpush1.msra.mxu0 0.0
  %2160 = vmatprep.subr.mxu0 0.0
  %2161 = vmatpush1.msra.mxu0 0.0
  %2162 = vmatprep.subr.mxu0 0.0
  %2163 = vmatpush1.msra.mxu0 0.0
  %2164 = vmatprep.subr.mxu0 0.0
  %2165 = vmatpush1.msra.mxu0 0.0
  %2166 = vmatprep.subr.mxu0 0.0
  %2167 = vmatpush1.msra.mxu0 0.0
  %2168 = vmatprep.subr.mxu0 0.0
  %2169 = vmatpush1.msra.mxu0 0.0
  %2170 = vmatprep.subr.mxu0 0.0
  %2171 = vmatpush1.msra.mxu0 0.0
  %2172 = vmatprep.subr.mxu0 0.0
  %2173 = vmatpush1.msra.mxu0 0.0
  %2174 = vmatprep.subr.mxu0 0.0
  %2175 = vmatpush1.msra.mxu0 0.0
  %2176 = vmatprep.subr.mxu0 0.0
  %2177 = vmatpush1.msra.mxu0 0.0
  %2178 = vmatprep.subr.mxu0 0.0
  %2179 = vmatpush1.msra.mxu0 0.0
  %2180 = vmatprep.subr.mxu0 0.0
  %2181 = vmatpush1.msra.mxu0 0.0
  %2182 = vmatprep.subr.mxu0 0.0
  %2183 = vmatpush1.msra.mxu0 0.0
  %2184 = vmatprep.subr.mxu0 0.0
  %2185 = vmatpush1.msra.mxu0 0.0
  %2186 = vmatprep.subr.mxu0 0.0
  %2187 = vmatpush1.msra.mxu0 0.0
  %2188 = vmatprep.subr.mxu0 0.0
  %2189 = vmatpush1.msra.mxu0 0.0
  %2190 = vmatprep.subr.mxu0 0.0
  %2191 = vmatpush1.msra.mxu0 0.0
  %2192 = vmatprep.subr.mxu0 0.0
  %2193 = vmatpush1.msra.mxu0 0.0
  %2194 = vmatprep.subr.mxu0 0.0
  %2195 = vmatpush1.msra.mxu0 0.0
  %2196 = vmatprep.subr.mxu0 0.0
  %2197 = vmatpush1.msra.mxu0 0.0
  %2198 = vmatprep.subr.mxu0 0.0
  %2199 = vmatpush1.msra.mxu0 0.0
  %2200 = vmatprep.mubr.f32.mxu0 0.0
  %2201 = vmatmul.mubr.f32.gmra.mrb[0].mxu0 %v2134
  %v2202 = vpop.f32.mrb[0].mxu0
  %v2203 = vadd.f32 0.0, %v2202
  %v2204 = vpop.f32.mrb[0].mxu0
  %2205 = vdwg.mxu0
  %v2206 = vadd.f32 %v2128, %v2203
  %v2207 = vxor.u32 %v2206, 2147483648
  %v2208 = vmul.f32 %v2207, 1.442695
  %v2209 = vpow.pop %v2208
  %v2210 = vadd.f32 %v2209, 1.0
  %v2211 = vrcp.pop %v2210
  %v2212 = vmul.f32 1.0, %v2211
  %v2213 = vtanh.pop %v2206
  %v2214 = vmul.f32 %v2212, %v1954
  %2216 = vrot.lane.b32.xlu0 %v2213, 64
  %v2217 = vpop.permute.xlu0 %2216
  %v2219 = vmul.f32 %v2212, %v2217
  %2221 = vrot.lane.b32.xlu0 %v2219, 32
  %v2222 = vpop.permute.xlu0 %2221
  %v2224 = vadd.f32 %v2214, %v2222
  %v2225 = vtanh.pop %v2224
  %2227 = vrot.lane.b32.xlu0 %v2225, 64
  %v2228 = vpop.permute.xlu0 %2227
  %v2230 = vmul.f32 %v2212, %v2228
  %2231 = vmatprep.subr.mxu0 0.0
  %2232 = vmatpush1.msra.mxu0 %v34
  %2233 = vmatprep.subr.mxu0 0.0
  %2234 = vmatpush1.msra.mxu0 %v35
  %2235 = vmatprep.subr.mxu0 0.0
  %2236 = vmatpush1.msra.mxu0 %v36
  %2237 = vmatprep.subr.mxu0 0.0
  %2238 = vmatpush1.msra.mxu0 %v37
  %2239 = vmatprep.subr.mxu0 0.0
  %2240 = vmatpush1.msra.mxu0 0.0
  %2241 = vmatprep.subr.mxu0 0.0
  %2242 = vmatpush1.msra.mxu0 0.0
  %2243 = vmatprep.subr.mxu0 0.0
  %2244 = vmatpush1.msra.mxu0 0.0
  %2245 = vmatprep.subr.mxu0 0.0
  %2246 = vmatpush1.msra.mxu0 0.0
  %2247 = vmatprep.subr.mxu0 0.0
  %2248 = vmatpush1.msra.mxu0 0.0
  %2249 = vmatprep.subr.mxu0 0.0
  %2250 = vmatpush1.msra.mxu0 0.0
  %2251 = vmatprep.subr.mxu0 0.0
  %2252 = vmatpush1.msra.mxu0 0.0
  %2253 = vmatprep.subr.mxu0 0.0
  %2254 = vmatpush1.msra.mxu0 0.0
  %2255 = vmatprep.subr.mxu0 0.0
  %2256 = vmatpush1.msra.mxu0 0.0
  %2257 = vmatprep.subr.mxu0 0.0
  %2258 = vmatpush1.msra.mxu0 0.0
  %2259 = vmatprep.subr.mxu0 0.0
  %2260 = vmatpush1.msra.mxu0 0.0
  %2261 = vmatprep.subr.mxu0 0.0
  %2262 = vmatpush1.msra.mxu0 0.0
  %2263 = vmatprep.subr.mxu0 0.0
  %2264 = vmatpush1.msra.mxu0 0.0
  %2265 = vmatprep.subr.mxu0 0.0
  %2266 = vmatpush1.msra.mxu0 0.0
  %2267 = vmatprep.subr.mxu0 0.0
  %2268 = vmatpush1.msra.mxu0 0.0
  %2269 = vmatprep.subr.mxu0 0.0
  %2270 = vmatpush1.msra.mxu0 0.0
  %2271 = vmatprep.subr.mxu0 0.0
  %2272 = vmatpush1.msra.mxu0 0.0
  %2273 = vmatprep.subr.mxu0 0.0
  %2274 = vmatpush1.msra.mxu0 0.0
  %2275 = vmatprep.subr.mxu0 0.0
  %2276 = vmatpush1.msra.mxu0 0.0
  %2277 = vmatprep.subr.mxu0 0.0
  %2278 = vmatpush1.msra.mxu0 0.0
  %2279 = vmatprep.subr.mxu0 0.0
  %2280 = vmatpush1.msra.mxu0 0.0
  %2281 = vmatprep.subr.mxu0 0.0
  %2282 = vmatpush1.msra.mxu0 0.0
  %2283 = vmatprep.subr.mxu0 0.0
  %2284 = vmatpush1.msra.mxu0 0.0
  %2285 = vmatprep.subr.mxu0 0.0
  %2286 = vmatpush1.msra.mxu0 0.0
  %2287 = vmatprep.subr.mxu0 0.0
  %2288 = vmatpush1.msra.mxu0 0.0
  %2289 = vmatprep.subr.mxu0 0.0
  %2290 = vmatpush1.msra.mxu0 0.0
  %2291 = vmatprep.subr.mxu0 0.0
  %2292 = vmatpush1.msra.mxu0 0.0
  %2293 = vmatprep.subr.mxu0 0.0
  %2294 = vmatpush1.msra.mxu0 0.0
  %2295 = vmatprep.mubr.f32.mxu0 0.0
  %2296 = vmatmul.mubr.f32.gmra.mrb[0].mxu0 %v2059
  %v2297 = vpop.f32.mrb[0].mxu0
  %v2298 = vadd.f32 0.0, %v2297
  %v2299 = vpop.f32.mrb[0].mxu0
  %2300 = vdwg.mxu0
  %v2301 = vadd.f32 %v59, %v2298
  %v2302 = vxor.u32 %v2301, 2147483648
  %v2303 = vmul.f32 %v2302, 1.442695
  %v2304 = vpow.pop %v2303
  %v2305 = vadd.f32 %v2304, 1.0
  %v2306 = vrcp.pop %v2305
  %v2307 = vmul.f32 1.0, %v2306
  %v2308 = vtanh.pop %v2301
  %v2309 = vmul.f32 %v2307, %v2049
  %2311 = vrot.lane.b32.xlu0 %v2308, 64
  %v2312 = vpop.permute.xlu0 %2311
  %v2314 = vmul.f32 %v2307, %v2312
  %2316 = vrot.lane.b32.xlu0 %v2314, 32
  %v2317 = vpop.permute.xlu0 %2316
  %v2319 = vadd.f32 %v2309, %v2317
  %v2320 = vtanh.pop %v2319
  %2322 = vrot.lane.b32.xlu0 %v2320, 64
  %v2323 = vpop.permute.xlu0 %2322
  %v2325 = vmul.f32 %v2307, %v2323
  %2327 = vrot.lane.b32.xlu0 %v2325, 32
  %v2328 = vpop.permute.xlu0 %2327
  %v2329 = vsel %vm242, %v2328, 0
  %2331 = vmatprep.subr.mxu0 0.0
  %2332 = vmatpush1.msra.mxu0 %v46
  %2333 = vmatprep.subr.mxu0 0.0
  %2334 = vmatpush1.msra.mxu0 %v47
  %2335 = vmatprep.subr.mxu0 0.0
  %2336 = vmatpush1.msra.mxu0 %v48
  %2337 = vmatprep.subr.mxu0 0.0
  %2338 = vmatpush1.msra.mxu0 %v49
  %2339 = vmatprep.subr.mxu0 0.0
  %2340 = vmatpush1.msra.mxu0 0.0
  %2341 = vmatprep.subr.mxu0 0.0
  %2342 = vmatpush1.msra.mxu0 0.0
  %2343 = vmatprep.subr.mxu0 0.0
  %2344 = vmatpush1.msra.mxu0 0.0
  %2345 = vmatprep.subr.mxu0 0.0
  %2346 = vmatpush1.msra.mxu0 0.0
  %2347 = vmatprep.subr.mxu0 0.0
  %2348 = vmatpush1.msra.mxu0 0.0
  %2349 = vmatprep.subr.mxu0 0.0
  %2350 = vmatpush1.msra.mxu0 0.0
  %2351 = vmatprep.subr.mxu0 0.0
  %2352 = vmatpush1.msra.mxu0 0.0
  %2353 = vmatprep.subr.mxu0 0.0
  %2354 = vmatpush1.msra.mxu0 0.0
  %2355 = vmatprep.subr.mxu0 0.0
  %2356 = vmatpush1.msra.mxu0 0.0
  %2357 = vmatprep.subr.mxu0 0.0
  %2358 = vmatpush1.msra.mxu0 0.0
  %2359 = vmatprep.subr.mxu0 0.0
  %2360 = vmatpush1.msra.mxu0 0.0
  %2361 = vmatprep.subr.mxu0 0.0
  %2362 = vmatpush1.msra.mxu0 0.0
  %2363 = vmatprep.subr.mxu0 0.0
  %2364 = vmatpush1.msra.mxu0 0.0
  %2365 = vmatprep.subr.mxu0 0.0
  %2366 = vmatpush1.msra.mxu0 0.0
  %2367 = vmatprep.subr.mxu0 0.0
  %2368 = vmatpush1.msra.mxu0 0.0
  %2369 = vmatprep.subr.mxu0 0.0
  %2370 = vmatpush1.msra.mxu0 0.0
  %2371 = vmatprep.subr.mxu0 0.0
  %2372 = vmatpush1.msra.mxu0 0.0
  %2373 = vmatprep.subr.mxu0 0.0
  %2374 = vmatpush1.msra.mxu0 0.0
  %2375 = vmatprep.subr.mxu0 0.0
  %2376 = vmatpush1.msra.mxu0 0.0
  %2377 = vmatprep.subr.mxu0 0.0
  %2378 = vmatpush1.msra.mxu0 0.0
  %2379 = vmatprep.subr.mxu0 0.0
  %2380 = vmatpush1.msra.mxu0 0.0
  %2381 = vmatprep.subr.mxu0 0.0
  %2382 = vmatpush1.msra.mxu0 0.0
  %2383 = vmatprep.subr.mxu0 0.0
  %2384 = vmatpush1.msra.mxu0 0.0
  %2385 = vmatprep.subr.mxu0 0.0
  %2386 = vmatpush1.msra.mxu0 0.0
  %2387 = vmatprep.subr.mxu0 0.0
  %2388 = vmatpush1.msra.mxu0 0.0
  %2389 = vmatprep.subr.mxu0 0.0
  %2390 = vmatpush1.msra.mxu0 0.0
  %2391 = vmatprep.subr.mxu0 0.0
  %2392 = vmatpush1.msra.mxu0 0.0
  %2393 = vmatprep.subr.mxu0 0.0
  %2394 = vmatpush1.msra.mxu0 0.0
  %2395 = vmatprep.mubr.f32.mxu0 0.0
  %2396 = vmatmul.mubr.f32.gmra.mrb[0].mxu0 %v2329
  %v2397 = vpop.f32.mrb[0].mxu0
  %v2398 = vadd.f32 %v64, %v2397
  %v2399 = vpop.f32.mrb[0].mxu0
  %2400 = vdwg.mxu0
  %2402 = vrot.lane.b32.xlu0 %v2230, 32
  %v2403 = vpop.permute.xlu0 %2402
  %v2404 = vsel %vm242, %v2403, 0
  %2406 = vmatprep.subr.mxu0 0.0
  %2407 = vmatpush1.msra.mxu0 %v38
  %2408 = vmatprep.subr.mxu0 0.0
  %2409 = vmatpush1.msra.mxu0 %v39
  %2410 = vmatprep.subr.mxu0 0.0
  %2411 = vmatpush1.msra.mxu0 %v40
  %2412 = vmatprep.subr.mxu0 0.0
  %2413 = vmatpush1.msra.mxu0 %v41
  %2414 = vmatprep.subr.mxu0 0.0
  %2415 = vmatpush1.msra.mxu0 0.0
  %2416 = vmatprep.subr.mxu0 0.0
  %2417 = vmatpush1.msra.mxu0 0.0
  %2418 = vmatprep.subr.mxu0 0.0
  %2419 = vmatpush1.msra.mxu0 0.0
  %2420 = vmatprep.subr.mxu0 0.0
  %2421 = vmatpush1.msra.mxu0 0.0
  %2422 = vmatprep.subr.mxu0 0.0
  %2423 = vmatpush1.msra.mxu0 0.0
  %2424 = vmatprep.subr.mxu0 0.0
  %2425 = vmatpush1.msra.mxu0 0.0
  %2426 = vmatprep.subr.mxu0 0.0
  %2427 = vmatpush1.msra.mxu0 0.0
  %2428 = vmatprep.subr.mxu0 0.0
  %2429 = vmatpush1.msra.mxu0 0.0
  %2430 = vmatprep.subr.mxu0 0.0
  %2431 = vmatpush1.msra.mxu0 0.0
  %2432 = vmatprep.subr.mxu0 0.0
  %2433 = vmatpush1.msra.mxu0 0.0
  %2434 = vmatprep.subr.mxu0 0.0
  %2435 = vmatpush1.msra.mxu0 0.0
  %2436 = vmatprep.subr.mxu0 0.0
  %2437 = vmatpush1.msra.mxu0 0.0
  %2438 = vmatprep.subr.mxu0 0.0
  %2439 = vmatpush1.msra.mxu0 0.0
  %2440 = vmatprep.subr.mxu0 0.0
  %2441 = vmatpush1.msra.mxu0 0.0
  %2442 = vmatprep.subr.mxu0 0.0
  %2443 = vmatpush1.msra.mxu0 0.0
  %2444 = vmatprep.subr.mxu0 0.0
  %2445 = vmatpush1.msra.mxu0 0.0
  %2446 = vmatprep.subr.mxu0 0.0
  %2447 = vmatpush1.msra.mxu0 0.0
  %2448 = vmatprep.subr.mxu0 0.0
  %2449 = vmatpush1.msra.mxu0 0.0
  %2450 = vmatprep.subr.mxu0 0.0
  %2451 = vmatpush1.msra.mxu0 0.0
  %2452 = vmatprep.subr.mxu0 0.0
  %2453 = vmatpush1.msra.mxu0 0.0
  %2454 = vmatprep.subr.mxu0 0.0
  %2455 = vmatpush1.msra.mxu0 0.0
  %2456 = vmatprep.subr.mxu0 0.0
  %2457 = vmatpush1.msra.mxu0 0.0
  %2458 = vmatprep.subr.mxu0 0.0
  %2459 = vmatpush1.msra.mxu0 0.0
  %2460 = vmatprep.subr.mxu0 0.0
  %2461 = vmatpush1.msra.mxu0 0.0
  %2462 = vmatprep.subr.mxu0 0.0
  %2463 = vmatpush1.msra.mxu0 0.0
  %2464 = vmatprep.subr.mxu0 0.0
  %2465 = vmatpush1.msra.mxu0 0.0
  %2466 = vmatprep.subr.mxu0 0.0
  %2467 = vmatpush1.msra.mxu0 0.0
  %2468 = vmatprep.subr.mxu0 0.0
  %2469 = vmatpush1.msra.mxu0 0.0
  %2470 = vmatprep.mubr.f32.mxu0 0.0
  %2471 = vmatmul.mubr.f32.gmra.mrb[0].mxu0 %v2404
  %v2472 = vpop.f32.mrb[0].mxu0
  %v2473 = vadd.f32 0.0, %v2472
  %v2474 = vpop.f32.mrb[0].mxu0
  %2475 = vdwg.mxu0
  %v2476 = vadd.f32 %v2398, %v2473
  %v2477 = vxor.u32 %v2476, 2147483648
  %v2478 = vmul.f32 %v2477, 1.442695
  %v2479 = vpow.pop %v2478
  %v2480 = vadd.f32 %v2479, 1.0
  %v2481 = vrcp.pop %v2480
  %v2482 = vmul.f32 1.0, %v2481
  %v2483 = vtanh.pop %v2476
  %v2484 = vmul.f32 %v2482, %v2224
  %2486 = vrot.lane.b32.xlu0 %v2483, 64
  %v2487 = vpop.permute.xlu0 %2486
  %v2489 = vmul.f32 %v2482, %v2487
  %2491 = vrot.lane.b32.xlu0 %v2489, 32
  %v2492 = vpop.permute.xlu0 %2491
  %v2494 = vadd.f32 %v2484, %v2492
  %v2495 = vtanh.pop %v2494
  %2497 = vrot.lane.b32.xlu0 %v2495, 64
  %v2498 = vpop.permute.xlu0 %2497
  %v2500 = vmul.f32 %v2482, %v2498
  %2502 = vrot.lane.b32.xlu0 %v2500, 32
  %v2503 = vpop.permute.xlu0 %2502
  %v2504 = vsel %vm242, %v2503, 0
  %2506 = vmatprep.subr.mxu0 0.0
  %2507 = vmatpush1.msra.mxu0 %v65
  %2508 = vmatprep.subr.mxu0 0.0
  %2509 = vmatpush1.msra.mxu0 %v66
  %2510 = vmatprep.subr.mxu0 0.0
  %2511 = vmatpush1.msra.mxu0 %v67
  %2512 = vmatprep.subr.mxu0 0.0
  %2513 = vmatpush1.msra.mxu0 %v68
  %2514 = vmatprep.subr.mxu0 0.0
  %2515 = vmatpush1.msra.mxu0 0.0
  %2516 = vmatprep.subr.mxu0 0.0
  %2517 = vmatpush1.msra.mxu0 0.0
  %2518 = vmatprep.subr.mxu0 0.0
  %2519 = vmatpush1.msra.mxu0 0.0
  %2520 = vmatprep.subr.mxu0 0.0
  %2521 = vmatpush1.msra.mxu0 0.0
  %2522 = vmatprep.subr.mxu0 0.0
  %2523 = vmatpush1.msra.mxu0 0.0
  %2524 = vmatprep.subr.mxu0 0.0
  %2525 = vmatpush1.msra.mxu0 0.0
  %2526 = vmatprep.subr.mxu0 0.0
  %2527 = vmatpush1.msra.mxu0 0.0
  %2528 = vmatprep.subr.mxu0 0.0
  %2529 = vmatpush1.msra.mxu0 0.0
  %2530 = vmatprep.subr.mxu0 0.0
  %2531 = vmatpush1.msra.mxu0 0.0
  %2532 = vmatprep.subr.mxu0 0.0
  %2533 = vmatpush1.msra.mxu0 0.0
  %2534 = vmatprep.subr.mxu0 0.0
  %2535 = vmatpush1.msra.mxu0 0.0
  %2536 = vmatprep.subr.mxu0 0.0
  %2537 = vmatpush1.msra.mxu0 0.0
  %2538 = vmatprep.subr.mxu0 0.0
  %2539 = vmatpush1.msra.mxu0 0.0
  %2540 = vmatprep.subr.mxu0 0.0
  %2541 = vmatpush1.msra.mxu0 0.0
  %2542 = vmatprep.subr.mxu0 0.0
  %2543 = vmatpush1.msra.mxu0 0.0
  %2544 = vmatprep.subr.mxu0 0.0
  %2545 = vmatpush1.msra.mxu0 0.0
  %2546 = vmatprep.subr.mxu0 0.0
  %2547 = vmatpush1.msra.mxu0 0.0
  %2548 = vmatprep.subr.mxu0 0.0
  %2549 = vmatpush1.msra.mxu0 0.0
  %2550 = vmatprep.subr.mxu0 0.0
  %2551 = vmatpush1.msra.mxu0 0.0
  %2552 = vmatprep.subr.mxu0 0.0
  %2553 = vmatpush1.msra.mxu0 0.0
  %2554 = vmatprep.subr.mxu0 0.0
  %2555 = vmatpush1.msra.mxu0 0.0
  %2556 = vmatprep.subr.mxu0 0.0
  %2557 = vmatpush1.msra.mxu0 0.0
  %2558 = vmatprep.subr.mxu0 0.0
  %2559 = vmatpush1.msra.mxu0 0.0
  %2560 = vmatprep.subr.mxu0 0.0
  %2561 = vmatpush1.msra.mxu0 0.0
  %2562 = vmatprep.subr.mxu0 0.0
  %2563 = vmatpush1.msra.mxu0 0.0
  %2564 = vmatprep.subr.mxu0 0.0
  %2565 = vmatpush1.msra.mxu0 0.0
  %2566 = vmatprep.subr.mxu0 0.0
  %2567 = vmatpush1.msra.mxu0 0.0
  %2568 = vmatprep.subr.mxu0 0.0
  %2569 = vmatpush1.msra.mxu0 0.0
  %2570 = vmatprep.mubr.f32.mxu0 0.0
  %2571 = vmatmul.mubr.f32.gmra.mrb[0].mxu0 %v2504
  %v2572 = vpop.f32.mrb[0].mxu0
  %v2573 = vadd.f32 %v74, %v2572
  %v2574 = vpop.f32.mrb[0].mxu0
  %2575 = vdwg.mxu0
  %2576 = vst.msk [vmem:[%s7] sm:$0xff] %vm91, %v2573
  %2577 = vmatprep.subr.mxu0 0.0
  %2578 = vmatpush1.msra.mxu0 %v34
  %2579 = vmatprep.subr.mxu0 0.0
  %2580 = vmatpush1.msra.mxu0 %v35
  %2581 = vmatprep.subr.mxu0 0.0
  %2582 = vmatpush1.msra.mxu0 %v36
  %2583 = vmatprep.subr.mxu0 0.0
  %2584 = vmatpush1.msra.mxu0 %v37
  %2585 = vmatprep.subr.mxu0 0.0
  %2586 = vmatpush1.msra.mxu0 0.0
  %2587 = vmatprep.subr.mxu0 0.0
  %2588 = vmatpush1.msra.mxu0 0.0
  %2589 = vmatprep.subr.mxu0 0.0
  %2590 = vmatpush1.msra.mxu0 0.0
  %2591 = vmatprep.subr.mxu0 0.0
  %2592 = vmatpush1.msra.mxu0 0.0
  %2593 = vmatprep.subr.mxu0 0.0
  %2594 = vmatpush1.msra.mxu0 0.0
  %2595 = vmatprep.subr.mxu0 0.0
  %2596 = vmatpush1.msra.mxu0 0.0
  %2597 = vmatprep.subr.mxu0 0.0
  %2598 = vmatpush1.msra.mxu0 0.0
  %2599 = vmatprep.subr.mxu0 0.0
  %2600 = vmatpush1.msra.mxu0 0.0
  %2601 = vmatprep.subr.mxu0 0.0
  %2602 = vmatpush1.msra.mxu0 0.0
  %2603 = vmatprep.subr.mxu0 0.0
  %2604 = vmatpush1.msra.mxu0 0.0
  %2605 = vmatprep.subr.mxu0 0.0
  %2606 = vmatpush1.msra.mxu0 0.0
  %2607 = vmatprep.subr.mxu0 0.0
  %2608 = vmatpush1.msra.mxu0 0.0
  %2609 = vmatprep.subr.mxu0 0.0
  %2610 = vmatpush1.msra.mxu0 0.0
  %2611 = vmatprep.subr.mxu0 0.0
  %2612 = vmatpush1.msra.mxu0 0.0
  %2613 = vmatprep.subr.mxu0 0.0
  %2614 = vmatpush1.msra.mxu0 0.0
  %2615 = vmatprep.subr.mxu0 0.0
  %2616 = vmatpush1.msra.mxu0 0.0
  %2617 = vmatprep.subr.mxu0 0.0
  %2618 = vmatpush1.msra.mxu0 0.0
  %2619 = vmatprep.subr.mxu0 0.0
  %2620 = vmatpush1.msra.mxu0 0.0
  %2621 = vmatprep.subr.mxu0 0.0
  %2622 = vmatpush1.msra.mxu0 0.0
  %2623 = vmatprep.subr.mxu0 0.0
  %2624 = vmatpush1.msra.mxu0 0.0
  %2625 = vmatprep.subr.mxu0 0.0
  %2626 = vmatpush1.msra.mxu0 0.0
  %2627 = vmatprep.subr.mxu0 0.0
  %2628 = vmatpush1.msra.mxu0 0.0
  %2629 = vmatprep.subr.mxu0 0.0
  %2630 = vmatpush1.msra.mxu0 0.0
  %2631 = vmatprep.subr.mxu0 0.0
  %2632 = vmatpush1.msra.mxu0 0.0
  %2633 = vmatprep.subr.mxu0 0.0
  %2634 = vmatpush1.msra.mxu0 0.0
  %2635 = vmatprep.subr.mxu0 0.0
  %2636 = vmatpush1.msra.mxu0 0.0
  %2637 = vmatprep.subr.mxu0 0.0
  %2638 = vmatpush1.msra.mxu0 0.0
  %2639 = vmatprep.subr.mxu0 0.0
  %2640 = vmatpush1.msra.mxu0 0.0
  %2641 = vmatprep.mubr.f32.mxu0 0.0
  %2642 = vmatmul.mubr.f32.gmra.mrb[0].mxu0 %v2329
  %v2643 = vpop.f32.mrb[0].mxu0
  %v2644 = vadd.f32 0.0, %v2643
  %v2645 = vpop.f32.mrb[0].mxu0
  %2646 = vdwg.mxu0
  %v2647 = vadd.f32 %v59, %v2644
  %v2648 = vxor.u32 %v2647, 2147483648
  %v2649 = vmul.f32 %v2648, 1.442695
  %v2650 = vpow.pop %v2649
  %v2651 = vadd.f32 %v2650, 1.0
  %v2652 = vrcp.pop %v2651
  %v2653 = vmul.f32 1.0, %v2652
  %v2654 = vtanh.pop %v2647
  %v2655 = vmul.f32 %v2653, %v2319
  %2657 = vrot.lane.b32.xlu0 %v2654, 64
  %v2658 = vpop.permute.xlu0 %2657
  %v2660 = vmul.f32 %v2653, %v2658
  %2662 = vrot.lane.b32.xlu0 %v2660, 32
  %v2663 = vpop.permute.xlu0 %2662
  %v2665 = vadd.f32 %v2655, %v2663
  %v2666 = vtanh.pop %v2665
  %2668 = vrot.lane.b32.xlu0 %v2666, 64
  %v2669 = vpop.permute.xlu0 %2668
  %v2671 = vmul.f32 %v2653, %v2669
  %2673 = vrot.lane.b32.xlu0 %v2671, 32
  %v2674 = vpop.permute.xlu0 %2673
  %v2675 = vsel %vm242, %v2674, 0
  %2677 = vmatprep.subr.mxu0 0.0
  %2678 = vmatpush1.msra.mxu0 %v46
  %2679 = vmatprep.subr.mxu0 0.0
  %2680 = vmatpush1.msra.mxu0 %v47
  %2681 = vmatprep.subr.mxu0 0.0
  %2682 = vmatpush1.msra.mxu0 %v48
  %2683 = vmatprep.subr.mxu0 0.0
  %2684 = vmatpush1.msra.mxu0 %v49
  %2685 = vmatprep.subr.mxu0 0.0
  %2686 = vmatpush1.msra.mxu0 0.0
  %2687 = vmatprep.subr.mxu0 0.0
  %2688 = vmatpush1.msra.mxu0 0.0
  %2689 = vmatprep.subr.mxu0 0.0
  %2690 = vmatpush1.msra.mxu0 0.0
  %2691 = vmatprep.subr.mxu0 0.0
  %2692 = vmatpush1.msra.mxu0 0.0
  %2693 = vmatprep.subr.mxu0 0.0
  %2694 = vmatpush1.msra.mxu0 0.0
  %2695 = vmatprep.subr.mxu0 0.0
  %2696 = vmatpush1.msra.mxu0 0.0
  %2697 = vmatprep.subr.mxu0 0.0
  %2698 = vmatpush1.msra.mxu0 0.0
  %2699 = vmatprep.subr.mxu0 0.0
  %2700 = vmatpush1.msra.mxu0 0.0
  %2701 = vmatprep.subr.mxu0 0.0
  %2702 = vmatpush1.msra.mxu0 0.0
  %2703 = vmatprep.subr.mxu0 0.0
  %2704 = vmatpush1.msra.mxu0 0.0
  %2705 = vmatprep.subr.mxu0 0.0
  %2706 = vmatpush1.msra.mxu0 0.0
  %2707 = vmatprep.subr.mxu0 0.0
  %2708 = vmatpush1.msra.mxu0 0.0
  %2709 = vmatprep.subr.mxu0 0.0
  %2710 = vmatpush1.msra.mxu0 0.0
  %2711 = vmatprep.subr.mxu0 0.0
  %2712 = vmatpush1.msra.mxu0 0.0
  %2713 = vmatprep.subr.mxu0 0.0
  %2714 = vmatpush1.msra.mxu0 0.0
  %2715 = vmatprep.subr.mxu0 0.0
  %2716 = vmatpush1.msra.mxu0 0.0
  %2717 = vmatprep.subr.mxu0 0.0
  %2718 = vmatpush1.msra.mxu0 0.0
  %2719 = vmatprep.subr.mxu0 0.0
  %2720 = vmatpush1.msra.mxu0 0.0
  %2721 = vmatprep.subr.mxu0 0.0
  %2722 = vmatpush1.msra.mxu0 0.0
  %2723 = vmatprep.subr.mxu0 0.0
  %2724 = vmatpush1.msra.mxu0 0.0
  %2725 = vmatprep.subr.mxu0 0.0
  %2726 = vmatpush1.msra.mxu0 0.0
  %2727 = vmatprep.subr.mxu0 0.0
  %2728 = vmatpush1.msra.mxu0 0.0
  %2729 = vmatprep.subr.mxu0 0.0
  %2730 = vmatpush1.msra.mxu0 0.0
  %2731 = vmatprep.subr.mxu0 0.0
  %2732 = vmatpush1.msra.mxu0 0.0
  %2733 = vmatprep.subr.mxu0 0.0
  %2734 = vmatpush1.msra.mxu0 0.0
  %2735 = vmatprep.subr.mxu0 0.0
  %2736 = vmatpush1.msra.mxu0 0.0
  %2737 = vmatprep.subr.mxu0 0.0
  %2738 = vmatpush1.msra.mxu0 0.0
  %2739 = vmatprep.subr.mxu0 0.0
  %2740 = vmatpush1.msra.mxu0 0.0
  %2741 = vmatprep.mubr.f32.mxu0 0.0
  %2742 = vmatmul.mubr.f32.gmra.mrb[0].mxu0 %v2675
  %v2743 = vpop.f32.mrb[0].mxu0
  %v2744 = vadd.f32 %v64, %v2743
  %v2745 = vpop.f32.mrb[0].mxu0
  %2746 = vdwg.mxu0
  %2747 = vmatprep.subr.mxu0 0.0
  %2748 = vmatpush1.msra.mxu0 %v38
  %2749 = vmatprep.subr.mxu0 0.0
  %2750 = vmatpush1.msra.mxu0 %v39
  %2751 = vmatprep.subr.mxu0 0.0
  %2752 = vmatpush1.msra.mxu0 %v40
  %2753 = vmatprep.subr.mxu0 0.0
  %2754 = vmatpush1.msra.mxu0 %v41
  %2755 = vmatprep.subr.mxu0 0.0
  %2756 = vmatpush1.msra.mxu0 0.0
  %2757 = vmatprep.subr.mxu0 0.0
  %2758 = vmatpush1.msra.mxu0 0.0
  %2759 = vmatprep.subr.mxu0 0.0
  %2760 = vmatpush1.msra.mxu0 0.0
  %2761 = vmatprep.subr.mxu0 0.0
  %2762 = vmatpush1.msra.mxu0 0.0
  %2763 = vmatprep.subr.mxu0 0.0
  %2764 = vmatpush1.msra.mxu0 0.0
  %2765 = vmatprep.subr.mxu0 0.0
  %2766 = vmatpush1.msra.mxu0 0.0
  %2767 = vmatprep.subr.mxu0 0.0
  %2768 = vmatpush1.msra.mxu0 0.0
  %2769 = vmatprep.subr.mxu0 0.0
  %2770 = vmatpush1.msra.mxu0 0.0
  %2771 = vmatprep.subr.mxu0 0.0
  %2772 = vmatpush1.msra.mxu0 0.0
  %2773 = vmatprep.subr.mxu0 0.0
  %2774 = vmatpush1.msra.mxu0 0.0
  %2775 = vmatprep.subr.mxu0 0.0
  %2776 = vmatpush1.msra.mxu0 0.0
  %2777 = vmatprep.subr.mxu0 0.0
  %2778 = vmatpush1.msra.mxu0 0.0
  %2779 = vmatprep.subr.mxu0 0.0
  %2780 = vmatpush1.msra.mxu0 0.0
  %2781 = vmatprep.subr.mxu0 0.0
  %2782 = vmatpush1.msra.mxu0 0.0
  %2783 = vmatprep.subr.mxu0 0.0
  %2784 = vmatpush1.msra.mxu0 0.0
  %2785 = vmatprep.subr.mxu0 0.0
  %2786 = vmatpush1.msra.mxu0 0.0
  %2787 = vmatprep.subr.mxu0 0.0
  %2788 = vmatpush1.msra.mxu0 0.0
  %2789 = vmatprep.subr.mxu0 0.0
  %2790 = vmatpush1.msra.mxu0 0.0
  %2791 = vmatprep.subr.mxu0 0.0
  %2792 = vmatpush1.msra.mxu0 0.0
  %2793 = vmatprep.subr.mxu0 0.0
  %2794 = vmatpush1.msra.mxu0 0.0
  %2795 = vmatprep.subr.mxu0 0.0
  %2796 = vmatpush1.msra.mxu0 0.0
  %2797 = vmatprep.subr.mxu0 0.0
  %2798 = vmatpush1.msra.mxu0 0.0
  %2799 = vmatprep.subr.mxu0 0.0
  %2800 = vmatpush1.msra.mxu0 0.0
  %2801 = vmatprep.subr.mxu0 0.0
  %2802 = vmatpush1.msra.mxu0 0.0
  %2803 = vmatprep.subr.mxu0 0.0
  %2804 = vmatpush1.msra.mxu0 0.0
  %2805 = vmatprep.subr.mxu0 0.0
  %2806 = vmatpush1.msra.mxu0 0.0
  %2807 = vmatprep.subr.mxu0 0.0
  %2808 = vmatpush1.msra.mxu0 0.0
  %2809 = vmatprep.subr.mxu0 0.0
  %2810 = vmatpush1.msra.mxu0 0.0
  %2811 = vmatprep.mubr.f32.mxu0 0.0
  %2812 = vmatmul.mubr.f32.gmra.mrb[0].mxu0 %v2504
  %v2813 = vpop.f32.mrb[0].mxu0
  %v2814 = vadd.f32 0.0, %v2813
  %v2815 = vpop.f32.mrb[0].mxu0
  %2816 = vdwg.mxu0
  %v2817 = vadd.f32 %v2744, %v2814
  %v2818 = vxor.u32 %v2817, 2147483648
  %v2819 = vmul.f32 %v2818, 1.442695
  %v2820 = vpow.pop %v2819
  %v2821 = vadd.f32 %v2820, 1.0
  %v2822 = vrcp.pop %v2821
  %v2823 = vmul.f32 1.0, %v2822
  %v2824 = vtanh.pop %v2817
  %v2825 = vmul.f32 %v2823, %v2494
  %2827 = vrot.lane.b32.xlu0 %v2824, 64
  %v2828 = vpop.permute.xlu0 %2827
  %v2830 = vmul.f32 %v2823, %v2828
  %2832 = vrot.lane.b32.xlu0 %v2830, 32
  %v2833 = vpop.permute.xlu0 %2832
  %v2835 = vadd.f32 %v2825, %v2833
  %v2836 = vtanh.pop %v2835
  %2838 = vrot.lane.b32.xlu0 %v2836, 64
  %v2839 = vpop.permute.xlu0 %2838
  %v2841 = vmul.f32 %v2823, %v2839
  %2843 = vrot.lane.b32.xlu0 %v2841, 32
  %v2844 = vpop.permute.xlu0 %2843
  %v2845 = vsel %vm242, %v2844, 0
  %2847 = vmatprep.subr.mxu0 0.0
  %2848 = vmatpush1.msra.mxu0 %v65
  %2849 = vmatprep.subr.mxu0 0.0
  %2850 = vmatpush1.msra.mxu0 %v66
  %2851 = vmatprep.subr.mxu0 0.0
  %2852 = vmatpush1.msra.mxu0 %v67
  %2853 = vmatprep.subr.mxu0 0.0
  %2854 = vmatpush1.msra.mxu0 %v68
  %2855 = vmatprep.subr.mxu0 0.0
  %2856 = vmatpush1.msra.mxu0 0.0
  %2857 = vmatprep.subr.mxu0 0.0
  %2858 = vmatpush1.msra.mxu0 0.0
  %2859 = vmatprep.subr.mxu0 0.0
  %2860 = vmatpush1.msra.mxu0 0.0
  %2861 = vmatprep.subr.mxu0 0.0
  %2862 = vmatpush1.msra.mxu0 0.0
  %2863 = vmatprep.subr.mxu0 0.0
  %2864 = vmatpush1.msra.mxu0 0.0
  %2865 = vmatprep.subr.mxu0 0.0
  %2866 = vmatpush1.msra.mxu0 0.0
  %2867 = vmatprep.subr.mxu0 0.0
  %2868 = vmatpush1.msra.mxu0 0.0
  %2869 = vmatprep.subr.mxu0 0.0
  %2870 = vmatpush1.msra.mxu0 0.0
  %2871 = vmatprep.subr.mxu0 0.0
  %2872 = vmatpush1.msra.mxu0 0.0
  %2873 = vmatprep.subr.mxu0 0.0
  %2874 = vmatpush1.msra.mxu0 0.0
  %2875 = vmatprep.subr.mxu0 0.0
  %2876 = vmatpush1.msra.mxu0 0.0
  %2877 = vmatprep.subr.mxu0 0.0
  %2878 = vmatpush1.msra.mxu0 0.0
  %2879 = vmatprep.subr.mxu0 0.0
  %2880 = vmatpush1.msra.mxu0 0.0
  %2881 = vmatprep.subr.mxu0 0.0
  %2882 = vmatpush1.msra.mxu0 0.0
  %2883 = vmatprep.subr.mxu0 0.0
  %2884 = vmatpush1.msra.mxu0 0.0
  %2885 = vmatprep.subr.mxu0 0.0
  %2886 = vmatpush1.msra.mxu0 0.0
  %2887 = vmatprep.subr.mxu0 0.0
  %2888 = vmatpush1.msra.mxu0 0.0
  %2889 = vmatprep.subr.mxu0 0.0
  %2890 = vmatpush1.msra.mxu0 0.0
  %2891 = vmatprep.subr.mxu0 0.0
  %2892 = vmatpush1.msra.mxu0 0.0
  %2893 = vmatprep.subr.mxu0 0.0
  %2894 = vmatpush1.msra.mxu0 0.0
  %2895 = vmatprep.subr.mxu0 0.0
  %2896 = vmatpush1.msra.mxu0 0.0
  %2897 = vmatprep.subr.mxu0 0.0
  %2898 = vmatpush1.msra.mxu0 0.0
  %2899 = vmatprep.subr.mxu0 0.0
  %2900 = vmatpush1.msra.mxu0 0.0
  %2901 = vmatprep.subr.mxu0 0.0
  %2902 = vmatpush1.msra.mxu0 0.0
  %2903 = vmatprep.subr.mxu0 0.0
  %2904 = vmatpush1.msra.mxu0 0.0
  %2905 = vmatprep.subr.mxu0 0.0
  %2906 = vmatpush1.msra.mxu0 0.0
  %2907 = vmatprep.subr.mxu0 0.0
  %2908 = vmatpush1.msra.mxu0 0.0
  %2909 = vmatprep.subr.mxu0 0.0
  %2910 = vmatpush1.msra.mxu0 0.0
  %2911 = vmatprep.mubr.f32.mxu0 0.0
  %2912 = vmatmul.mubr.f32.gmra.mrb[0].mxu0 %v2845
  %v2913 = vpop.f32.mrb[0].mxu0
  %v2914 = vadd.f32 %v74, %v2913
  %v2915 = vpop.f32.mrb[0].mxu0
  %2916 = vdwg.mxu0
  %2918 = vrot.lane.b32.xlu0 %v2914, 16
  %v2919 = vpop.permute.xlu0 %2918
  %vm2921 = vcmask 261248
  %2922 = vst.msk [vmem:[%s7] sm:$0xff] %vm2921, %v2919
  %2923 = vmatprep.subr.mxu0 0.0
  %2924 = vmatpush1.msra.mxu0 %v34
  %2925 = vmatprep.subr.mxu0 0.0
  %2926 = vmatpush1.msra.mxu0 %v35
  %2927 = vmatprep.subr.mxu0 0.0
  %2928 = vmatpush1.msra.mxu0 %v36
  %2929 = vmatprep.subr.mxu0 0.0
  %2930 = vmatpush1.msra.mxu0 %v37
  %2931 = vmatprep.subr.mxu0 0.0
  %2932 = vmatpush1.msra.mxu0 0.0
  %2933 = vmatprep.subr.mxu0 0.0
  %2934 = vmatpush1.msra.mxu0 0.0
  %2935 = vmatprep.subr.mxu0 0.0
  %2936 = vmatpush1.msra.mxu0 0.0
  %2937 = vmatprep.subr.mxu0 0.0
  %2938 = vmatpush1.msra.mxu0 0.0
  %2939 = vmatprep.subr.mxu0 0.0
  %2940 = vmatpush1.msra.mxu0 0.0
  %2941 = vmatprep.subr.mxu0 0.0
  %2942 = vmatpush1.msra.mxu0 0.0
  %2943 = vmatprep.subr.mxu0 0.0
  %2944 = vmatpush1.msra.mxu0 0.0
  %2945 = vmatprep.subr.mxu0 0.0
  %2946 = vmatpush1.msra.mxu0 0.0
  %2947 = vmatprep.subr.mxu0 0.0
  %2948 = vmatpush1.msra.mxu0 0.0
  %2949 = vmatprep.subr.mxu0 0.0
  %2950 = vmatpush1.msra.mxu0 0.0
  %2951 = vmatprep.subr.mxu0 0.0
  %2952 = vmatpush1.msra.mxu0 0.0
  %2953 = vmatprep.subr.mxu0 0.0
  %2954 = vmatpush1.msra.mxu0 0.0
  %2955 = vmatprep.subr.mxu0 0.0
  %2956 = vmatpush1.msra.mxu0 0.0
  %2957 = vmatprep.subr.mxu0 0.0
  %2958 = vmatpush1.msra.mxu0 0.0
  %2959 = vmatprep.subr.mxu0 0.0
  %2960 = vmatpush1.msra.mxu0 0.0
  %2961 = vmatprep.subr.mxu0 0.0
  %2962 = vmatpush1.msra.mxu0 0.0
  %2963 = vmatprep.subr.mxu0 0.0
  %2964 = vmatpush1.msra.mxu0 0.0
  %2965 = vmatprep.subr.mxu0 0.0
  %2966 = vmatpush1.msra.mxu0 0.0
  %2967 = vmatprep.subr.mxu0 0.0
  %2968 = vmatpush1.msra.mxu0 0.0
  %2969 = vmatprep.subr.mxu0 0.0
  %2970 = vmatpush1.msra.mxu0 0.0
  %2971 = vmatprep.subr.mxu0 0.0
  %2972 = vmatpush1.msra.mxu0 0.0
  %2973 = vmatprep.subr.mxu0 0.0
  %2974 = vmatpush1.msra.mxu0 0.0
  %2975 = vmatprep.subr.mxu0 0.0
  %2976 = vmatpush1.msra.mxu0 0.0
  %2977 = vmatprep.subr.mxu0 0.0
  %2978 = vmatpush1.msra.mxu0 0.0
  %2979 = vmatprep.subr.mxu0 0.0
  %2980 = vmatpush1.msra.mxu0 0.0
  %2981 = vmatprep.subr.mxu0 0.0
  %2982 = vmatpush1.msra.mxu0 0.0
  %2983 = vmatprep.subr.mxu0 0.0
  %2984 = vmatpush1.msra.mxu0 0.0
  %2985 = vmatprep.subr.mxu0 0.0
  %2986 = vmatpush1.msra.mxu0 0.0
  %2987 = vmatprep.mubr.f32.mxu0 0.0
  %2988 = vmatmul.mubr.f32.gmra.mrb[0].mxu0 %v2675
  %v2989 = vpop.f32.mrb[0].mxu0
  %v2990 = vadd.f32 0.0, %v2989
  %v2991 = vpop.f32.mrb[0].mxu0
  %2992 = vdwg.mxu0
  %v2993 = vadd.f32 %v59, %v2990
  %v2994 = vxor.u32 %v2993, 2147483648
  %v2995 = vmul.f32 %v2994, 1.442695
  %v2996 = vpow.pop %v2995
  %v2997 = vadd.f32 %v2996, 1.0
  %v2998 = vrcp.pop %v2997
  %v2999 = vmul.f32 1.0, %v2998
  %v3000 = vtanh.pop %v2993
  %v3001 = vmul.f32 %v2999, %v2665
  %3003 = vrot.lane.b32.xlu0 %v3000, 64
  %v3004 = vpop.permute.xlu0 %3003
  %v3006 = vmul.f32 %v2999, %v3004
  %3008 = vrot.lane.b32.xlu0 %v3006, 32
  %v3009 = vpop.permute.xlu0 %3008
  %v3011 = vadd.f32 %v3001, %v3009
  %v3012 = vtanh.pop %v3011
  %3014 = vrot.lane.b32.xlu0 %v3012, 64
  %v3015 = vpop.permute.xlu0 %3014
  %v3017 = vmul.f32 %v2999, %v3015
  %3019 = vrot.lane.b32.xlu0 %v3017, 32
  %v3020 = vpop.permute.xlu0 %3019
  %v3021 = vsel %vm242, %v3020, 0
  %3023 = vmatprep.subr.mxu0 0.0
  %3024 = vmatpush1.msra.mxu0 %v46
  %3025 = vmatprep.subr.mxu0 0.0
  %3026 = vmatpush1.msra.mxu0 %v47
  %3027 = vmatprep.subr.mxu0 0.0
  %3028 = vmatpush1.msra.mxu0 %v48
  %3029 = vmatprep.subr.mxu0 0.0
  %3030 = vmatpush1.msra.mxu0 %v49
  %3031 = vmatprep.subr.mxu0 0.0
  %3032 = vmatpush1.msra.mxu0 0.0
  %3033 = vmatprep.subr.mxu0 0.0
  %3034 = vmatpush1.msra.mxu0 0.0
  %3035 = vmatprep.subr.mxu0 0.0
  %3036 = vmatpush1.msra.mxu0 0.0
  %3037 = vmatprep.subr.mxu0 0.0
  %3038 = vmatpush1.msra.mxu0 0.0
  %3039 = vmatprep.subr.mxu0 0.0
  %3040 = vmatpush1.msra.mxu0 0.0
  %3041 = vmatprep.subr.mxu0 0.0
  %3042 = vmatpush1.msra.mxu0 0.0
  %3043 = vmatprep.subr.mxu0 0.0
  %3044 = vmatpush1.msra.mxu0 0.0
  %3045 = vmatprep.subr.mxu0 0.0
  %3046 = vmatpush1.msra.mxu0 0.0
  %3047 = vmatprep.subr.mxu0 0.0
  %3048 = vmatpush1.msra.mxu0 0.0
  %3049 = vmatprep.subr.mxu0 0.0
  %3050 = vmatpush1.msra.mxu0 0.0
  %3051 = vmatprep.subr.mxu0 0.0
  %3052 = vmatpush1.msra.mxu0 0.0
  %3053 = vmatprep.subr.mxu0 0.0
  %3054 = vmatpush1.msra.mxu0 0.0
  %3055 = vmatprep.subr.mxu0 0.0
  %3056 = vmatpush1.msra.mxu0 0.0
  %3057 = vmatprep.subr.mxu0 0.0
  %3058 = vmatpush1.msra.mxu0 0.0
  %3059 = vmatprep.subr.mxu0 0.0
  %3060 = vmatpush1.msra.mxu0 0.0
  %3061 = vmatprep.subr.mxu0 0.0
  %3062 = vmatpush1.msra.mxu0 0.0
  %3063 = vmatprep.subr.mxu0 0.0
  %3064 = vmatpush1.msra.mxu0 0.0
  %3065 = vmatprep.subr.mxu0 0.0
  %3066 = vmatpush1.msra.mxu0 0.0
  %3067 = vmatprep.subr.mxu0 0.0
  %3068 = vmatpush1.msra.mxu0 0.0
  %3069 = vmatprep.subr.mxu0 0.0
  %3070 = vmatpush1.msra.mxu0 0.0
  %3071 = vmatprep.subr.mxu0 0.0
  %3072 = vmatpush1.msra.mxu0 0.0
  %3073 = vmatprep.subr.mxu0 0.0
  %3074 = vmatpush1.msra.mxu0 0.0
  %3075 = vmatprep.subr.mxu0 0.0
  %3076 = vmatpush1.msra.mxu0 0.0
  %3077 = vmatprep.subr.mxu0 0.0
  %3078 = vmatpush1.msra.mxu0 0.0
  %3079 = vmatprep.subr.mxu0 0.0
  %3080 = vmatpush1.msra.mxu0 0.0
  %3081 = vmatprep.subr.mxu0 0.0
  %3082 = vmatpush1.msra.mxu0 0.0
  %3083 = vmatprep.subr.mxu0 0.0
  %3084 = vmatpush1.msra.mxu0 0.0
  %3085 = vmatprep.subr.mxu0 0.0
  %3086 = vmatpush1.msra.mxu0 0.0
  %3087 = vmatprep.mubr.f32.mxu0 0.0
  %3088 = vmatmul.mubr.f32.gmra.mrb[0].mxu0 %v3021
  %v3089 = vpop.f32.mrb[0].mxu0
  %v3090 = vadd.f32 %v64, %v3089
  %v3091 = vpop.f32.mrb[0].mxu0
  %3092 = vdwg.mxu0
  %3093 = vmatprep.subr.mxu0 0.0
  %3094 = vmatpush1.msra.mxu0 %v38
  %3095 = vmatprep.subr.mxu0 0.0
  %3096 = vmatpush1.msra.mxu0 %v39
  %3097 = vmatprep.subr.mxu0 0.0
  %3098 = vmatpush1.msra.mxu0 %v40
  %3099 = vmatprep.subr.mxu0 0.0
  %3100 = vmatpush1.msra.mxu0 %v41
  %3101 = vmatprep.subr.mxu0 0.0
  %3102 = vmatpush1.msra.mxu0 0.0
  %3103 = vmatprep.subr.mxu0 0.0
  %3104 = vmatpush1.msra.mxu0 0.0
  %3105 = vmatprep.subr.mxu0 0.0
  %3106 = vmatpush1.msra.mxu0 0.0
  %3107 = vmatprep.subr.mxu0 0.0
  %3108 = vmatpush1.msra.mxu0 0.0
  %3109 = vmatprep.subr.mxu0 0.0
  %3110 = vmatpush1.msra.mxu0 0.0
  %3111 = vmatprep.subr.mxu0 0.0
  %3112 = vmatpush1.msra.mxu0 0.0
  %3113 = vmatprep.subr.mxu0 0.0
  %3114 = vmatpush1.msra.mxu0 0.0
  %3115 = vmatprep.subr.mxu0 0.0
  %3116 = vmatpush1.msra.mxu0 0.0
  %3117 = vmatprep.subr.mxu0 0.0
  %3118 = vmatpush1.msra.mxu0 0.0
  %3119 = vmatprep.subr.mxu0 0.0
  %3120 = vmatpush1.msra.mxu0 0.0
  %3121 = vmatprep.subr.mxu0 0.0
  %3122 = vmatpush1.msra.mxu0 0.0
  %3123 = vmatprep.subr.mxu0 0.0
  %3124 = vmatpush1.msra.mxu0 0.0
  %3125 = vmatprep.subr.mxu0 0.0
  %3126 = vmatpush1.msra.mxu0 0.0
  %3127 = vmatprep.subr.mxu0 0.0
  %3128 = vmatpush1.msra.mxu0 0.0
  %3129 = vmatprep.subr.mxu0 0.0
  %3130 = vmatpush1.msra.mxu0 0.0
  %3131 = vmatprep.subr.mxu0 0.0
  %3132 = vmatpush1.msra.mxu0 0.0
  %3133 = vmatprep.subr.mxu0 0.0
  %3134 = vmatpush1.msra.mxu0 0.0
  %3135 = vmatprep.subr.mxu0 0.0
  %3136 = vmatpush1.msra.mxu0 0.0
  %3137 = vmatprep.subr.mxu0 0.0
  %3138 = vmatpush1.msra.mxu0 0.0
  %3139 = vmatprep.subr.mxu0 0.0
  %3140 = vmatpush1.msra.mxu0 0.0
  %3141 = vmatprep.subr.mxu0 0.0
  %3142 = vmatpush1.msra.mxu0 0.0
  %3143 = vmatprep.subr.mxu0 0.0
  %3144 = vmatpush1.msra.mxu0 0.0
  %3145 = vmatprep.subr.mxu0 0.0
  %3146 = vmatpush1.msra.mxu0 0.0
  %3147 = vmatprep.subr.mxu0 0.0
  %3148 = vmatpush1.msra.mxu0 0.0
  %3149 = vmatprep.subr.mxu0 0.0
  %3150 = vmatpush1.msra.mxu0 0.0
  %3151 = vmatprep.subr.mxu0 0.0
  %3152 = vmatpush1.msra.mxu0 0.0
  %3153 = vmatprep.subr.mxu0 0.0
  %3154 = vmatpush1.msra.mxu0 0.0
  %3155 = vmatprep.subr.mxu0 0.0
  %3156 = vmatpush1.msra.mxu0 0.0
  %3157 = vmatprep.mubr.f32.mxu0 0.0
  %3158 = vmatmul.mubr.f32.gmra.mrb[0].mxu0 %v2845
  %v3159 = vpop.f32.mrb[0].mxu0
  %v3160 = vadd.f32 0.0, %v3159
  %v3161 = vpop.f32.mrb[0].mxu0
  %3162 = vdwg.mxu0
  %v3163 = vadd.f32 %v3090, %v3160
  %v3164 = vxor.u32 %v3163, 2147483648
  %v3165 = vmul.f32 %v3164, 1.442695
  %v3166 = vpow.pop %v3165
  %v3167 = vadd.f32 %v3166, 1.0
  %v3168 = vrcp.pop %v3167
  %v3169 = vmul.f32 1.0, %v3168
  %v3170 = vtanh.pop %v3163
  %v3171 = vmul.f32 %v3169, %v2835
  %3173 = vrot.lane.b32.xlu0 %v3170, 64
  %v3174 = vpop.permute.xlu0 %3173
  %v3176 = vmul.f32 %v3169, %v3174
  %3178 = vrot.lane.b32.xlu0 %v3176, 32
  %v3179 = vpop.permute.xlu0 %3178
  %v3181 = vadd.f32 %v3171, %v3179
  %v3182 = vtanh.pop %v3181
  %3184 = vrot.lane.b32.xlu0 %v3182, 64
  %v3185 = vpop.permute.xlu0 %3184
  %v3187 = vmul.f32 %v3169, %v3185
  %3189 = vrot.lane.b32.xlu0 %v3187, 32
  %v3190 = vpop.permute.xlu0 %3189
  %v3191 = vsel %vm242, %v3190, 0
  %3193 = vmatprep.subr.mxu0 0.0
  %3194 = vmatpush1.msra.mxu0 %v65
  %3195 = vmatprep.subr.mxu0 0.0
  %3196 = vmatpush1.msra.mxu0 %v66
  %3197 = vmatprep.subr.mxu0 0.0
  %3198 = vmatpush1.msra.mxu0 %v67
  %3199 = vmatprep.subr.mxu0 0.0
  %3200 = vmatpush1.msra.mxu0 %v68
  %3201 = vmatprep.subr.mxu0 0.0
  %3202 = vmatpush1.msra.mxu0 0.0
  %3203 = vmatprep.subr.mxu0 0.0
  %3204 = vmatpush1.msra.mxu0 0.0
  %3205 = vmatprep.subr.mxu0 0.0
  %3206 = vmatpush1.msra.mxu0 0.0
  %3207 = vmatprep.subr.mxu0 0.0
  %3208 = vmatpush1.msra.mxu0 0.0
  %3209 = vmatprep.subr.mxu0 0.0
  %3210 = vmatpush1.msra.mxu0 0.0
  %3211 = vmatprep.subr.mxu0 0.0
  %3212 = vmatpush1.msra.mxu0 0.0
  %3213 = vmatprep.subr.mxu0 0.0
  %3214 = vmatpush1.msra.mxu0 0.0
  %3215 = vmatprep.subr.mxu0 0.0
  %3216 = vmatpush1.msra.mxu0 0.0
  %3217 = vmatprep.subr.mxu0 0.0
  %3218 = vmatpush1.msra.mxu0 0.0
  %3219 = vmatprep.subr.mxu0 0.0
  %3220 = vmatpush1.msra.mxu0 0.0
  %3221 = vmatprep.subr.mxu0 0.0
  %3222 = vmatpush1.msra.mxu0 0.0
  %3223 = vmatprep.subr.mxu0 0.0
  %3224 = vmatpush1.msra.mxu0 0.0
  %3225 = vmatprep.subr.mxu0 0.0
  %3226 = vmatpush1.msra.mxu0 0.0
  %3227 = vmatprep.subr.mxu0 0.0
  %3228 = vmatpush1.msra.mxu0 0.0
  %3229 = vmatprep.subr.mxu0 0.0
  %3230 = vmatpush1.msra.mxu0 0.0
  %3231 = vmatprep.subr.mxu0 0.0
  %3232 = vmatpush1.msra.mxu0 0.0
  %3233 = vmatprep.subr.mxu0 0.0
  %3234 = vmatpush1.msra.mxu0 0.0
  %3235 = vmatprep.subr.mxu0 0.0
  %3236 = vmatpush1.msra.mxu0 0.0
  %3237 = vmatprep.subr.mxu0 0.0
  %3238 = vmatpush1.msra.mxu0 0.0
  %3239 = vmatprep.subr.mxu0 0.0
  %3240 = vmatpush1.msra.mxu0 0.0
  %3241 = vmatprep.subr.mxu0 0.0
  %3242 = vmatpush1.msra.mxu0 0.0
  %3243 = vmatprep.subr.mxu0 0.0
  %3244 = vmatpush1.msra.mxu0 0.0
  %3245 = vmatprep.subr.mxu0 0.0
  %3246 = vmatpush1.msra.mxu0 0.0
  %3247 = vmatprep.subr.mxu0 0.0
  %3248 = vmatpush1.msra.mxu0 0.0
  %3249 = vmatprep.subr.mxu0 0.0
  %3250 = vmatpush1.msra.mxu0 0.0
  %3251 = vmatprep.subr.mxu0 0.0
  %3252 = vmatpush1.msra.mxu0 0.0
  %3253 = vmatprep.subr.mxu0 0.0
  %3254 = vmatpush1.msra.mxu0 0.0
  %3255 = vmatprep.subr.mxu0 0.0
  %3256 = vmatpush1.msra.mxu0 0.0
  %3257 = vmatprep.mubr.f32.mxu0 0.0
  %3258 = vmatmul.mubr.f32.gmra.mrb[0].mxu0 %v3191
  %v3259 = vpop.f32.mrb[0].mxu0
  %v3260 = vadd.f32 %v74, %v3259
  %v3261 = vpop.f32.mrb[0].mxu0
  %3262 = vdwg.mxu0
  %3264 = vrot.lane.b32.xlu0 %v3260, 32
  %v3265 = vpop.permute.xlu0 %3264
  %vm3267 = vcmask 392448
  %3268 = vst.msk [vmem:[%s7] sm:$0xff] %vm3267, %v3265
  %3269 = vmatprep.subr.mxu0 0.0
  %3270 = vmatpush1.msra.mxu0 %v34
  %3271 = vmatprep.subr.mxu0 0.0
  %3272 = vmatpush1.msra.mxu0 %v35
  %3273 = vmatprep.subr.mxu0 0.0
  %3274 = vmatpush1.msra.mxu0 %v36
  %3275 = vmatprep.subr.mxu0 0.0
  %3276 = vmatpush1.msra.mxu0 %v37
  %3277 = vmatprep.subr.mxu0 0.0
  %3278 = vmatpush1.msra.mxu0 0.0
  %3279 = vmatprep.subr.mxu0 0.0
  %3280 = vmatpush1.msra.mxu0 0.0
  %3281 = vmatprep.subr.mxu0 0.0
  %3282 = vmatpush1.msra.mxu0 0.0
  %3283 = vmatprep.subr.mxu0 0.0
  %3284 = vmatpush1.msra.mxu0 0.0
  %3285 = vmatprep.subr.mxu0 0.0
  %3286 = vmatpush1.msra.mxu0 0.0
  %3287 = vmatprep.subr.mxu0 0.0
  %3288 = vmatpush1.msra.mxu0 0.0
  %3289 = vmatprep.subr.mxu0 0.0
  %3290 = vmatpush1.msra.mxu0 0.0
  %3291 = vmatprep.subr.mxu0 0.0
  %3292 = vmatpush1.msra.mxu0 0.0
  %3293 = vmatprep.subr.mxu0 0.0
  %3294 = vmatpush1.msra.mxu0 0.0
  %3295 = vmatprep.subr.mxu0 0.0
  %3296 = vmatpush1.msra.mxu0 0.0
  %3297 = vmatprep.subr.mxu0 0.0
  %3298 = vmatpush1.msra.mxu0 0.0
  %3299 = vmatprep.subr.mxu0 0.0
  %3300 = vmatpush1.msra.mxu0 0.0
  %3301 = vmatprep.subr.mxu0 0.0
  %3302 = vmatpush1.msra.mxu0 0.0
  %3303 = vmatprep.subr.mxu0 0.0
  %3304 = vmatpush1.msra.mxu0 0.0
  %3305 = vmatprep.subr.mxu0 0.0
  %3306 = vmatpush1.msra.mxu0 0.0
  %3307 = vmatprep.subr.mxu0 0.0
  %3308 = vmatpush1.msra.mxu0 0.0
  %3309 = vmatprep.subr.mxu0 0.0
  %3310 = vmatpush1.msra.mxu0 0.0
  %3311 = vmatprep.subr.mxu0 0.0
  %3312 = vmatpush1.msra.mxu0 0.0
  %3313 = vmatprep.subr.mxu0 0.0
  %3314 = vmatpush1.msra.mxu0 0.0
  %3315 = vmatprep.subr.mxu0 0.0
  %3316 = vmatpush1.msra.mxu0 0.0
  %3317 = vmatprep.subr.mxu0 0.0
  %3318 = vmatpush1.msra.mxu0 0.0
  %3319 = vmatprep.subr.mxu0 0.0
  %3320 = vmatpush1.msra.mxu0 0.0
  %3321 = vmatprep.subr.mxu0 0.0
  %3322 = vmatpush1.msra.mxu0 0.0
  %3323 = vmatprep.subr.mxu0 0.0
  %3324 = vmatpush1.msra.mxu0 0.0
  %3325 = vmatprep.subr.mxu0 0.0
  %3326 = vmatpush1.msra.mxu0 0.0
  %3327 = vmatprep.subr.mxu0 0.0
  %3328 = vmatpush1.msra.mxu0 0.0
  %3329 = vmatprep.subr.mxu0 0.0
  %3330 = vmatpush1.msra.mxu0 0.0
  %3331 = vmatprep.subr.mxu0 0.0
  %3332 = vmatpush1.msra.mxu0 0.0
  %3333 = vmatprep.mubr.f32.mxu0 0.0
  %3334 = vmatmul.mubr.f32.gmra.mrb[0].mxu0 %v3021
  %v3335 = vpop.f32.mrb[0].mxu0
  %v3336 = vadd.f32 0.0, %v3335
  %v3337 = vpop.f32.mrb[0].mxu0
  %3338 = vdwg.mxu0
  %v3339 = vadd.f32 %v59, %v3336
  %v3340 = vxor.u32 %v3339, 2147483648
  %v3341 = vmul.f32 %v3340, 1.442695
  %v3342 = vpow.pop %v3341
  %v3343 = vadd.f32 %v3342, 1.0
  %v3344 = vrcp.pop %v3343
  %v3345 = vmul.f32 1.0, %v3344
  %v3346 = vtanh.pop %v3339
  %v3347 = vmul.f32 %v3345, %v3011
  %3349 = vrot.lane.b32.xlu0 %v3346, 64
  %v3350 = vpop.permute.xlu0 %3349
  %v3352 = vmul.f32 %v3345, %v3350
  %3354 = vrot.lane.b32.xlu0 %v3352, 32
  %v3355 = vpop.permute.xlu0 %3354
  %v3357 = vadd.f32 %v3347, %v3355
  %v3358 = vtanh.pop %v3357
  %3360 = vrot.lane.b32.xlu0 %v3358, 64
  %v3361 = vpop.permute.xlu0 %3360
  %v3363 = vmul.f32 %v3345, %v3361
  %3365 = vrot.lane.b32.xlu0 %v3363, 32
  %v3366 = vpop.permute.xlu0 %3365
  %v3367 = vsel %vm242, %v3366, 0
  %3369 = vmatprep.subr.mxu0 0.0
  %3370 = vmatpush1.msra.mxu0 %v46
  %3371 = vmatprep.subr.mxu0 0.0
  %3372 = vmatpush1.msra.mxu0 %v47
  %3373 = vmatprep.subr.mxu0 0.0
  %3374 = vmatpush1.msra.mxu0 %v48
  %3375 = vmatprep.subr.mxu0 0.0
  %3376 = vmatpush1.msra.mxu0 %v49
  %3377 = vmatprep.subr.mxu0 0.0
  %3378 = vmatpush1.msra.mxu0 0.0
  %3379 = vmatprep.subr.mxu0 0.0
  %3380 = vmatpush1.msra.mxu0 0.0
  %3381 = vmatprep.subr.mxu0 0.0
  %3382 = vmatpush1.msra.mxu0 0.0
  %3383 = vmatprep.subr.mxu0 0.0
  %3384 = vmatpush1.msra.mxu0 0.0
  %3385 = vmatprep.subr.mxu0 0.0
  %3386 = vmatpush1.msra.mxu0 0.0
  %3387 = vmatprep.subr.mxu0 0.0
  %3388 = vmatpush1.msra.mxu0 0.0
  %3389 = vmatprep.subr.mxu0 0.0
  %3390 = vmatpush1.msra.mxu0 0.0
  %3391 = vmatprep.subr.mxu0 0.0
  %3392 = vmatpush1.msra.mxu0 0.0
  %3393 = vmatprep.subr.mxu0 0.0
  %3394 = vmatpush1.msra.mxu0 0.0
  %3395 = vmatprep.subr.mxu0 0.0
  %3396 = vmatpush1.msra.mxu0 0.0
  %3397 = vmatprep.subr.mxu0 0.0
  %3398 = vmatpush1.msra.mxu0 0.0
  %3399 = vmatprep.subr.mxu0 0.0
  %3400 = vmatpush1.msra.mxu0 0.0
  %3401 = vmatprep.subr.mxu0 0.0
  %3402 = vmatpush1.msra.mxu0 0.0
  %3403 = vmatprep.subr.mxu0 0.0
  %3404 = vmatpush1.msra.mxu0 0.0
  %3405 = vmatprep.subr.mxu0 0.0
  %3406 = vmatpush1.msra.mxu0 0.0
  %3407 = vmatprep.subr.mxu0 0.0
  %3408 = vmatpush1.msra.mxu0 0.0
  %3409 = vmatprep.subr.mxu0 0.0
  %3410 = vmatpush1.msra.mxu0 0.0
  %3411 = vmatprep.subr.mxu0 0.0
  %3412 = vmatpush1.msra.mxu0 0.0
  %3413 = vmatprep.subr.mxu0 0.0
  %3414 = vmatpush1.msra.mxu0 0.0
  %3415 = vmatprep.subr.mxu0 0.0
  %3416 = vmatpush1.msra.mxu0 0.0
  %3417 = vmatprep.subr.mxu0 0.0
  %3418 = vmatpush1.msra.mxu0 0.0
  %3419 = vmatprep.subr.mxu0 0.0
  %3420 = vmatpush1.msra.mxu0 0.0
  %3421 = vmatprep.subr.mxu0 0.0
  %3422 = vmatpush1.msra.mxu0 0.0
  %3423 = vmatprep.subr.mxu0 0.0
  %3424 = vmatpush1.msra.mxu0 0.0
  %3425 = vmatprep.subr.mxu0 0.0
  %3426 = vmatpush1.msra.mxu0 0.0
  %3427 = vmatprep.subr.mxu0 0.0
  %3428 = vmatpush1.msra.mxu0 0.0
  %3429 = vmatprep.subr.mxu0 0.0
  %3430 = vmatpush1.msra.mxu0 0.0
  %3431 = vmatprep.subr.mxu0 0.0
  %3432 = vmatpush1.msra.mxu0 0.0
  %3433 = vmatprep.mubr.f32.mxu0 0.0
  %3434 = vmatmul.mubr.f32.gmra.mrb[0].mxu0 %v3367
  %v3435 = vpop.f32.mrb[0].mxu0
  %v3436 = vadd.f32 %v64, %v3435
  %v3437 = vpop.f32.mrb[0].mxu0
  %3438 = vdwg.mxu0
  %3439 = vmatprep.subr.mxu0 0.0
  %3440 = vmatpush1.msra.mxu0 %v38
  %3441 = vmatprep.subr.mxu0 0.0
  %3442 = vmatpush1.msra.mxu0 %v39
  %3443 = vmatprep.subr.mxu0 0.0
  %3444 = vmatpush1.msra.mxu0 %v40
  %3445 = vmatprep.subr.mxu0 0.0
  %3446 = vmatpush1.msra.mxu0 %v41
  %3447 = vmatprep.subr.mxu0 0.0
  %3448 = vmatpush1.msra.mxu0 0.0
  %3449 = vmatprep.subr.mxu0 0.0
  %3450 = vmatpush1.msra.mxu0 0.0
  %3451 = vmatprep.subr.mxu0 0.0
  %3452 = vmatpush1.msra.mxu0 0.0
  %3453 = vmatprep.subr.mxu0 0.0
  %3454 = vmatpush1.msra.mxu0 0.0
  %3455 = vmatprep.subr.mxu0 0.0
  %3456 = vmatpush1.msra.mxu0 0.0
  %3457 = vmatprep.subr.mxu0 0.0
  %3458 = vmatpush1.msra.mxu0 0.0
  %3459 = vmatprep.subr.mxu0 0.0
  %3460 = vmatpush1.msra.mxu0 0.0
  %3461 = vmatprep.subr.mxu0 0.0
  %3462 = vmatpush1.msra.mxu0 0.0
  %3463 = vmatprep.subr.mxu0 0.0
  %3464 = vmatpush1.msra.mxu0 0.0
  %3465 = vmatprep.subr.mxu0 0.0
  %3466 = vmatpush1.msra.mxu0 0.0
  %3467 = vmatprep.subr.mxu0 0.0
  %3468 = vmatpush1.msra.mxu0 0.0
  %3469 = vmatprep.subr.mxu0 0.0
  %3470 = vmatpush1.msra.mxu0 0.0
  %3471 = vmatprep.subr.mxu0 0.0
  %3472 = vmatpush1.msra.mxu0 0.0
  %3473 = vmatprep.subr.mxu0 0.0
  %3474 = vmatpush1.msra.mxu0 0.0
  %3475 = vmatprep.subr.mxu0 0.0
  %3476 = vmatpush1.msra.mxu0 0.0
  %3477 = vmatprep.subr.mxu0 0.0
  %3478 = vmatpush1.msra.mxu0 0.0
  %3479 = vmatprep.subr.mxu0 0.0
  %3480 = vmatpush1.msra.mxu0 0.0
  %3481 = vmatprep.subr.mxu0 0.0
  %3482 = vmatpush1.msra.mxu0 0.0
  %3483 = vmatprep.subr.mxu0 0.0
  %3484 = vmatpush1.msra.mxu0 0.0
  %3485 = vmatprep.subr.mxu0 0.0
  %3486 = vmatpush1.msra.mxu0 0.0
  %3487 = vmatprep.subr.mxu0 0.0
  %3488 = vmatpush1.msra.mxu0 0.0
  %3489 = vmatprep.subr.mxu0 0.0
  %3490 = vmatpush1.msra.mxu0 0.0
  %3491 = vmatprep.subr.mxu0 0.0
  %3492 = vmatpush1.msra.mxu0 0.0
  %3493 = vmatprep.subr.mxu0 0.0
  %3494 = vmatpush1.msra.mxu0 0.0
  %3495 = vmatprep.subr.mxu0 0.0
  %3496 = vmatpush1.msra.mxu0 0.0
  %3497 = vmatprep.subr.mxu0 0.0
  %3498 = vmatpush1.msra.mxu0 0.0
  %3499 = vmatprep.subr.mxu0 0.0
  %3500 = vmatpush1.msra.mxu0 0.0
  %3501 = vmatprep.subr.mxu0 0.0
  %3502 = vmatpush1.msra.mxu0 0.0
  %3503 = vmatprep.mubr.f32.mxu0 0.0
  %3504 = vmatmul.mubr.f32.gmra.mrb[0].mxu0 %v3191
  %v3505 = vpop.f32.mrb[0].mxu0
  %v3506 = vadd.f32 0.0, %v3505
  %v3507 = vpop.f32.mrb[0].mxu0
  %3508 = vdwg.mxu0
  %v3509 = vadd.f32 %v3436, %v3506
  %v3510 = vxor.u32 %v3509, 2147483648
  %v3511 = vmul.f32 %v3510, 1.442695
  %v3512 = vpow.pop %v3511
  %v3513 = vadd.f32 %v3512, 1.0
  %v3514 = vrcp.pop %v3513
  %v3515 = vmul.f32 1.0, %v3514
  %v3516 = vtanh.pop %v3509
  %v3517 = vmul.f32 %v3515, %v3181
  %3519 = vrot.lane.b32.xlu0 %v3516, 64
  %v3520 = vpop.permute.xlu0 %3519
  %v3522 = vmul.f32 %v3515, %v3520
  %3524 = vrot.lane.b32.xlu0 %v3522, 32
  %v3525 = vpop.permute.xlu0 %3524
  %v3527 = vadd.f32 %v3517, %v3525
  %v3528 = vtanh.pop %v3527
  %3530 = vrot.lane.b32.xlu0 %v3528, 64
  %v3531 = vpop.permute.xlu0 %3530
  %v3533 = vmul.f32 %v3515, %v3531
  %3535 = vrot.lane.b32.xlu0 %v3533, 32
  %v3536 = vpop.permute.xlu0 %3535
  %v3537 = vsel %vm242, %v3536, 0
  %3539 = vmatprep.subr.mxu0 0.0
  %3540 = vmatpush1.msra.mxu0 %v65
  %3541 = vmatprep.subr.mxu0 0.0
  %3542 = vmatpush1.msra.mxu0 %v66
  %3543 = vmatprep.subr.mxu0 0.0
  %3544 = vmatpush1.msra.mxu0 %v67
  %3545 = vmatprep.subr.mxu0 0.0
  %3546 = vmatpush1.msra.mxu0 %v68
  %3547 = vmatprep.subr.mxu0 0.0
  %3548 = vmatpush1.msra.mxu0 0.0
  %3549 = vmatprep.subr.mxu0 0.0
  %3550 = vmatpush1.msra.mxu0 0.0
  %3551 = vmatprep.subr.mxu0 0.0
  %3552 = vmatpush1.msra.mxu0 0.0
  %3553 = vmatprep.subr.mxu0 0.0
  %3554 = vmatpush1.msra.mxu0 0.0
  %3555 = vmatprep.subr.mxu0 0.0
  %3556 = vmatpush1.msra.mxu0 0.0
  %3557 = vmatprep.subr.mxu0 0.0
  %3558 = vmatpush1.msra.mxu0 0.0
  %3559 = vmatprep.subr.mxu0 0.0
  %3560 = vmatpush1.msra.mxu0 0.0
  %3561 = vmatprep.subr.mxu0 0.0
  %3562 = vmatpush1.msra.mxu0 0.0
  %3563 = vmatprep.subr.mxu0 0.0
  %3564 = vmatpush1.msra.mxu0 0.0
  %3565 = vmatprep.subr.mxu0 0.0
  %3566 = vmatpush1.msra.mxu0 0.0
  %3567 = vmatprep.subr.mxu0 0.0
  %3568 = vmatpush1.msra.mxu0 0.0
  %3569 = vmatprep.subr.mxu0 0.0
  %3570 = vmatpush1.msra.mxu0 0.0
  %3571 = vmatprep.subr.mxu0 0.0
  %3572 = vmatpush1.msra.mxu0 0.0
  %3573 = vmatprep.subr.mxu0 0.0
  %3574 = vmatpush1.msra.mxu0 0.0
  %3575 = vmatprep.subr.mxu0 0.0
  %3576 = vmatpush1.msra.mxu0 0.0
  %3577 = vmatprep.subr.mxu0 0.0
  %3578 = vmatpush1.msra.mxu0 0.0
  %3579 = vmatprep.subr.mxu0 0.0
  %3580 = vmatpush1.msra.mxu0 0.0
  %3581 = vmatprep.subr.mxu0 0.0
  %3582 = vmatpush1.msra.mxu0 0.0
  %3583 = vmatprep.subr.mxu0 0.0
  %3584 = vmatpush1.msra.mxu0 0.0
  %3585 = vmatprep.subr.mxu0 0.0
  %3586 = vmatpush1.msra.mxu0 0.0
  %3587 = vmatprep.subr.mxu0 0.0
  %3588 = vmatpush1.msra.mxu0 0.0
  %3589 = vmatprep.subr.mxu0 0.0
  %3590 = vmatpush1.msra.mxu0 0.0
  %3591 = vmatprep.subr.mxu0 0.0
  %3592 = vmatpush1.msra.mxu0 0.0
  %3593 = vmatprep.subr.mxu0 0.0
  %3594 = vmatpush1.msra.mxu0 0.0
  %3595 = vmatprep.subr.mxu0 0.0
  %3596 = vmatpush1.msra.mxu0 0.0
  %3597 = vmatprep.subr.mxu0 0.0
  %3598 = vmatpush1.msra.mxu0 0.0
  %3599 = vmatprep.subr.mxu0 0.0
  %3600 = vmatpush1.msra.mxu0 0.0
  %3601 = vmatprep.subr.mxu0 0.0
  %3602 = vmatpush1.msra.mxu0 0.0
  %3603 = vmatprep.mubr.f32.mxu0 0.0
  %3604 = vmatmul.mubr.f32.gmra.mrb[0].mxu0 %v3537
  %v3605 = vpop.f32.mrb[0].mxu0
  %v3606 = vadd.f32 %v74, %v3605
  %v3607 = vpop.f32.mrb[0].mxu0
  %3608 = vdwg.mxu0
  %3610 = vrot.lane.b32.xlu0 %v3606, 48
  %v3611 = vpop.permute.xlu0 %3610
  %vm3613 = vcmask 523648
  %3614 = vst.msk [vmem:[%s7] sm:$0xff] %vm3613, %v3611
  %3615 = vmatprep.subr.mxu0 0.0
  %3616 = vmatpush1.msra.mxu0 %v34
  %3617 = vmatprep.subr.mxu0 0.0
  %3618 = vmatpush1.msra.mxu0 %v35
  %3619 = vmatprep.subr.mxu0 0.0
  %3620 = vmatpush1.msra.mxu0 %v36
  %3621 = vmatprep.subr.mxu0 0.0
  %3622 = vmatpush1.msra.mxu0 %v37
  %3623 = vmatprep.subr.mxu0 0.0
  %3624 = vmatpush1.msra.mxu0 0.0
  %3625 = vmatprep.subr.mxu0 0.0
  %3626 = vmatpush1.msra.mxu0 0.0
  %3627 = vmatprep.subr.mxu0 0.0
  %3628 = vmatpush1.msra.mxu0 0.0
  %3629 = vmatprep.subr.mxu0 0.0
  %3630 = vmatpush1.msra.mxu0 0.0
  %3631 = vmatprep.subr.mxu0 0.0
  %3632 = vmatpush1.msra.mxu0 0.0
  %3633 = vmatprep.subr.mxu0 0.0
  %3634 = vmatpush1.msra.mxu0 0.0
  %3635 = vmatprep.subr.mxu0 0.0
  %3636 = vmatpush1.msra.mxu0 0.0
  %3637 = vmatprep.subr.mxu0 0.0
  %3638 = vmatpush1.msra.mxu0 0.0
  %3639 = vmatprep.subr.mxu0 0.0
  %3640 = vmatpush1.msra.mxu0 0.0
  %3641 = vmatprep.subr.mxu0 0.0
  %3642 = vmatpush1.msra.mxu0 0.0
  %3643 = vmatprep.subr.mxu0 0.0
  %3644 = vmatpush1.msra.mxu0 0.0
  %3645 = vmatprep.subr.mxu0 0.0
  %3646 = vmatpush1.msra.mxu0 0.0
  %3647 = vmatprep.subr.mxu0 0.0
  %3648 = vmatpush1.msra.mxu0 0.0
  %3649 = vmatprep.subr.mxu0 0.0
  %3650 = vmatpush1.msra.mxu0 0.0
  %3651 = vmatprep.subr.mxu0 0.0
  %3652 = vmatpush1.msra.mxu0 0.0
  %3653 = vmatprep.subr.mxu0 0.0
  %3654 = vmatpush1.msra.mxu0 0.0
  %3655 = vmatprep.subr.mxu0 0.0
  %3656 = vmatpush1.msra.mxu0 0.0
  %3657 = vmatprep.subr.mxu0 0.0
  %3658 = vmatpush1.msra.mxu0 0.0
  %3659 = vmatprep.subr.mxu0 0.0
  %3660 = vmatpush1.msra.mxu0 0.0
  %3661 = vmatprep.subr.mxu0 0.0
  %3662 = vmatpush1.msra.mxu0 0.0
  %3663 = vmatprep.subr.mxu0 0.0
  %3664 = vmatpush1.msra.mxu0 0.0
  %3665 = vmatprep.subr.mxu0 0.0
  %3666 = vmatpush1.msra.mxu0 0.0
  %3667 = vmatprep.subr.mxu0 0.0
  %3668 = vmatpush1.msra.mxu0 0.0
  %3669 = vmatprep.subr.mxu0 0.0
  %3670 = vmatpush1.msra.mxu0 0.0
  %3671 = vmatprep.subr.mxu0 0.0
  %3672 = vmatpush1.msra.mxu0 0.0
  %3673 = vmatprep.subr.mxu0 0.0
  %3674 = vmatpush1.msra.mxu0 0.0
  %3675 = vmatprep.subr.mxu0 0.0
  %3676 = vmatpush1.msra.mxu0 0.0
  %3677 = vmatprep.subr.mxu0 0.0
  %3678 = vmatpush1.msra.mxu0 0.0
  %3679 = vmatprep.mubr.f32.mxu0 0.0
  %3680 = vmatmul.mubr.f32.gmra.mrb[0].mxu0 %v3367
  %v3681 = vpop.f32.mrb[0].mxu0
  %v3682 = vadd.f32 0.0, %v3681
  %v3683 = vpop.f32.mrb[0].mxu0
  %3684 = vdwg.mxu0
  %v3685 = vadd.f32 %v59, %v3682
  %v3686 = vxor.u32 %v3685, 2147483648
  %v3687 = vmul.f32 %v3686, 1.442695
  %v3688 = vpow.pop %v3687
  %v3689 = vadd.f32 %v3688, 1.0
  %v3690 = vrcp.pop %v3689
  %v3691 = vmul.f32 1.0, %v3690
  %v3692 = vtanh.pop %v3685
  %v3693 = vmul.f32 %v3691, %v3357
  %3695 = vrot.lane.b32.xlu0 %v3692, 64
  %v3696 = vpop.permute.xlu0 %3695
  %v3698 = vmul.f32 %v3691, %v3696
  %3700 = vrot.lane.b32.xlu0 %v3698, 32
  %v3701 = vpop.permute.xlu0 %3700
  %v3703 = vadd.f32 %v3693, %v3701
  %v3704 = vtanh.pop %v3703
  %3706 = vrot.lane.b32.xlu0 %v3704, 64
  %v3707 = vpop.permute.xlu0 %3706
  %v3709 = vmul.f32 %v3691, %v3707
  %3711 = vrot.lane.b32.xlu0 %v3709, 32
  %v3712 = vpop.permute.xlu0 %3711
  %v3713 = vsel %vm242, %v3712, 0
  %3715 = vmatprep.subr.mxu0 0.0
  %3716 = vmatpush1.msra.mxu0 %v46
  %3717 = vmatprep.subr.mxu0 0.0
  %3718 = vmatpush1.msra.mxu0 %v47
  %3719 = vmatprep.subr.mxu0 0.0
  %3720 = vmatpush1.msra.mxu0 %v48
  %3721 = vmatprep.subr.mxu0 0.0
  %3722 = vmatpush1.msra.mxu0 %v49
  %3723 = vmatprep.subr.mxu0 0.0
  %3724 = vmatpush1.msra.mxu0 0.0
  %3725 = vmatprep.subr.mxu0 0.0
  %3726 = vmatpush1.msra.mxu0 0.0
  %3727 = vmatprep.subr.mxu0 0.0
  %3728 = vmatpush1.msra.mxu0 0.0
  %3729 = vmatprep.subr.mxu0 0.0
  %3730 = vmatpush1.msra.mxu0 0.0
  %3731 = vmatprep.subr.mxu0 0.0
  %3732 = vmatpush1.msra.mxu0 0.0
  %3733 = vmatprep.subr.mxu0 0.0
  %3734 = vmatpush1.msra.mxu0 0.0
  %3735 = vmatprep.subr.mxu0 0.0
  %3736 = vmatpush1.msra.mxu0 0.0
  %3737 = vmatprep.subr.mxu0 0.0
  %3738 = vmatpush1.msra.mxu0 0.0
  %3739 = vmatprep.subr.mxu0 0.0
  %3740 = vmatpush1.msra.mxu0 0.0
  %3741 = vmatprep.subr.mxu0 0.0
  %3742 = vmatpush1.msra.mxu0 0.0
  %3743 = vmatprep.subr.mxu0 0.0
  %3744 = vmatpush1.msra.mxu0 0.0
  %3745 = vmatprep.subr.mxu0 0.0
  %3746 = vmatpush1.msra.mxu0 0.0
  %3747 = vmatprep.subr.mxu0 0.0
  %3748 = vmatpush1.msra.mxu0 0.0
  %3749 = vmatprep.subr.mxu0 0.0
  %3750 = vmatpush1.msra.mxu0 0.0
  %3751 = vmatprep.subr.mxu0 0.0
  %3752 = vmatpush1.msra.mxu0 0.0
  %3753 = vmatprep.subr.mxu0 0.0
  %3754 = vmatpush1.msra.mxu0 0.0
  %3755 = vmatprep.subr.mxu0 0.0
  %3756 = vmatpush1.msra.mxu0 0.0
  %3757 = vmatprep.subr.mxu0 0.0
  %3758 = vmatpush1.msra.mxu0 0.0
  %3759 = vmatprep.subr.mxu0 0.0
  %3760 = vmatpush1.msra.mxu0 0.0
  %3761 = vmatprep.subr.mxu0 0.0
  %3762 = vmatpush1.msra.mxu0 0.0
  %3763 = vmatprep.subr.mxu0 0.0
  %3764 = vmatpush1.msra.mxu0 0.0
  %3765 = vmatprep.subr.mxu0 0.0
  %3766 = vmatpush1.msra.mxu0 0.0
  %3767 = vmatprep.subr.mxu0 0.0
  %3768 = vmatpush1.msra.mxu0 0.0
  %3769 = vmatprep.subr.mxu0 0.0
  %3770 = vmatpush1.msra.mxu0 0.0
  %3771 = vmatprep.subr.mxu0 0.0
  %3772 = vmatpush1.msra.mxu0 0.0
  %3773 = vmatprep.subr.mxu0 0.0
  %3774 = vmatpush1.msra.mxu0 0.0
  %3775 = vmatprep.subr.mxu0 0.0
  %3776 = vmatpush1.msra.mxu0 0.0
  %3777 = vmatprep.subr.mxu0 0.0
  %3778 = vmatpush1.msra.mxu0 0.0
  %3779 = vmatprep.mubr.f32.mxu0 0.0
  %3780 = vmatmul.mubr.f32.gmra.mrb[0].mxu0 %v3713
  %v3781 = vpop.f32.mrb[0].mxu0
  %v3782 = vadd.f32 %v64, %v3781
  %v3783 = vpop.f32.mrb[0].mxu0
  %3784 = vdwg.mxu0
  %3785 = vmatprep.subr.mxu0 0.0
  %3786 = vmatpush1.msra.mxu0 %v38
  %3787 = vmatprep.subr.mxu0 0.0
  %3788 = vmatpush1.msra.mxu0 %v39
  %3789 = vmatprep.subr.mxu0 0.0
  %3790 = vmatpush1.msra.mxu0 %v40
  %3791 = vmatprep.subr.mxu0 0.0
  %3792 = vmatpush1.msra.mxu0 %v41
  %3793 = vmatprep.subr.mxu0 0.0
  %3794 = vmatpush1.msra.mxu0 0.0
  %3795 = vmatprep.subr.mxu0 0.0
  %3796 = vmatpush1.msra.mxu0 0.0
  %3797 = vmatprep.subr.mxu0 0.0
  %3798 = vmatpush1.msra.mxu0 0.0
  %3799 = vmatprep.subr.mxu0 0.0
  %3800 = vmatpush1.msra.mxu0 0.0
  %3801 = vmatprep.subr.mxu0 0.0
  %3802 = vmatpush1.msra.mxu0 0.0
  %3803 = vmatprep.subr.mxu0 0.0
  %3804 = vmatpush1.msra.mxu0 0.0
  %3805 = vmatprep.subr.mxu0 0.0
  %3806 = vmatpush1.msra.mxu0 0.0
  %3807 = vmatprep.subr.mxu0 0.0
  %3808 = vmatpush1.msra.mxu0 0.0
  %3809 = vmatprep.subr.mxu0 0.0
  %3810 = vmatpush1.msra.mxu0 0.0
  %3811 = vmatprep.subr.mxu0 0.0
  %3812 = vmatpush1.msra.mxu0 0.0
  %3813 = vmatprep.subr.mxu0 0.0
  %3814 = vmatpush1.msra.mxu0 0.0
  %3815 = vmatprep.subr.mxu0 0.0
  %3816 = vmatpush1.msra.mxu0 0.0
  %3817 = vmatprep.subr.mxu0 0.0
  %3818 = vmatpush1.msra.mxu0 0.0
  %3819 = vmatprep.subr.mxu0 0.0
  %3820 = vmatpush1.msra.mxu0 0.0
  %3821 = vmatprep.subr.mxu0 0.0
  %3822 = vmatpush1.msra.mxu0 0.0
  %3823 = vmatprep.subr.mxu0 0.0
  %3824 = vmatpush1.msra.mxu0 0.0
  %3825 = vmatprep.subr.mxu0 0.0
  %3826 = vmatpush1.msra.mxu0 0.0
  %3827 = vmatprep.subr.mxu0 0.0
  %3828 = vmatpush1.msra.mxu0 0.0
  %3829 = vmatprep.subr.mxu0 0.0
  %3830 = vmatpush1.msra.mxu0 0.0
  %3831 = vmatprep.subr.mxu0 0.0
  %3832 = vmatpush1.msra.mxu0 0.0
  %3833 = vmatprep.subr.mxu0 0.0
  %3834 = vmatpush1.msra.mxu0 0.0
  %3835 = vmatprep.subr.mxu0 0.0
  %3836 = vmatpush1.msra.mxu0 0.0
  %3837 = vmatprep.subr.mxu0 0.0
  %3838 = vmatpush1.msra.mxu0 0.0
  %3839 = vmatprep.subr.mxu0 0.0
  %3840 = vmatpush1.msra.mxu0 0.0
  %3841 = vmatprep.subr.mxu0 0.0
  %3842 = vmatpush1.msra.mxu0 0.0
  %3843 = vmatprep.subr.mxu0 0.0
  %3844 = vmatpush1.msra.mxu0 0.0
  %3845 = vmatprep.subr.mxu0 0.0
  %3846 = vmatpush1.msra.mxu0 0.0
  %3847 = vmatprep.subr.mxu0 0.0
  %3848 = vmatpush1.msra.mxu0 0.0
  %3849 = vmatprep.mubr.f32.mxu0 0.0
  %3850 = vmatmul.mubr.f32.gmra.mrb[0].mxu0 %v3537
  %v3851 = vpop.f32.mrb[0].mxu0
  %v3852 = vadd.f32 0.0, %v3851
  %v3853 = vpop.f32.mrb[0].mxu0
  %3854 = vdwg.mxu0
  %v3855 = vadd.f32 %v3782, %v3852
  %v3856 = vxor.u32 %v3855, 2147483648
  %v3857 = vmul.f32 %v3856, 1.442695
  %v3858 = vpow.pop %v3857
  %v3859 = vadd.f32 %v3858, 1.0
  %v3860 = vrcp.pop %v3859
  %v3861 = vmul.f32 1.0, %v3860
  %v3862 = vtanh.pop %v3855
  %v3863 = vmul.f32 %v3861, %v3527
  %3865 = vrot.lane.b32.xlu0 %v3862, 64
  %v3866 = vpop.permute.xlu0 %3865
  %v3868 = vmul.f32 %v3861, %v3866
  %3870 = vrot.lane.b32.xlu0 %v3868, 32
  %v3871 = vpop.permute.xlu0 %3870
  %v3873 = vadd.f32 %v3863, %v3871
  %v3874 = vtanh.pop %v3873
  %3876 = vrot.lane.b32.xlu0 %v3874, 64
  %v3877 = vpop.permute.xlu0 %3876
  %v3879 = vmul.f32 %v3861, %v3877
  %3881 = vrot.lane.b32.xlu0 %v3879, 32
  %v3882 = vpop.permute.xlu0 %3881
  %v3883 = vsel %vm242, %v3882, 0
  %3885 = vmatprep.subr.mxu0 0.0
  %3886 = vmatpush1.msra.mxu0 %v65
  %3887 = vmatprep.subr.mxu0 0.0
  %3888 = vmatpush1.msra.mxu0 %v66
  %3889 = vmatprep.subr.mxu0 0.0
  %3890 = vmatpush1.msra.mxu0 %v67
  %3891 = vmatprep.subr.mxu0 0.0
  %3892 = vmatpush1.msra.mxu0 %v68
  %3893 = vmatprep.subr.mxu0 0.0
  %3894 = vmatpush1.msra.mxu0 0.0
  %3895 = vmatprep.subr.mxu0 0.0
  %3896 = vmatpush1.msra.mxu0 0.0
  %3897 = vmatprep.subr.mxu0 0.0
  %3898 = vmatpush1.msra.mxu0 0.0
  %3899 = vmatprep.subr.mxu0 0.0
  %3900 = vmatpush1.msra.mxu0 0.0
  %3901 = vmatprep.subr.mxu0 0.0
  %3902 = vmatpush1.msra.mxu0 0.0
  %3903 = vmatprep.subr.mxu0 0.0
  %3904 = vmatpush1.msra.mxu0 0.0
  %3905 = vmatprep.subr.mxu0 0.0
  %3906 = vmatpush1.msra.mxu0 0.0
  %3907 = vmatprep.subr.mxu0 0.0
  %3908 = vmatpush1.msra.mxu0 0.0
  %3909 = vmatprep.subr.mxu0 0.0
  %3910 = vmatpush1.msra.mxu0 0.0
  %3911 = vmatprep.subr.mxu0 0.0
  %3912 = vmatpush1.msra.mxu0 0.0
  %3913 = vmatprep.subr.mxu0 0.0
  %3914 = vmatpush1.msra.mxu0 0.0
  %3915 = vmatprep.subr.mxu0 0.0
  %3916 = vmatpush1.msra.mxu0 0.0
  %3917 = vmatprep.subr.mxu0 0.0
  %3918 = vmatpush1.msra.mxu0 0.0
  %3919 = vmatprep.subr.mxu0 0.0
  %3920 = vmatpush1.msra.mxu0 0.0
  %3921 = vmatprep.subr.mxu0 0.0
  %3922 = vmatpush1.msra.mxu0 0.0
  %3923 = vmatprep.subr.mxu0 0.0
  %3924 = vmatpush1.msra.mxu0 0.0
  %3925 = vmatprep.subr.mxu0 0.0
  %3926 = vmatpush1.msra.mxu0 0.0
  %3927 = vmatprep.subr.mxu0 0.0
  %3928 = vmatpush1.msra.mxu0 0.0
  %3929 = vmatprep.subr.mxu0 0.0
  %3930 = vmatpush1.msra.mxu0 0.0
  %3931 = vmatprep.subr.mxu0 0.0
  %3932 = vmatpush1.msra.mxu0 0.0
  %3933 = vmatprep.subr.mxu0 0.0
  %3934 = vmatpush1.msra.mxu0 0.0
  %3935 = vmatprep.subr.mxu0 0.0
  %3936 = vmatpush1.msra.mxu0 0.0
  %3937 = vmatprep.subr.mxu0 0.0
  %3938 = vmatpush1.msra.mxu0 0.0
  %3939 = vmatprep.subr.mxu0 0.0
  %3940 = vmatpush1.msra.mxu0 0.0
  %3941 = vmatprep.subr.mxu0 0.0
  %3942 = vmatpush1.msra.mxu0 0.0
  %3943 = vmatprep.subr.mxu0 0.0
  %3944 = vmatpush1.msra.mxu0 0.0
  %3945 = vmatprep.subr.mxu0 0.0
  %3946 = vmatpush1.msra.mxu0 0.0
  %3947 = vmatprep.subr.mxu0 0.0
  %3948 = vmatpush1.msra.mxu0 0.0
  %3949 = vmatprep.mubr.f32.mxu0 0.0
  %3950 = vmatmul.mubr.f32.gmra.mrb[0].mxu0 %v3883
  %v3951 = vpop.f32.mrb[0].mxu0
  %v3952 = vadd.f32 %v74, %v3951
  %v3953 = vpop.f32.mrb[0].mxu0
  %3954 = vdwg.mxu0
  %3956 = vrot.lane.b32.xlu0 %v3952, 64
  %v3957 = vpop.permute.xlu0 %3956
  %vm3959 = vcmask 654848
  %3960 = vst.msk [vmem:[%s7] sm:$0xff] %vm3959, %v3957
  %3961 = vmatprep.subr.mxu0 0.0
  %3962 = vmatpush1.msra.mxu0 %v34
  %3963 = vmatprep.subr.mxu0 0.0
  %3964 = vmatpush1.msra.mxu0 %v35
  %3965 = vmatprep.subr.mxu0 0.0
  %3966 = vmatpush1.msra.mxu0 %v36
  %3967 = vmatprep.subr.mxu0 0.0
  %3968 = vmatpush1.msra.mxu0 %v37
  %3969 = vmatprep.subr.mxu0 0.0
  %3970 = vmatpush1.msra.mxu0 0.0
  %3971 = vmatprep.subr.mxu0 0.0
  %3972 = vmatpush1.msra.mxu0 0.0
  %3973 = vmatprep.subr.mxu0 0.0
  %3974 = vmatpush1.msra.mxu0 0.0
  %3975 = vmatprep.subr.mxu0 0.0
  %3976 = vmatpush1.msra.mxu0 0.0
  %3977 = vmatprep.subr.mxu0 0.0
  %3978 = vmatpush1.msra.mxu0 0.0
  %3979 = vmatprep.subr.mxu0 0.0
  %3980 = vmatpush1.msra.mxu0 0.0
  %3981 = vmatprep.subr.mxu0 0.0
  %3982 = vmatpush1.msra.mxu0 0.0
  %3983 = vmatprep.subr.mxu0 0.0
  %3984 = vmatpush1.msra.mxu0 0.0
  %3985 = vmatprep.subr.mxu0 0.0
  %3986 = vmatpush1.msra.mxu0 0.0
  %3987 = vmatprep.subr.mxu0 0.0
  %3988 = vmatpush1.msra.mxu0 0.0
  %3989 = vmatprep.subr.mxu0 0.0
  %3990 = vmatpush1.msra.mxu0 0.0
  %3991 = vmatprep.subr.mxu0 0.0
  %3992 = vmatpush1.msra.mxu0 0.0
  %3993 = vmatprep.subr.mxu0 0.0
  %3994 = vmatpush1.msra.mxu0 0.0
  %3995 = vmatprep.subr.mxu0 0.0
  %3996 = vmatpush1.msra.mxu0 0.0
  %3997 = vmatprep.subr.mxu0 0.0
  %3998 = vmatpush1.msra.mxu0 0.0
  %3999 = vmatprep.subr.mxu0 0.0
  %4000 = vmatpush1.msra.mxu0 0.0
  %4001 = vmatprep.subr.mxu0 0.0
  %4002 = vmatpush1.msra.mxu0 0.0
  %4003 = vmatprep.subr.mxu0 0.0
  %4004 = vmatpush1.msra.mxu0 0.0
  %4005 = vmatprep.subr.mxu0 0.0
  %4006 = vmatpush1.msra.mxu0 0.0
  %4007 = vmatprep.subr.mxu0 0.0
  %4008 = vmatpush1.msra.mxu0 0.0
  %4009 = vmatprep.subr.mxu0 0.0
  %4010 = vmatpush1.msra.mxu0 0.0
  %4011 = vmatprep.subr.mxu0 0.0
  %4012 = vmatpush1.msra.mxu0 0.0
  %4013 = vmatprep.subr.mxu0 0.0
  %4014 = vmatpush1.msra.mxu0 0.0
  %4015 = vmatprep.subr.mxu0 0.0
  %4016 = vmatpush1.msra.mxu0 0.0
  %4017 = vmatprep.subr.mxu0 0.0
  %4018 = vmatpush1.msra.mxu0 0.0
  %4019 = vmatprep.subr.mxu0 0.0
  %4020 = vmatpush1.msra.mxu0 0.0
  %4021 = vmatprep.subr.mxu0 0.0
  %4022 = vmatpush1.msra.mxu0 0.0
  %4023 = vmatprep.subr.mxu0 0.0
  %4024 = vmatpush1.msra.mxu0 0.0
  %4025 = vmatprep.mubr.f32.mxu0 0.0
  %4026 = vmatmul.mubr.f32.gmra.mrb[0].mxu0 %v3713
  %v4027 = vpop.f32.mrb[0].mxu0
  %v4028 = vadd.f32 0.0, %v4027
  %v4029 = vpop.f32.mrb[0].mxu0
  %4030 = vdwg.mxu0
  %v4031 = vadd.f32 %v59, %v4028
  %v4032 = vxor.u32 %v4031, 2147483648
  %v4033 = vmul.f32 %v4032, 1.442695
  %v4034 = vpow.pop %v4033
  %v4035 = vadd.f32 %v4034, 1.0
  %v4036 = vrcp.pop %v4035
  %v4037 = vmul.f32 1.0, %v4036
  %v4038 = vtanh.pop %v4031
  %v4039 = vmul.f32 %v4037, %v3703
  %4041 = vrot.lane.b32.xlu0 %v4038, 64
  %v4042 = vpop.permute.xlu0 %4041
  %v4044 = vmul.f32 %v4037, %v4042
  %4046 = vrot.lane.b32.xlu0 %v4044, 32
  %v4047 = vpop.permute.xlu0 %4046
  %v4049 = vadd.f32 %v4039, %v4047
  %v4050 = vtanh.pop %v4049
  %4052 = vrot.lane.b32.xlu0 %v4050, 64
  %v4053 = vpop.permute.xlu0 %4052
  %v4055 = vmul.f32 %v4037, %v4053
  %4057 = vrot.lane.b32.xlu0 %v4055, 32
  %v4058 = vpop.permute.xlu0 %4057
  %v4059 = vsel %vm242, %v4058, 0
  %4061 = vmatprep.subr.mxu0 0.0
  %4062 = vmatpush1.msra.mxu0 %v46
  %4063 = vmatprep.subr.mxu0 0.0
  %4064 = vmatpush1.msra.mxu0 %v47
  %4065 = vmatprep.subr.mxu0 0.0
  %4066 = vmatpush1.msra.mxu0 %v48
  %4067 = vmatprep.subr.mxu0 0.0
  %4068 = vmatpush1.msra.mxu0 %v49
  %4069 = vmatprep.subr.mxu0 0.0
  %4070 = vmatpush1.msra.mxu0 0.0
  %4071 = vmatprep.subr.mxu0 0.0
  %4072 = vmatpush1.msra.mxu0 0.0
  %4073 = vmatprep.subr.mxu0 0.0
  %4074 = vmatpush1.msra.mxu0 0.0
  %4075 = vmatprep.subr.mxu0 0.0
  %4076 = vmatpush1.msra.mxu0 0.0
  %4077 = vmatprep.subr.mxu0 0.0
  %4078 = vmatpush1.msra.mxu0 0.0
  %4079 = vmatprep.subr.mxu0 0.0
  %4080 = vmatpush1.msra.mxu0 0.0
  %4081 = vmatprep.subr.mxu0 0.0
  %4082 = vmatpush1.msra.mxu0 0.0
  %4083 = vmatprep.subr.mxu0 0.0
  %4084 = vmatpush1.msra.mxu0 0.0
  %4085 = vmatprep.subr.mxu0 0.0
  %4086 = vmatpush1.msra.mxu0 0.0
  %4087 = vmatprep.subr.mxu0 0.0
  %4088 = vmatpush1.msra.mxu0 0.0
  %4089 = vmatprep.subr.mxu0 0.0
  %4090 = vmatpush1.msra.mxu0 0.0
  %4091 = vmatprep.subr.mxu0 0.0
  %4092 = vmatpush1.msra.mxu0 0.0
  %4093 = vmatprep.subr.mxu0 0.0
  %4094 = vmatpush1.msra.mxu0 0.0
  %4095 = vmatprep.subr.mxu0 0.0
  %4096 = vmatpush1.msra.mxu0 0.0
  %4097 = vmatprep.subr.mxu0 0.0
  %4098 = vmatpush1.msra.mxu0 0.0
  %4099 = vmatprep.subr.mxu0 0.0
  %4100 = vmatpush1.msra.mxu0 0.0
  %4101 = vmatprep.subr.mxu0 0.0
  %4102 = vmatpush1.msra.mxu0 0.0
  %4103 = vmatprep.subr.mxu0 0.0
  %4104 = vmatpush1.msra.mxu0 0.0
  %4105 = vmatprep.subr.mxu0 0.0
  %4106 = vmatpush1.msra.mxu0 0.0
  %4107 = vmatprep.subr.mxu0 0.0
  %4108 = vmatpush1.msra.mxu0 0.0
  %4109 = vmatprep.subr.mxu0 0.0
  %4110 = vmatpush1.msra.mxu0 0.0
  %4111 = vmatprep.subr.mxu0 0.0
  %4112 = vmatpush1.msra.mxu0 0.0
  %4113 = vmatprep.subr.mxu0 0.0
  %4114 = vmatpush1.msra.mxu0 0.0
  %4115 = vmatprep.subr.mxu0 0.0
  %4116 = vmatpush1.msra.mxu0 0.0
  %4117 = vmatprep.subr.mxu0 0.0
  %4118 = vmatpush1.msra.mxu0 0.0
  %4119 = vmatprep.subr.mxu0 0.0
  %4120 = vmatpush1.msra.mxu0 0.0
  %4121 = vmatprep.subr.mxu0 0.0
  %4122 = vmatpush1.msra.mxu0 0.0
  %4123 = vmatprep.subr.mxu0 0.0
  %4124 = vmatpush1.msra.mxu0 0.0
  %4125 = vmatprep.mubr.f32.mxu0 0.0
  %4126 = vmatmul.mubr.f32.gmra.mrb[0].mxu0 %v4059
  %v4127 = vpop.f32.mrb[0].mxu0
  %v4128 = vadd.f32 %v64, %v4127
  %v4129 = vpop.f32.mrb[0].mxu0
  %4130 = vdwg.mxu0
  %4131 = vmatprep.subr.mxu0 0.0
  %4132 = vmatpush1.msra.mxu0 %v38
  %4133 = vmatprep.subr.mxu0 0.0
  %4134 = vmatpush1.msra.mxu0 %v39
  %4135 = vmatprep.subr.mxu0 0.0
  %4136 = vmatpush1.msra.mxu0 %v40
  %4137 = vmatprep.subr.mxu0 0.0
  %4138 = vmatpush1.msra.mxu0 %v41
  %4139 = vmatprep.subr.mxu0 0.0
  %4140 = vmatpush1.msra.mxu0 0.0
  %4141 = vmatprep.subr.mxu0 0.0
  %4142 = vmatpush1.msra.mxu0 0.0
  %4143 = vmatprep.subr.mxu0 0.0
  %4144 = vmatpush1.msra.mxu0 0.0
  %4145 = vmatprep.subr.mxu0 0.0
  %4146 = vmatpush1.msra.mxu0 0.0
  %4147 = vmatprep.subr.mxu0 0.0
  %4148 = vmatpush1.msra.mxu0 0.0
  %4149 = vmatprep.subr.mxu0 0.0
  %4150 = vmatpush1.msra.mxu0 0.0
  %4151 = vmatprep.subr.mxu0 0.0
  %4152 = vmatpush1.msra.mxu0 0.0
  %4153 = vmatprep.subr.mxu0 0.0
  %4154 = vmatpush1.msra.mxu0 0.0
  %4155 = vmatprep.subr.mxu0 0.0
  %4156 = vmatpush1.msra.mxu0 0.0
  %4157 = vmatprep.subr.mxu0 0.0
  %4158 = vmatpush1.msra.mxu0 0.0
  %4159 = vmatprep.subr.mxu0 0.0
  %4160 = vmatpush1.msra.mxu0 0.0
  %4161 = vmatprep.subr.mxu0 0.0
  %4162 = vmatpush1.msra.mxu0 0.0
  %4163 = vmatprep.subr.mxu0 0.0
  %4164 = vmatpush1.msra.mxu0 0.0
  %4165 = vmatprep.subr.mxu0 0.0
  %4166 = vmatpush1.msra.mxu0 0.0
  %4167 = vmatprep.subr.mxu0 0.0
  %4168 = vmatpush1.msra.mxu0 0.0
  %4169 = vmatprep.subr.mxu0 0.0
  %4170 = vmatpush1.msra.mxu0 0.0
  %4171 = vmatprep.subr.mxu0 0.0
  %4172 = vmatpush1.msra.mxu0 0.0
  %4173 = vmatprep.subr.mxu0 0.0
  %4174 = vmatpush1.msra.mxu0 0.0
  %4175 = vmatprep.subr.mxu0 0.0
  %4176 = vmatpush1.msra.mxu0 0.0
  %4177 = vmatprep.subr.mxu0 0.0
  %4178 = vmatpush1.msra.mxu0 0.0
  %4179 = vmatprep.subr.mxu0 0.0
  %4180 = vmatpush1.msra.mxu0 0.0
  %4181 = vmatprep.subr.mxu0 0.0
  %4182 = vmatpush1.msra.mxu0 0.0
  %4183 = vmatprep.subr.mxu0 0.0
  %4184 = vmatpush1.msra.mxu0 0.0
  %4185 = vmatprep.subr.mxu0 0.0
  %4186 = vmatpush1.msra.mxu0 0.0
  %4187 = vmatprep.subr.mxu0 0.0
  %4188 = vmatpush1.msra.mxu0 0.0
  %4189 = vmatprep.subr.mxu0 0.0
  %4190 = vmatpush1.msra.mxu0 0.0
  %4191 = vmatprep.subr.mxu0 0.0
  %4192 = vmatpush1.msra.mxu0 0.0
  %4193 = vmatprep.subr.mxu0 0.0
  %4194 = vmatpush1.msra.mxu0 0.0
  %4195 = vmatprep.mubr.f32.mxu0 0.0
  %4196 = vmatmul.mubr.f32.gmra.mrb[0].mxu0 %v3883
  %v4197 = vpop.f32.mrb[0].mxu0
  %v4198 = vadd.f32 0.0, %v4197
  %v4199 = vpop.f32.mrb[0].mxu0
  %4200 = vdwg.mxu0
  %v4201 = vadd.f32 %v4128, %v4198
  %v4202 = vxor.u32 %v4201, 2147483648
  %v4203 = vmul.f32 %v4202, 1.442695
  %v4204 = vpow.pop %v4203
  %v4205 = vadd.f32 %v4204, 1.0
  %v4206 = vrcp.pop %v4205
  %v4207 = vmul.f32 1.0, %v4206
  %v4208 = vtanh.pop %v4201
  %v4209 = vmul.f32 %v4207, %v3873
  %4211 = vrot.lane.b32.xlu0 %v4208, 64
  %v4212 = vpop.permute.xlu0 %4211
  %v4214 = vmul.f32 %v4207, %v4212
  %4216 = vrot.lane.b32.xlu0 %v4214, 32
  %v4217 = vpop.permute.xlu0 %4216
  %v4219 = vadd.f32 %v4209, %v4217
  %v4220 = vtanh.pop %v4219
  %4222 = vrot.lane.b32.xlu0 %v4220, 64
  %v4223 = vpop.permute.xlu0 %4222
  %v4225 = vmul.f32 %v4207, %v4223
  %4227 = vrot.lane.b32.xlu0 %v4225, 32
  %v4228 = vpop.permute.xlu0 %4227
  %v4229 = vsel %vm242, %v4228, 0
  %4231 = vmatprep.subr.mxu0 0.0
  %4232 = vmatpush1.msra.mxu0 %v65
  %4233 = vmatprep.subr.mxu0 0.0
  %4234 = vmatpush1.msra.mxu0 %v66
  %4235 = vmatprep.subr.mxu0 0.0
  %4236 = vmatpush1.msra.mxu0 %v67
  %4237 = vmatprep.subr.mxu0 0.0
  %4238 = vmatpush1.msra.mxu0 %v68
  %4239 = vmatprep.subr.mxu0 0.0
  %4240 = vmatpush1.msra.mxu0 0.0
  %4241 = vmatprep.subr.mxu0 0.0
  %4242 = vmatpush1.msra.mxu0 0.0
  %4243 = vmatprep.subr.mxu0 0.0
  %4244 = vmatpush1.msra.mxu0 0.0
  %4245 = vmatprep.subr.mxu0 0.0
  %4246 = vmatpush1.msra.mxu0 0.0
  %4247 = vmatprep.subr.mxu0 0.0
  %4248 = vmatpush1.msra.mxu0 0.0
  %4249 = vmatprep.subr.mxu0 0.0
  %4250 = vmatpush1.msra.mxu0 0.0
  %4251 = vmatprep.subr.mxu0 0.0
  %4252 = vmatpush1.msra.mxu0 0.0
  %4253 = vmatprep.subr.mxu0 0.0
  %4254 = vmatpush1.msra.mxu0 0.0
  %4255 = vmatprep.subr.mxu0 0.0
  %4256 = vmatpush1.msra.mxu0 0.0
  %4257 = vmatprep.subr.mxu0 0.0
  %4258 = vmatpush1.msra.mxu0 0.0
  %4259 = vmatprep.subr.mxu0 0.0
  %4260 = vmatpush1.msra.mxu0 0.0
  %4261 = vmatprep.subr.mxu0 0.0
  %4262 = vmatpush1.msra.mxu0 0.0
  %4263 = vmatprep.subr.mxu0 0.0
  %4264 = vmatpush1.msra.mxu0 0.0
  %4265 = vmatprep.subr.mxu0 0.0
  %4266 = vmatpush1.msra.mxu0 0.0
  %4267 = vmatprep.subr.mxu0 0.0
  %4268 = vmatpush1.msra.mxu0 0.0
  %4269 = vmatprep.subr.mxu0 0.0
  %4270 = vmatpush1.msra.mxu0 0.0
  %4271 = vmatprep.subr.mxu0 0.0
  %4272 = vmatpush1.msra.mxu0 0.0
  %4273 = vmatprep.subr.mxu0 0.0
  %4274 = vmatpush1.msra.mxu0 0.0
  %4275 = vmatprep.subr.mxu0 0.0
  %4276 = vmatpush1.msra.mxu0 0.0
  %4277 = vmatprep.subr.mxu0 0.0
  %4278 = vmatpush1.msra.mxu0 0.0
  %4279 = vmatprep.subr.mxu0 0.0
  %4280 = vmatpush1.msra.mxu0 0.0
  %4281 = vmatprep.subr.mxu0 0.0
  %4282 = vmatpush1.msra.mxu0 0.0
  %4283 = vmatprep.subr.mxu0 0.0
  %4284 = vmatpush1.msra.mxu0 0.0
  %4285 = vmatprep.subr.mxu0 0.0
  %4286 = vmatpush1.msra.mxu0 0.0
  %4287 = vmatprep.subr.mxu0 0.0
  %4288 = vmatpush1.msra.mxu0 0.0
  %4289 = vmatprep.subr.mxu0 0.0
  %4290 = vmatpush1.msra.mxu0 0.0
  %4291 = vmatprep.subr.mxu0 0.0
  %4292 = vmatpush1.msra.mxu0 0.0
  %4293 = vmatprep.subr.mxu0 0.0
  %4294 = vmatpush1.msra.mxu0 0.0
  %4295 = vmatprep.mubr.f32.mxu0 0.0
  %4296 = vmatmul.mubr.f32.gmra.mrb[0].mxu0 %v4229
  %v4297 = vpop.f32.mrb[0].mxu0
  %v4298 = vadd.f32 %v74, %v4297
  %v4299 = vpop.f32.mrb[0].mxu0
  %4300 = vdwg.mxu0
  %4302 = vrot.lane.b32.xlu0 %v4298, 80
  %v4303 = vpop.permute.xlu0 %4302
  %vm4305 = vcmask 786048
  %4306 = vst.msk [vmem:[%s7] sm:$0xff] %vm4305, %v4303
  %4307 = vmatprep.subr.mxu0 0.0
  %4308 = vmatpush1.msra.mxu0 %v34
  %4309 = vmatprep.subr.mxu0 0.0
  %4310 = vmatpush1.msra.mxu0 %v35
  %4311 = vmatprep.subr.mxu0 0.0
  %4312 = vmatpush1.msra.mxu0 %v36
  %4313 = vmatprep.subr.mxu0 0.0
  %4314 = vmatpush1.msra.mxu0 %v37
  %4315 = vmatprep.subr.mxu0 0.0
  %4316 = vmatpush1.msra.mxu0 0.0
  %4317 = vmatprep.subr.mxu0 0.0
  %4318 = vmatpush1.msra.mxu0 0.0
  %4319 = vmatprep.subr.mxu0 0.0
  %4320 = vmatpush1.msra.mxu0 0.0
  %4321 = vmatprep.subr.mxu0 0.0
  %4322 = vmatpush1.msra.mxu0 0.0
  %4323 = vmatprep.subr.mxu0 0.0
  %4324 = vmatpush1.msra.mxu0 0.0
  %4325 = vmatprep.subr.mxu0 0.0
  %4326 = vmatpush1.msra.mxu0 0.0
  %4327 = vmatprep.subr.mxu0 0.0
  %4328 = vmatpush1.msra.mxu0 0.0
  %4329 = vmatprep.subr.mxu0 0.0
  %4330 = vmatpush1.msra.mxu0 0.0
  %4331 = vmatprep.subr.mxu0 0.0
  %4332 = vmatpush1.msra.mxu0 0.0
  %4333 = vmatprep.subr.mxu0 0.0
  %4334 = vmatpush1.msra.mxu0 0.0
  %4335 = vmatprep.subr.mxu0 0.0
  %4336 = vmatpush1.msra.mxu0 0.0
  %4337 = vmatprep.subr.mxu0 0.0
  %4338 = vmatpush1.msra.mxu0 0.0
  %4339 = vmatprep.subr.mxu0 0.0
  %4340 = vmatpush1.msra.mxu0 0.0
  %4341 = vmatprep.subr.mxu0 0.0
  %4342 = vmatpush1.msra.mxu0 0.0
  %4343 = vmatprep.subr.mxu0 0.0
  %4344 = vmatpush1.msra.mxu0 0.0
  %4345 = vmatprep.subr.mxu0 0.0
  %4346 = vmatpush1.msra.mxu0 0.0
  %4347 = vmatprep.subr.mxu0 0.0
  %4348 = vmatpush1.msra.mxu0 0.0
  %4349 = vmatprep.subr.mxu0 0.0
  %4350 = vmatpush1.msra.mxu0 0.0
  %4351 = vmatprep.subr.mxu0 0.0
  %4352 = vmatpush1.msra.mxu0 0.0
  %4353 = vmatprep.subr.mxu0 0.0
  %4354 = vmatpush1.msra.mxu0 0.0
  %4355 = vmatprep.subr.mxu0 0.0
  %4356 = vmatpush1.msra.mxu0 0.0
  %4357 = vmatprep.subr.mxu0 0.0
  %4358 = vmatpush1.msra.mxu0 0.0
  %4359 = vmatprep.subr.mxu0 0.0
  %4360 = vmatpush1.msra.mxu0 0.0
  %4361 = vmatprep.subr.mxu0 0.0
  %4362 = vmatpush1.msra.mxu0 0.0
  %4363 = vmatprep.subr.mxu0 0.0
  %4364 = vmatpush1.msra.mxu0 0.0
  %4365 = vmatprep.subr.mxu0 0.0
  %4366 = vmatpush1.msra.mxu0 0.0
  %4367 = vmatprep.subr.mxu0 0.0
  %4368 = vmatpush1.msra.mxu0 0.0
  %4369 = vmatprep.subr.mxu0 0.0
  %4370 = vmatpush1.msra.mxu0 0.0
  %4371 = vmatprep.mubr.f32.mxu0 0.0
  %4372 = vmatmul.mubr.f32.gmra.mrb[0].mxu0 %v4059
  %v4373 = vpop.f32.mrb[0].mxu0
  %v4374 = vadd.f32 0.0, %v4373
  %v4375 = vpop.f32.mrb[0].mxu0
  %4376 = vdwg.mxu0
  %v4377 = vadd.f32 %v59, %v4374
  %v4378 = vxor.u32 %v4377, 2147483648
  %v4379 = vmul.f32 %v4378, 1.442695
  %v4380 = vpow.pop %v4379
  %v4381 = vadd.f32 %v4380, 1.0
  %v4382 = vrcp.pop %v4381
  %v4383 = vmul.f32 1.0, %v4382
  %v4384 = vtanh.pop %v4377
  %v4385 = vmul.f32 %v4383, %v4049
  %4387 = vrot.lane.b32.xlu0 %v4384, 64
  %v4388 = vpop.permute.xlu0 %4387
  %v4390 = vmul.f32 %v4383, %v4388
  %4392 = vrot.lane.b32.xlu0 %v4390, 32
  %v4393 = vpop.permute.xlu0 %4392
  %v4395 = vadd.f32 %v4385, %v4393
  %v4396 = vtanh.pop %v4395
  %4398 = vrot.lane.b32.xlu0 %v4396, 64
  %v4399 = vpop.permute.xlu0 %4398
  %v4401 = vmul.f32 %v4383, %v4399
  %4403 = vrot.lane.b32.xlu0 %v4401, 32
  %v4404 = vpop.permute.xlu0 %4403
  %v4405 = vsel %vm242, %v4404, 0
  %4407 = vmatprep.subr.mxu0 0.0
  %4408 = vmatpush1.msra.mxu0 %v46
  %4409 = vmatprep.subr.mxu0 0.0
  %4410 = vmatpush1.msra.mxu0 %v47
  %4411 = vmatprep.subr.mxu0 0.0
  %4412 = vmatpush1.msra.mxu0 %v48
  %4413 = vmatprep.subr.mxu0 0.0
  %4414 = vmatpush1.msra.mxu0 %v49
  %4415 = vmatprep.subr.mxu0 0.0
  %4416 = vmatpush1.msra.mxu0 0.0
  %4417 = vmatprep.subr.mxu0 0.0
  %4418 = vmatpush1.msra.mxu0 0.0
  %4419 = vmatprep.subr.mxu0 0.0
  %4420 = vmatpush1.msra.mxu0 0.0
  %4421 = vmatprep.subr.mxu0 0.0
  %4422 = vmatpush1.msra.mxu0 0.0
  %4423 = vmatprep.subr.mxu0 0.0
  %4424 = vmatpush1.msra.mxu0 0.0
  %4425 = vmatprep.subr.mxu0 0.0
  %4426 = vmatpush1.msra.mxu0 0.0
  %4427 = vmatprep.subr.mxu0 0.0
  %4428 = vmatpush1.msra.mxu0 0.0
  %4429 = vmatprep.subr.mxu0 0.0
  %4430 = vmatpush1.msra.mxu0 0.0
  %4431 = vmatprep.subr.mxu0 0.0
  %4432 = vmatpush1.msra.mxu0 0.0
  %4433 = vmatprep.subr.mxu0 0.0
  %4434 = vmatpush1.msra.mxu0 0.0
  %4435 = vmatprep.subr.mxu0 0.0
  %4436 = vmatpush1.msra.mxu0 0.0
  %4437 = vmatprep.subr.mxu0 0.0
  %4438 = vmatpush1.msra.mxu0 0.0
  %4439 = vmatprep.subr.mxu0 0.0
  %4440 = vmatpush1.msra.mxu0 0.0
  %4441 = vmatprep.subr.mxu0 0.0
  %4442 = vmatpush1.msra.mxu0 0.0
  %4443 = vmatprep.subr.mxu0 0.0
  %4444 = vmatpush1.msra.mxu0 0.0
  %4445 = vmatprep.subr.mxu0 0.0
  %4446 = vmatpush1.msra.mxu0 0.0
  %4447 = vmatprep.subr.mxu0 0.0
  %4448 = vmatpush1.msra.mxu0 0.0
  %4449 = vmatprep.subr.mxu0 0.0
  %4450 = vmatpush1.msra.mxu0 0.0
  %4451 = vmatprep.subr.mxu0 0.0
  %4452 = vmatpush1.msra.mxu0 0.0
  %4453 = vmatprep.subr.mxu0 0.0
  %4454 = vmatpush1.msra.mxu0 0.0
  %4455 = vmatprep.subr.mxu0 0.0
  %4456 = vmatpush1.msra.mxu0 0.0
  %4457 = vmatprep.subr.mxu0 0.0
  %4458 = vmatpush1.msra.mxu0 0.0
  %4459 = vmatprep.subr.mxu0 0.0
  %4460 = vmatpush1.msra.mxu0 0.0
  %4461 = vmatprep.subr.mxu0 0.0
  %4462 = vmatpush1.msra.mxu0 0.0
  %4463 = vmatprep.subr.mxu0 0.0
  %4464 = vmatpush1.msra.mxu0 0.0
  %4465 = vmatprep.subr.mxu0 0.0
  %4466 = vmatpush1.msra.mxu0 0.0
  %4467 = vmatprep.subr.mxu0 0.0
  %4468 = vmatpush1.msra.mxu0 0.0
  %4469 = vmatprep.subr.mxu0 0.0
  %4470 = vmatpush1.msra.mxu0 0.0
  %4471 = vmatprep.mubr.f32.mxu0 0.0
  %4472 = vmatmul.mubr.f32.gmra.mrb[0].mxu0 %v4405
  %v4473 = vpop.f32.mrb[0].mxu0
  %v4474 = vadd.f32 %v64, %v4473
  %v4475 = vpop.f32.mrb[0].mxu0
  %4476 = vdwg.mxu0
  %4477 = vmatprep.subr.mxu0 0.0
  %4478 = vmatpush1.msra.mxu0 %v38
  %4479 = vmatprep.subr.mxu0 0.0
  %4480 = vmatpush1.msra.mxu0 %v39
  %4481 = vmatprep.subr.mxu0 0.0
  %4482 = vmatpush1.msra.mxu0 %v40
  %4483 = vmatprep.subr.mxu0 0.0
  %4484 = vmatpush1.msra.mxu0 %v41
  %4485 = vmatprep.subr.mxu0 0.0
  %4486 = vmatpush1.msra.mxu0 0.0
  %4487 = vmatprep.subr.mxu0 0.0
  %4488 = vmatpush1.msra.mxu0 0.0
  %4489 = vmatprep.subr.mxu0 0.0
  %4490 = vmatpush1.msra.mxu0 0.0
  %4491 = vmatprep.subr.mxu0 0.0
  %4492 = vmatpush1.msra.mxu0 0.0
  %4493 = vmatprep.subr.mxu0 0.0
  %4494 = vmatpush1.msra.mxu0 0.0
  %4495 = vmatprep.subr.mxu0 0.0
  %4496 = vmatpush1.msra.mxu0 0.0
  %4497 = vmatprep.subr.mxu0 0.0
  %4498 = vmatpush1.msra.mxu0 0.0
  %4499 = vmatprep.subr.mxu0 0.0
  %4500 = vmatpush1.msra.mxu0 0.0
  %4501 = vmatprep.subr.mxu0 0.0
  %4502 = vmatpush1.msra.mxu0 0.0
  %4503 = vmatprep.subr.mxu0 0.0
  %4504 = vmatpush1.msra.mxu0 0.0
  %4505 = vmatprep.subr.mxu0 0.0
  %4506 = vmatpush1.msra.mxu0 0.0
  %4507 = vmatprep.subr.mxu0 0.0
  %4508 = vmatpush1.msra.mxu0 0.0
  %4509 = vmatprep.subr.mxu0 0.0
  %4510 = vmatpush1.msra.mxu0 0.0
  %4511 = vmatprep.subr.mxu0 0.0
  %4512 = vmatpush1.msra.mxu0 0.0
  %4513 = vmatprep.subr.mxu0 0.0
  %4514 = vmatpush1.msra.mxu0 0.0
  %4515 = vmatprep.subr.mxu0 0.0
  %4516 = vmatpush1.msra.mxu0 0.0
  %4517 = vmatprep.subr.mxu0 0.0
  %4518 = vmatpush1.msra.mxu0 0.0
  %4519 = vmatprep.subr.mxu0 0.0
  %4520 = vmatpush1.msra.mxu0 0.0
  %4521 = vmatprep.subr.mxu0 0.0
  %4522 = vmatpush1.msra.mxu0 0.0
  %4523 = vmatprep.subr.mxu0 0.0
  %4524 = vmatpush1.msra.mxu0 0.0
  %4525 = vmatprep.subr.mxu0 0.0
  %4526 = vmatpush1.msra.mxu0 0.0
  %4527 = vmatprep.subr.mxu0 0.0
  %4528 = vmatpush1.msra.mxu0 0.0
  %4529 = vmatprep.subr.mxu0 0.0
  %4530 = vmatpush1.msra.mxu0 0.0
  %4531 = vmatprep.subr.mxu0 0.0
  %4532 = vmatpush1.msra.mxu0 0.0
  %4533 = vmatprep.subr.mxu0 0.0
  %4534 = vmatpush1.msra.mxu0 0.0
  %4535 = vmatprep.subr.mxu0 0.0
  %4536 = vmatpush1.msra.mxu0 0.0
  %4537 = vmatprep.subr.mxu0 0.0
  %4538 = vmatpush1.msra.mxu0 0.0
  %4539 = vmatprep.subr.mxu0 0.0
  %4540 = vmatpush1.msra.mxu0 0.0
  %4541 = vmatprep.mubr.f32.mxu0 0.0
  %4542 = vmatmul.mubr.f32.gmra.mrb[0].mxu0 %v4229
  %v4543 = vpop.f32.mrb[0].mxu0
  %v4544 = vadd.f32 0.0, %v4543
  %v4545 = vpop.f32.mrb[0].mxu0
  %4546 = vdwg.mxu0
  %v4547 = vadd.f32 %v4474, %v4544
  %v4548 = vxor.u32 %v4547, 2147483648
  %v4549 = vmul.f32 %v4548, 1.442695
  %v4550 = vpow.pop %v4549
  %v4551 = vadd.f32 %v4550, 1.0
  %v4552 = vrcp.pop %v4551
  %v4553 = vmul.f32 1.0, %v4552
  %v4554 = vtanh.pop %v4547
  %v4555 = vmul.f32 %v4553, %v4219
  %4557 = vrot.lane.b32.xlu0 %v4554, 64
  %v4558 = vpop.permute.xlu0 %4557
  %v4560 = vmul.f32 %v4553, %v4558
  %4562 = vrot.lane.b32.xlu0 %v4560, 32
  %v4563 = vpop.permute.xlu0 %4562
  %v4565 = vadd.f32 %v4555, %v4563
  %v4566 = vtanh.pop %v4565
  %4568 = vrot.lane.b32.xlu0 %v4566, 64
  %v4569 = vpop.permute.xlu0 %4568
  %v4571 = vmul.f32 %v4553, %v4569
  %4573 = vrot.lane.b32.xlu0 %v4571, 32
  %v4574 = vpop.permute.xlu0 %4573
  %v4575 = vsel %vm242, %v4574, 0
  %4577 = vmatprep.subr.mxu0 0.0
  %4578 = vmatpush1.msra.mxu0 %v65
  %4579 = vmatprep.subr.mxu0 0.0
  %4580 = vmatpush1.msra.mxu0 %v66
  %4581 = vmatprep.subr.mxu0 0.0
  %4582 = vmatpush1.msra.mxu0 %v67
  %4583 = vmatprep.subr.mxu0 0.0
  %4584 = vmatpush1.msra.mxu0 %v68
  %4585 = vmatprep.subr.mxu0 0.0
  %4586 = vmatpush1.msra.mxu0 0.0
  %4587 = vmatprep.subr.mxu0 0.0
  %4588 = vmatpush1.msra.mxu0 0.0
  %4589 = vmatprep.subr.mxu0 0.0
  %4590 = vmatpush1.msra.mxu0 0.0
  %4591 = vmatprep.subr.mxu0 0.0
  %4592 = vmatpush1.msra.mxu0 0.0
  %4593 = vmatprep.subr.mxu0 0.0
  %4594 = vmatpush1.msra.mxu0 0.0
  %4595 = vmatprep.subr.mxu0 0.0
  %4596 = vmatpush1.msra.mxu0 0.0
  %4597 = vmatprep.subr.mxu0 0.0
  %4598 = vmatpush1.msra.mxu0 0.0
  %4599 = vmatprep.subr.mxu0 0.0
  %4600 = vmatpush1.msra.mxu0 0.0
  %4601 = vmatprep.subr.mxu0 0.0
  %4602 = vmatpush1.msra.mxu0 0.0
  %4603 = vmatprep.subr.mxu0 0.0
  %4604 = vmatpush1.msra.mxu0 0.0
  %4605 = vmatprep.subr.mxu0 0.0
  %4606 = vmatpush1.msra.mxu0 0.0
  %4607 = vmatprep.subr.mxu0 0.0
  %4608 = vmatpush1.msra.mxu0 0.0
  %4609 = vmatprep.subr.mxu0 0.0
  %4610 = vmatpush1.msra.mxu0 0.0
  %4611 = vmatprep.subr.mxu0 0.0
  %4612 = vmatpush1.msra.mxu0 0.0
  %4613 = vmatprep.subr.mxu0 0.0
  %4614 = vmatpush1.msra.mxu0 0.0
  %4615 = vmatprep.subr.mxu0 0.0
  %4616 = vmatpush1.msra.mxu0 0.0
  %4617 = vmatprep.subr.mxu0 0.0
  %4618 = vmatpush1.msra.mxu0 0.0
  %4619 = vmatprep.subr.mxu0 0.0
  %4620 = vmatpush1.msra.mxu0 0.0
  %4621 = vmatprep.subr.mxu0 0.0
  %4622 = vmatpush1.msra.mxu0 0.0
  %4623 = vmatprep.subr.mxu0 0.0
  %4624 = vmatpush1.msra.mxu0 0.0
  %4625 = vmatprep.subr.mxu0 0.0
  %4626 = vmatpush1.msra.mxu0 0.0
  %4627 = vmatprep.subr.mxu0 0.0
  %4628 = vmatpush1.msra.mxu0 0.0
  %4629 = vmatprep.subr.mxu0 0.0
  %4630 = vmatpush1.msra.mxu0 0.0
  %4631 = vmatprep.subr.mxu0 0.0
  %4632 = vmatpush1.msra.mxu0 0.0
  %4633 = vmatprep.subr.mxu0 0.0
  %4634 = vmatpush1.msra.mxu0 0.0
  %4635 = vmatprep.subr.mxu0 0.0
  %4636 = vmatpush1.msra.mxu0 0.0
  %4637 = vmatprep.subr.mxu0 0.0
  %4638 = vmatpush1.msra.mxu0 0.0
  %4639 = vmatprep.subr.mxu0 0.0
  %4640 = vmatpush1.msra.mxu0 0.0
  %4641 = vmatprep.mubr.f32.mxu0 0.0
  %4642 = vmatmul.mubr.f32.gmra.mrb[0].mxu0 %v4575
  %v4643 = vpop.f32.mrb[0].mxu0
  %v4644 = vadd.f32 %v74, %v4643
  %v4645 = vpop.f32.mrb[0].mxu0
  %4646 = vdwg.mxu0
  %4648 = vrot.lane.b32.xlu0 %v4644, 96
  %v4649 = vpop.permute.xlu0 %4648
  %vm4651 = vcmask 917248
  %4652 = vst.msk [vmem:[%s7] sm:$0xff] %vm4651, %v4649
  %4653 = vmatprep.subr.mxu0 0.0
  %4654 = vmatpush1.msra.mxu0 %v34
  %4655 = vmatprep.subr.mxu0 0.0
  %4656 = vmatpush1.msra.mxu0 %v35
  %4657 = vmatprep.subr.mxu0 0.0
  %4658 = vmatpush1.msra.mxu0 %v36
  %4659 = vmatprep.subr.mxu0 0.0
  %4660 = vmatpush1.msra.mxu0 %v37
  %4661 = vmatprep.subr.mxu0 0.0
  %4662 = vmatpush1.msra.mxu0 0.0
  %4663 = vmatprep.subr.mxu0 0.0
  %4664 = vmatpush1.msra.mxu0 0.0
  %4665 = vmatprep.subr.mxu0 0.0
  %4666 = vmatpush1.msra.mxu0 0.0
  %4667 = vmatprep.subr.mxu0 0.0
  %4668 = vmatpush1.msra.mxu0 0.0
  %4669 = vmatprep.subr.mxu0 0.0
  %4670 = vmatpush1.msra.mxu0 0.0
  %4671 = vmatprep.subr.mxu0 0.0
  %4672 = vmatpush1.msra.mxu0 0.0
  %4673 = vmatprep.subr.mxu0 0.0
  %4674 = vmatpush1.msra.mxu0 0.0
  %4675 = vmatprep.subr.mxu0 0.0
  %4676 = vmatpush1.msra.mxu0 0.0
  %4677 = vmatprep.subr.mxu0 0.0
  %4678 = vmatpush1.msra.mxu0 0.0
  %4679 = vmatprep.subr.mxu0 0.0
  %4680 = vmatpush1.msra.mxu0 0.0
  %4681 = vmatprep.subr.mxu0 0.0
  %4682 = vmatpush1.msra.mxu0 0.0
  %4683 = vmatprep.subr.mxu0 0.0
  %4684 = vmatpush1.msra.mxu0 0.0
  %4685 = vmatprep.subr.mxu0 0.0
  %4686 = vmatpush1.msra.mxu0 0.0
  %4687 = vmatprep.subr.mxu0 0.0
  %4688 = vmatpush1.msra.mxu0 0.0
  %4689 = vmatprep.subr.mxu0 0.0
  %4690 = vmatpush1.msra.mxu0 0.0
  %4691 = vmatprep.subr.mxu0 0.0
  %4692 = vmatpush1.msra.mxu0 0.0
  %4693 = vmatprep.subr.mxu0 0.0
  %4694 = vmatpush1.msra.mxu0 0.0
  %4695 = vmatprep.subr.mxu0 0.0
  %4696 = vmatpush1.msra.mxu0 0.0
  %4697 = vmatprep.subr.mxu0 0.0
  %4698 = vmatpush1.msra.mxu0 0.0
  %4699 = vmatprep.subr.mxu0 0.0
  %4700 = vmatpush1.msra.mxu0 0.0
  %4701 = vmatprep.subr.mxu0 0.0
  %4702 = vmatpush1.msra.mxu0 0.0
  %4703 = vmatprep.subr.mxu0 0.0
  %4704 = vmatpush1.msra.mxu0 0.0
  %4705 = vmatprep.subr.mxu0 0.0
  %4706 = vmatpush1.msra.mxu0 0.0
  %4707 = vmatprep.subr.mxu0 0.0
  %4708 = vmatpush1.msra.mxu0 0.0
  %4709 = vmatprep.subr.mxu0 0.0
  %4710 = vmatpush1.msra.mxu0 0.0
  %4711 = vmatprep.subr.mxu0 0.0
  %4712 = vmatpush1.msra.mxu0 0.0
  %4713 = vmatprep.subr.mxu0 0.0
  %4714 = vmatpush1.msra.mxu0 0.0
  %4715 = vmatprep.subr.mxu0 0.0
  %4716 = vmatpush1.msra.mxu0 0.0
  %4717 = vmatprep.mubr.f32.mxu0 0.0
  %4718 = vmatmul.mubr.f32.gmra.mrb[0].mxu0 %v4405
  %v4719 = vpop.f32.mrb[0].mxu0
  %v4720 = vadd.f32 0.0, %v4719
  %v4721 = vpop.f32.mrb[0].mxu0
  %4722 = vdwg.mxu0
  %v4723 = vadd.f32 %v59, %v4720
  %v4724 = vxor.u32 %v4723, 2147483648
  %v4725 = vmul.f32 %v4724, 1.442695
  %v4726 = vpow.pop %v4725
  %v4727 = vadd.f32 %v4726, 1.0
  %v4728 = vrcp.pop %v4727
  %v4729 = vmul.f32 1.0, %v4728
  %v4730 = vtanh.pop %v4723
  %v4731 = vmul.f32 %v4729, %v4395
  %4733 = vrot.lane.b32.xlu0 %v4730, 64
  %v4734 = vpop.permute.xlu0 %4733
  %v4736 = vmul.f32 %v4729, %v4734
  %4738 = vrot.lane.b32.xlu0 %v4736, 32
  %v4739 = vpop.permute.xlu0 %4738
  %v4741 = vadd.f32 %v4731, %v4739
  %v4742 = vtanh.pop %v4741
  %4744 = vrot.lane.b32.xlu0 %v4742, 64
  %v4745 = vpop.permute.xlu0 %4744
  %v4747 = vmul.f32 %v4729, %v4745
  %4749 = vrot.lane.b32.xlu0 %v4747, 32
  %v4750 = vpop.permute.xlu0 %4749
  %v4751 = vsel %vm242, %v4750, 0
  %4753 = vmatprep.subr.mxu0 0.0
  %4754 = vmatpush1.msra.mxu0 %v46
  %4755 = vmatprep.subr.mxu0 0.0
  %4756 = vmatpush1.msra.mxu0 %v47
  %4757 = vmatprep.subr.mxu0 0.0
  %4758 = vmatpush1.msra.mxu0 %v48
  %4759 = vmatprep.subr.mxu0 0.0
  %4760 = vmatpush1.msra.mxu0 %v49
  %4761 = vmatprep.subr.mxu0 0.0
  %4762 = vmatpush1.msra.mxu0 0.0
  %4763 = vmatprep.subr.mxu0 0.0
  %4764 = vmatpush1.msra.mxu0 0.0
  %4765 = vmatprep.subr.mxu0 0.0
  %4766 = vmatpush1.msra.mxu0 0.0
  %4767 = vmatprep.subr.mxu0 0.0
  %4768 = vmatpush1.msra.mxu0 0.0
  %4769 = vmatprep.subr.mxu0 0.0
  %4770 = vmatpush1.msra.mxu0 0.0
  %4771 = vmatprep.subr.mxu0 0.0
  %4772 = vmatpush1.msra.mxu0 0.0
  %4773 = vmatprep.subr.mxu0 0.0
  %4774 = vmatpush1.msra.mxu0 0.0
  %4775 = vmatprep.subr.mxu0 0.0
  %4776 = vmatpush1.msra.mxu0 0.0
  %4777 = vmatprep.subr.mxu0 0.0
  %4778 = vmatpush1.msra.mxu0 0.0
  %4779 = vmatprep.subr.mxu0 0.0
  %4780 = vmatpush1.msra.mxu0 0.0
  %4781 = vmatprep.subr.mxu0 0.0
  %4782 = vmatpush1.msra.mxu0 0.0
  %4783 = vmatprep.subr.mxu0 0.0
  %4784 = vmatpush1.msra.mxu0 0.0
  %4785 = vmatprep.subr.mxu0 0.0
  %4786 = vmatpush1.msra.mxu0 0.0
  %4787 = vmatprep.subr.mxu0 0.0
  %4788 = vmatpush1.msra.mxu0 0.0
  %4789 = vmatprep.subr.mxu0 0.0
  %4790 = vmatpush1.msra.mxu0 0.0
  %4791 = vmatprep.subr.mxu0 0.0
  %4792 = vmatpush1.msra.mxu0 0.0
  %4793 = vmatprep.subr.mxu0 0.0
  %4794 = vmatpush1.msra.mxu0 0.0
  %4795 = vmatprep.subr.mxu0 0.0
  %4796 = vmatpush1.msra.mxu0 0.0
  %4797 = vmatprep.subr.mxu0 0.0
  %4798 = vmatpush1.msra.mxu0 0.0
  %4799 = vmatprep.subr.mxu0 0.0
  %4800 = vmatpush1.msra.mxu0 0.0
  %4801 = vmatprep.subr.mxu0 0.0
  %4802 = vmatpush1.msra.mxu0 0.0
  %4803 = vmatprep.subr.mxu0 0.0
  %4804 = vmatpush1.msra.mxu0 0.0
  %4805 = vmatprep.subr.mxu0 0.0
  %4806 = vmatpush1.msra.mxu0 0.0
  %4807 = vmatprep.subr.mxu0 0.0
  %4808 = vmatpush1.msra.mxu0 0.0
  %4809 = vmatprep.subr.mxu0 0.0
  %4810 = vmatpush1.msra.mxu0 0.0
  %4811 = vmatprep.subr.mxu0 0.0
  %4812 = vmatpush1.msra.mxu0 0.0
  %4813 = vmatprep.subr.mxu0 0.0
  %4814 = vmatpush1.msra.mxu0 0.0
  %4815 = vmatprep.subr.mxu0 0.0
  %4816 = vmatpush1.msra.mxu0 0.0
  %4817 = vmatprep.mubr.f32.mxu0 0.0
  %4818 = vmatmul.mubr.f32.gmra.mrb[0].mxu0 %v4751
  %v4819 = vpop.f32.mrb[0].mxu0
  %v4820 = vadd.f32 %v64, %v4819
  %v4821 = vpop.f32.mrb[0].mxu0
  %4822 = vdwg.mxu0
  %4823 = vmatprep.subr.mxu0 0.0
  %4824 = vmatpush1.msra.mxu0 %v38
  %4825 = vmatprep.subr.mxu0 0.0
  %4826 = vmatpush1.msra.mxu0 %v39
  %4827 = vmatprep.subr.mxu0 0.0
  %4828 = vmatpush1.msra.mxu0 %v40
  %4829 = vmatprep.subr.mxu0 0.0
  %4830 = vmatpush1.msra.mxu0 %v41
  %4831 = vmatprep.subr.mxu0 0.0
  %4832 = vmatpush1.msra.mxu0 0.0
  %4833 = vmatprep.subr.mxu0 0.0
  %4834 = vmatpush1.msra.mxu0 0.0
  %4835 = vmatprep.subr.mxu0 0.0
  %4836 = vmatpush1.msra.mxu0 0.0
  %4837 = vmatprep.subr.mxu0 0.0
  %4838 = vmatpush1.msra.mxu0 0.0
  %4839 = vmatprep.subr.mxu0 0.0
  %4840 = vmatpush1.msra.mxu0 0.0
  %4841 = vmatprep.subr.mxu0 0.0
  %4842 = vmatpush1.msra.mxu0 0.0
  %4843 = vmatprep.subr.mxu0 0.0
  %4844 = vmatpush1.msra.mxu0 0.0
  %4845 = vmatprep.subr.mxu0 0.0
  %4846 = vmatpush1.msra.mxu0 0.0
  %4847 = vmatprep.subr.mxu0 0.0
  %4848 = vmatpush1.msra.mxu0 0.0
  %4849 = vmatprep.subr.mxu0 0.0
  %4850 = vmatpush1.msra.mxu0 0.0
  %4851 = vmatprep.subr.mxu0 0.0
  %4852 = vmatpush1.msra.mxu0 0.0
  %4853 = vmatprep.subr.mxu0 0.0
  %4854 = vmatpush1.msra.mxu0 0.0
  %4855 = vmatprep.subr.mxu0 0.0
  %4856 = vmatpush1.msra.mxu0 0.0
  %4857 = vmatprep.subr.mxu0 0.0
  %4858 = vmatpush1.msra.mxu0 0.0
  %4859 = vmatprep.subr.mxu0 0.0
  %4860 = vmatpush1.msra.mxu0 0.0
  %4861 = vmatprep.subr.mxu0 0.0
  %4862 = vmatpush1.msra.mxu0 0.0
  %4863 = vmatprep.subr.mxu0 0.0
  %4864 = vmatpush1.msra.mxu0 0.0
  %4865 = vmatprep.subr.mxu0 0.0
  %4866 = vmatpush1.msra.mxu0 0.0
  %4867 = vmatprep.subr.mxu0 0.0
  %4868 = vmatpush1.msra.mxu0 0.0
  %4869 = vmatprep.subr.mxu0 0.0
  %4870 = vmatpush1.msra.mxu0 0.0
  %4871 = vmatprep.subr.mxu0 0.0
  %4872 = vmatpush1.msra.mxu0 0.0
  %4873 = vmatprep.subr.mxu0 0.0
  %4874 = vmatpush1.msra.mxu0 0.0
  %4875 = vmatprep.subr.mxu0 0.0
  %4876 = vmatpush1.msra.mxu0 0.0
  %4877 = vmatprep.subr.mxu0 0.0
  %4878 = vmatpush1.msra.mxu0 0.0
  %4879 = vmatprep.subr.mxu0 0.0
  %4880 = vmatpush1.msra.mxu0 0.0
  %4881 = vmatprep.subr.mxu0 0.0
  %4882 = vmatpush1.msra.mxu0 0.0
  %4883 = vmatprep.subr.mxu0 0.0
  %4884 = vmatpush1.msra.mxu0 0.0
  %4885 = vmatprep.subr.mxu0 0.0
  %4886 = vmatpush1.msra.mxu0 0.0
  %4887 = vmatprep.mubr.f32.mxu0 0.0
  %4888 = vmatmul.mubr.f32.gmra.mrb[0].mxu0 %v4575
  %v4889 = vpop.f32.mrb[0].mxu0
  %v4890 = vadd.f32 0.0, %v4889
  %v4891 = vpop.f32.mrb[0].mxu0
  %4892 = vdwg.mxu0
  %v4893 = vadd.f32 %v4820, %v4890
  %v4894 = vxor.u32 %v4893, 2147483648
  %v4895 = vmul.f32 %v4894, 1.442695
  %v4896 = vpow.pop %v4895
  %v4897 = vadd.f32 %v4896, 1.0
  %v4898 = vrcp.pop %v4897
  %v4899 = vmul.f32 1.0, %v4898
  %v4900 = vtanh.pop %v4893
  %v4901 = vmul.f32 %v4899, %v4565
  %4903 = vrot.lane.b32.xlu0 %v4900, 64
  %v4904 = vpop.permute.xlu0 %4903
  %v4906 = vmul.f32 %v4899, %v4904
  %4908 = vrot.lane.b32.xlu0 %v4906, 32
  %v4909 = vpop.permute.xlu0 %4908
  %v4911 = vadd.f32 %v4901, %v4909
  %v4912 = vtanh.pop %v4911
  %4914 = vrot.lane.b32.xlu0 %v4912, 64
  %v4915 = vpop.permute.xlu0 %4914
  %v4917 = vmul.f32 %v4899, %v4915
  %4919 = vrot.lane.b32.xlu0 %v4917, 32
  %v4920 = vpop.permute.xlu0 %4919
  %v4921 = vsel %vm242, %v4920, 0
  %4923 = vmatprep.subr.mxu0 0.0
  %4924 = vmatpush1.msra.mxu0 %v65
  %4925 = vmatprep.subr.mxu0 0.0
  %4926 = vmatpush1.msra.mxu0 %v66
  %4927 = vmatprep.subr.mxu0 0.0
  %4928 = vmatpush1.msra.mxu0 %v67
  %4929 = vmatprep.subr.mxu0 0.0
  %4930 = vmatpush1.msra.mxu0 %v68
  %4931 = vmatprep.subr.mxu0 0.0
  %4932 = vmatpush1.msra.mxu0 0.0
  %4933 = vmatprep.subr.mxu0 0.0
  %4934 = vmatpush1.msra.mxu0 0.0
  %4935 = vmatprep.subr.mxu0 0.0
  %4936 = vmatpush1.msra.mxu0 0.0
  %4937 = vmatprep.subr.mxu0 0.0
  %4938 = vmatpush1.msra.mxu0 0.0
  %4939 = vmatprep.subr.mxu0 0.0
  %4940 = vmatpush1.msra.mxu0 0.0
  %4941 = vmatprep.subr.mxu0 0.0
  %4942 = vmatpush1.msra.mxu0 0.0
  %4943 = vmatprep.subr.mxu0 0.0
  %4944 = vmatpush1.msra.mxu0 0.0
  %4945 = vmatprep.subr.mxu0 0.0
  %4946 = vmatpush1.msra.mxu0 0.0
  %4947 = vmatprep.subr.mxu0 0.0
  %4948 = vmatpush1.msra.mxu0 0.0
  %4949 = vmatprep.subr.mxu0 0.0
  %4950 = vmatpush1.msra.mxu0 0.0
  %4951 = vmatprep.subr.mxu0 0.0
  %4952 = vmatpush1.msra.mxu0 0.0
  %4953 = vmatprep.subr.mxu0 0.0
  %4954 = vmatpush1.msra.mxu0 0.0
  %4955 = vmatprep.subr.mxu0 0.0
  %4956 = vmatpush1.msra.mxu0 0.0
  %4957 = vmatprep.subr.mxu0 0.0
  %4958 = vmatpush1.msra.mxu0 0.0
  %4959 = vmatprep.subr.mxu0 0.0
  %4960 = vmatpush1.msra.mxu0 0.0
  %4961 = vmatprep.subr.mxu0 0.0
  %4962 = vmatpush1.msra.mxu0 0.0
  %4963 = vmatprep.subr.mxu0 0.0
  %4964 = vmatpush1.msra.mxu0 0.0
  %4965 = vmatprep.subr.mxu0 0.0
  %4966 = vmatpush1.msra.mxu0 0.0
  %4967 = vmatprep.subr.mxu0 0.0
  %4968 = vmatpush1.msra.mxu0 0.0
  %4969 = vmatprep.subr.mxu0 0.0
  %4970 = vmatpush1.msra.mxu0 0.0
  %4971 = vmatprep.subr.mxu0 0.0
  %4972 = vmatpush1.msra.mxu0 0.0
  %4973 = vmatprep.subr.mxu0 0.0
  %4974 = vmatpush1.msra.mxu0 0.0
  %4975 = vmatprep.subr.mxu0 0.0
  %4976 = vmatpush1.msra.mxu0 0.0
  %4977 = vmatprep.subr.mxu0 0.0
  %4978 = vmatpush1.msra.mxu0 0.0
  %4979 = vmatprep.subr.mxu0 0.0
  %4980 = vmatpush1.msra.mxu0 0.0
  %4981 = vmatprep.subr.mxu0 0.0
  %4982 = vmatpush1.msra.mxu0 0.0
  %4983 = vmatprep.subr.mxu0 0.0
  %4984 = vmatpush1.msra.mxu0 0.0
  %4985 = vmatprep.subr.mxu0 0.0
  %4986 = vmatpush1.msra.mxu0 0.0
  %4987 = vmatprep.mubr.f32.mxu0 0.0
  %4988 = vmatmul.mubr.f32.gmra.mrb[0].mxu0 %v4921
  %v4989 = vpop.f32.mrb[0].mxu0
  %v4990 = vadd.f32 %v74, %v4989
  %v4991 = vpop.f32.mrb[0].mxu0
  %4992 = vdwg.mxu0
  %4994 = vrot.lane.b32.xlu0 %v4990, 112
  %v4995 = vpop.permute.xlu0 %4994
  %vm4997 = vcmask 1048448
  %4998 = vst.msk [vmem:[%s7] sm:$0xff] %vm4997, %v4995
  // Predicated region
  $region30: #{lstmae_forward.1} parent=0 // pred_check
    _
  $region31: #{lstmae_forward.1} parent=0 // pred_check_branch
    %5000 = sbr.rel (0) target = $region33
  $region32: #{lstmae_forward.1} parent=0 // pred_region
    _
  $region33: #{lstmae_forward.1} parent=0 // pred_fallthru
    _
  // Predicated region
  $region34: #{lstmae_forward.1} parent=0 // pred_check
    _
  $region35: #{lstmae_forward.1} parent=0 // pred_check_branch
    %5002 = sbr.rel (0) target = $region37
  $region36: #{lstmae_forward.1} parent=0 // pred_region
    _
  $region37: #{lstmae_forward.1} parent=0 // pred_fallthru
    _

</llo_original>
